<compile_context>
chip_gen: v7x
topology: tpu7x:2x2x1
jax: 0.10.0
libtpu: 0.0.40
codegen_flags: <defaults>
</compile_context>

<pallas_src>
import functools

import jax
import jax.numpy as jnp
from jax import lax
from jax.experimental import pallas as pl
from jax.experimental.pallas import tpu as pltpu

EXPANSION = 4
BN_EPS = 1e-5
LANE = 128      # channel padding granularity (TPU lane width)


def _round_up(x, m):
    return (x + m - 1) // m * m


# --------------------------------------------------------------------------
# Kernel: one batch element per grid step.  x_ref is spatially pre-padded
# (halo of 1 for the 3x3 conv, plus right padding to a sublane-aligned width).
# 1x1 convs are (pixels, Cin) @ (Cin, Cout) matmuls; the 3x3 conv is nine
# shifted matmuls read back from a VMEM staging buffer of the (halo-masked)
# conv1 output.
# --------------------------------------------------------------------------
def _bottleneck_kernel(stride, has_shortcut, H, W, *refs):
    if has_shortcut:
        (x_ref, w1_ref, b1_ref, w2_ref, b2_ref, w3_ref, b3_ref,
         ws_ref, out_ref, h1s_ref) = refs
    else:
        (x_ref, w1_ref, b1_ref, w2_ref, b2_ref, w3_ref, b3_ref,
         out_ref, h1s_ref) = refs

    _, Hp, Wp, Cin = x_ref.shape          # padded input (lane-dense channels)
    Pp = w1_ref.shape[1]
    Cop = w3_ref.shape[1]
    _, Ho, Wo, _ = out_ref.shape
    Mo = Ho * Wo

    # ---- conv1 (1x1) + bn1 + relu over the H interior rows only -------------
    xi = x_ref[:, 1:H + 1]                                 # (1, H, Wp, Cin) f32
    x2d = xi.reshape(H * Wp, Cin)
    h1 = jnp.dot(x2d.astype(jnp.bfloat16), w1_ref[...],
                 preferred_element_type=jnp.float32)
    h1 = jnp.maximum(h1 + b1_ref[...], 0.0).reshape(H, Wp, Pp)

    # Zero the conv2 column halo (col 0 and cols > W are x's zero padding, where
    # conv1 would otherwise produce relu(b1) != 0).
    col = lax.broadcasted_iota(jnp.int32, (1, Wp, Pp), 1)
    h1 = jnp.where((col >= 1) & (col <= W), h1, 0.0)

    # Stage into scratch: two tiny halo-row zero stores + one aligned interior
    # store along the outer dim (no misaligned masked stores).
    zero_row = jnp.zeros((Wp, Pp), jnp.float32)
    h1s_ref[0] = zero_row
    h1s_ref[H + 1] = zero_row
    h1s_ref[1:H + 1] = h1

    # ---- conv2 (3x3, padding=1, stride) + bn2 + relu -------------------------
    acc = jnp.zeros((Mo, Pp), jnp.float32)
    for dy in range(3):
        for dx in range(3):
            if stride == 1:
                patch = h1s_ref[dy:dy + Ho, dx:dx + Wo, :]
            else:
                patch = h1s_ref[pl.ds(dy, Ho, stride), pl.ds(dx, Wo, stride), :]
            acc = acc + jnp.dot(patch.reshape(Mo, Pp).astype(jnp.bfloat16),
                                w2_ref[dy, dx],
                                preferred_element_type=jnp.float32)
    h2 = jnp.maximum(acc + b2_ref[...], 0.0)               # (Mo, Pp) f32

    # ---- conv3 (1x1) + bn3 (shortcut BN bias pre-folded into b3) -------------
    h3 = jnp.dot(h2.astype(jnp.bfloat16), w3_ref[...],
                 preferred_element_type=jnp.float32) + b3_ref[...]

    # ---- shortcut ------------------------------------------------------------
    if has_shortcut:
        if stride == 1:
            xs = x_ref[:, 1:1 + Ho, 1:1 + Wo, :]
        else:
            xs = x_ref[:, pl.ds(1, Ho, stride), pl.ds(1, Wo, stride), :]
        sc = jnp.dot(xs.reshape(Mo, Cin).astype(jnp.bfloat16), ws_ref[...],
                     preferred_element_type=jnp.float32)
    else:  # identity: stride == 1 and Cin == Cout (padded sizes match too)
        sc = x_ref[:, 1:1 + Ho, 1:1 + Wo, :].reshape(Mo, Cin)

    out = jnp.maximum(h3 + sc, 0.0)
    out_ref[...] = out.reshape(1, Ho, Wo, Cop).astype(out_ref.dtype)


# --------------------------------------------------------------------------
# Wrapper: grid over batch, weights VMEM-resident via constant index_maps.
# --------------------------------------------------------------------------
def bottleneck_pallas(x_nhwc, kp, stride, out_channels):
    N, H, W, Cin = x_nhwc.shape
    Cp = kp["w1"].shape[0]
    Pp = kp["w1"].shape[1]
    Cop = kp["w3"].shape[1]
    has_shortcut = "ws" in kp
    Ho = (H - 1) // stride + 1
    Wo = (W - 1) // stride + 1
    Hp = H + 2
    Wp = _round_up(W + 2, 8)              # sublane-aligned padded width

    # channel pad -> lane dense; spatial halo of 1 (+ extra right columns).
    # Activations stay f32 (clean strided/offset reads); MXU operands are cast
    # to bf16 inside the kernel, weights are already bf16.
    xp = jnp.pad(x_nhwc, ((0, 0), (1, 1), (1, Wp - W - 1), (0, Cp - Cin)))

    inputs = [xp, kp["w1"], kp["b1"], kp["w2"], kp["b2"], kp["w3"], kp["b3"]]
    if has_shortcut:
        inputs += [kp["ws"]]

    def const_spec(arr):                  # weight/bias: same block every step
        nd = arr.ndim
        return pl.BlockSpec(arr.shape, lambda b, _nd=nd: (0,) * _nd)

    in_specs = [pl.BlockSpec((1, Hp, Wp, Cp), lambda b: (b, 0, 0, 0))]
    in_specs += [const_spec(a) for a in inputs[1:]]

    flops_per_n = (2 * H * Wp * Cp * Pp             # conv1 (interior rows)
                   + 9 * 2 * Ho * Wo * Pp * Pp      # conv2
                   + 2 * Ho * Wo * Pp * Cop)        # conv3
    if has_shortcut:
        flops_per_n += 2 * Ho * Wo * Cp * Cop
    bytes_accessed = (xp.size * xp.dtype.itemsize
                      + sum(int(a.size) * a.dtype.itemsize for a in inputs[1:])
                      + N * Ho * Wo * Cop * 4)

    out = pl.pallas_call(
        functools.partial(_bottleneck_kernel, stride, has_shortcut, H, W),
        out_shape=jax.ShapeDtypeStruct((N, Ho, Wo, Cop), jnp.float32),
        grid=(N,),
        in_specs=in_specs,
        out_specs=pl.BlockSpec((1, Ho, Wo, Cop), lambda b: (b, 0, 0, 0)),
        scratch_shapes=[pltpu.VMEM((Hp, Wp, Pp), jnp.float32)],
        compiler_params=pltpu.CompilerParams(
            dimension_semantics=("parallel",),
            vmem_limit_bytes=64 * 1024 * 1024),
        cost_estimate=pl.CostEstimate(
            flops=N * flops_per_n,
            transcendentals=0,
            bytes_accessed=int(bytes_accessed)),
    )(*inputs)

    return out[..., :out_channels]        # drop channel padding (lane slice)


# --------------------------------------------------------------------------
# Pure-JAX reference (same bf16-weight / f32-accumulate numerics)
# --------------------------------------------------------------------------
def bottleneck_reference(x, rp, stride):
    def conv(inp, w, s, pad):
        return lax.conv_general_dilated(
            inp.astype(jnp.bfloat16), w, (s, s), [(pad, pad), (pad, pad)],
            dimension_numbers=("NHWC", "HWIO", "NHWC"),
            preferred_element_type=jnp.float32)

    h = jnp.maximum(conv(x, rp["w1"], 1, 0) + rp["b1"], 0.0)
    h = jnp.maximum(conv(h, rp["w2"], stride, 1) + rp["b2"], 0.0)
    h = conv(h, rp["w3"], 1, 0) + rp["b3"]
    if "ws" in rp:
        sc = conv(x, rp["ws"], stride, 0) + rp["bs"]
    else:
        sc = x
    return jnp.maximum(h + sc, 0.0)


# --------------------------------------------------------------------------
# Deterministic parameter construction (shapes follow Bottleneck.__init__)
# --------------------------------------------------------------------------
def make_raw_params(key, in_planes, planes, stride):
    cout = EXPANSION * planes
    keys = jax.random.split(key, 8)

    def kaiming(k, kh, kw, cin, co):       # kaiming_normal_, mode='fan_out'
        std = (2.0 / (co * kh * kw)) ** 0.5
        return std * jax.random.normal(k, (kh, kw, cin, co), jnp.float32)

    def bn_params(k, c):                   # folded inference-mode BN
        kg, kb, km, kv = jax.random.split(k, 4)
        gamma = 1.0 + 0.1 * jax.random.normal(kg, (c,), jnp.float32)
        beta = 0.1 * jax.random.normal(kb, (c,), jnp.float32)
        mean = 0.1 * jax.random.normal(km, (c,), jnp.float32)
        var = jnp.abs(jax.random.normal(kv, (c,), jnp.float32)) + 0.5
        scale = gamma / jnp.sqrt(var + BN_EPS)
        bias = beta - mean * scale
        return scale, bias

    p = {}
    p["w1"] = kaiming(keys[0], 1, 1, in_planes, planes)     # (1,1,Cin,P) HWIO
    p["s1"], p["b1"] = bn_params(keys[1], planes)
    p["w2"] = kaiming(keys[2], 3, 3, planes, planes)        # (3,3,P,P)
    p["s2"], p["b2"] = bn_params(keys[3], planes)
    p["w3"] = kaiming(keys[4], 1, 1, planes, cout)          # (1,1,P,4P)
    p["s3"], p["b3"] = bn_params(keys[5], cout)
    if stride != 1 or in_planes != cout:
        p["ws"] = kaiming(keys[6], 1, 1, in_planes, cout)   # (1,1,Cin,4P)
        p["ss"], p["bs"] = bn_params(keys[7], cout)
    return p


def fold_and_pad(raw, in_planes, planes):
    """Fold BN scale into conv weights (bf16); channel-pad for the kernel."""
    cout = EXPANSION * planes
    Cp = max(LANE, _round_up(in_planes, LANE))
    Pp = max(LANE, _round_up(planes, LANE))
    Cop = max(LANE, _round_up(cout, LANE))

    def fold(w, s):                        # w: (kh,kw,ci,co), s: (co,)
        return (w * s).astype(jnp.bfloat16)

    rp = {"w1": fold(raw["w1"], raw["s1"]), "b1": raw["b1"],
          "w2": fold(raw["w2"], raw["s2"]), "b2": raw["b2"],
          "w3": fold(raw["w3"], raw["s3"]), "b3": raw["b3"]}
    if "ws" in raw:
        rp["ws"] = fold(raw["ws"], raw["ss"])
        rp["bs"] = raw["bs"]

    def pad2(w, ci, co):
        return jnp.pad(w, ((0, ci - w.shape[0]), (0, co - w.shape[1])))

    kp = {"w1": pad2(rp["w1"][0, 0], Cp, Pp),
          "b1": jnp.pad(rp["b1"], (0, Pp - planes)).reshape(1, Pp),
          "w2": jnp.pad(rp["w2"], ((0, 0), (0, 0),
                                   (0, Pp - planes), (0, Pp - planes))),
          "b2": jnp.pad(rp["b2"], (0, Pp - planes)).reshape(1, Pp),
          "w3": pad2(rp["w3"][0, 0], Pp, Cop),
          "b3": jnp.pad(rp["b3"], (0, Cop - cout)).reshape(1, Cop)}
    if "ws" in rp:
        kp["ws"] = pad2(rp["ws"][0, 0], Cp, Cop)
        # Fold the projection-shortcut BN bias into the conv3 bias:
        # relu(h3 + b3 + x@ws + bs) == relu(h3 + x@ws + (b3 + bs)).
        kp["b3"] = kp["b3"] + jnp.pad(rp["bs"], (0, Cop - cout)).reshape(1, Cop)
    return kp, rp


if __name__ == "__main__":
    key = jax.random.PRNGKey(0)

    # Small shapes consistent with the module (Bottleneck(in_planes, planes)).
    test_cases = [
        # (N, in_planes, planes, H, W, stride)
        (2, 4, 4, 16, 16, 1),    # projection shortcut (1x1 conv + BN), stride 1
        (2, 16, 4, 16, 16, 1),   # identity shortcut (in_planes == 4*planes)
        (2, 4, 4, 16, 16, 2),    # strided projection shortcut (stride 2)
    ]

    for idx, (N, in_planes, planes, H, W, stride) in enumerate(test_cases):
        kx, kparam = jax.random.split(jax.random.fold_in(key, idx))
        cout = EXPANSION * planes

        x_nchw = jax.random.normal(kx, (N, in_planes, H, W), jnp.float32)
        raw = make_raw_params(kparam, in_planes, planes, stride)
        kparams, rparams = fold_and_pad(raw, in_planes, planes)

        # NCHW (PyTorch) -> NHWC (kernel layout)
        x_nhwc = jnp.transpose(x_nchw, (0, 2, 3, 1))
        out_nhwc = bottleneck_pallas(x_nhwc, kparams, stride, cout)
        out_nchw = jnp.transpose(out_nhwc, (0, 3, 1, 2))
        jax.block_until_ready(out_nchw)

        Ho = (H - 1) // stride + 1
        Wo = (W - 1) // stride + 1
        assert out_nchw.shape == (N, cout, Ho, Wo), out_nchw.shape

        ref_nhwc = bottleneck_reference(x_nhwc, rparams, stride)
        max_err = float(jnp.max(jnp.abs(out_nhwc - ref_nhwc)))
        assert jnp.allclose(out_nhwc, ref_nhwc, rtol=2e-2, atol=2e-2), \
            (idx, max_err)

    print("KERNEL_OK")
</pallas_src>

<mosaic_0001>
module attributes {stable_mosaic.version = 11 : i64} {
  func.func @_bottleneck_kernel(%arg0: i32, %arg1: memref<1x18x24x128xf32, #tpu.memory_space<vmem>>, %arg2: memref<128x128xbf16, #tpu.memory_space<vmem>>, %arg3: memref<1x128xf32, #tpu.memory_space<vmem>>, %arg4: memref<3x3x128x128xbf16, #tpu.memory_space<vmem>>, %arg5: memref<1x128xf32, #tpu.memory_space<vmem>>, %arg6: memref<128x128xbf16, #tpu.memory_space<vmem>>, %arg7: memref<1x128xf32, #tpu.memory_space<vmem>>, %arg8: memref<128x128xbf16, #tpu.memory_space<vmem>>, %arg9: memref<1x16x16x128xf32, #tpu.memory_space<vmem>>, %arg10: memref<18x24x128xf32, #tpu.memory_space<vmem>>) attributes {dimension_semantics = [#tpu.dimension_semantics<parallel>], iteration_bounds = array<i64: 2>, scalar_prefetch = 0 : i64, scratch_operands = 1 : i64, tpu.core_type = #tpu.core_type<tc>, window_params = [{transform_indices = @transform_0, window_bounds = array<i64: 1, 18, 24, 128>}, {pipeline_mode = #tpu.pipeline_mode<synchronous>, transform_indices = @transform_1, window_bounds = array<i64: 128, 128>}, {pipeline_mode = #tpu.pipeline_mode<synchronous>, transform_indices = @transform_2, window_bounds = array<i64: 1, 128>}, {pipeline_mode = #tpu.pipeline_mode<synchronous>, transform_indices = @transform_3, window_bounds = array<i64: 3, 3, 128, 128>}, {pipeline_mode = #tpu.pipeline_mode<synchronous>, transform_indices = @transform_4, window_bounds = array<i64: 1, 128>}, {pipeline_mode = #tpu.pipeline_mode<synchronous>, transform_indices = @transform_5, window_bounds = array<i64: 128, 128>}, {pipeline_mode = #tpu.pipeline_mode<synchronous>, transform_indices = @transform_6, window_bounds = array<i64: 1, 128>}, {pipeline_mode = #tpu.pipeline_mode<synchronous>, transform_indices = @transform_7, window_bounds = array<i64: 128, 128>}, {transform_indices = @transform_8, window_bounds = array<i64: 1, 16, 16, 128>}]} {
    %c0 = arith.constant 0 : index
    %c1 = arith.constant 1 : index
    %c0_0 = arith.constant 0 : index
    %c0_1 = arith.constant 0 : index
    %0 = vector.load %arg1[%c0, %c1, %c0_0, %c0_1] : memref<1x18x24x128xf32, #tpu.memory_space<vmem>>, vector<1x16x24x128xf32>
    %1 = vector.shape_cast %0 : vector<1x16x24x128xf32> to vector<384x128xf32>
    %2 = arith.truncf %1 : vector<384x128xf32> to vector<384x128xbf16>
    %c0_2 = arith.constant 0 : index
    %c0_3 = arith.constant 0 : index
    %3 = vector.load %arg2[%c0_2, %c0_3] : memref<128x128xbf16, #tpu.memory_space<vmem>>, vector<128x128xbf16>
    %cst = arith.constant dense<0.000000e+00> : vector<384x128xf32>
    %4 = tpu.matmul %2, %3, %cst {dimension_numbers = #tpu.dot_dimension_numbers<[1], [0], [0], [1], [0, 0, 1, 1], [], []>} : vector<384x128xbf16>, vector<128x128xbf16>, vector<384x128xf32> -> vector<384x128xf32>
    %c0_4 = arith.constant 0 : index
    %c0_5 = arith.constant 0 : index
    %5 = vector.load %arg3[%c0_4, %c0_5] : memref<1x128xf32, #tpu.memory_space<vmem>>, vector<1x128xf32>
    %6 = vector.broadcast %5 : vector<1x128xf32> to vector<384x128xf32>
    %7 = arith.addf %4, %6 : vector<384x128xf32>
    %cst_6 = arith.constant 0.000000e+00 : f32
    %8 = vector.broadcast %cst_6 : f32 to vector<384x128xf32>
    %9 = arith.maximumf %7, %8 : vector<384x128xf32>
    %10 = vector.shape_cast %9 : vector<384x128xf32> to vector<16x24x128xf32>
    %11 = tpu.iota {dimensions = array<i32: 1>} : vector<1x24x128xi32>
    %c1_i32 = arith.constant 1 : i32
    %12 = vector.broadcast %c1_i32 : i32 to vector<1x24x128xi32>
    %13 = arith.cmpi sge, %11, %12 : vector<1x24x128xi32>
    %c16_i32 = arith.constant 16 : i32
    %14 = vector.broadcast %c16_i32 : i32 to vector<1x24x128xi32>
    %15 = arith.cmpi sle, %11, %14 : vector<1x24x128xi32>
    %16 = arith.andi %13, %15 : vector<1x24x128xi1>
    %cst_7 = arith.constant 0.000000e+00 : f32
    %17 = vector.shape_cast %16 : vector<1x24x128xi1> to vector<1x24x128xi1>
    %18 = vector.broadcast %17 : vector<1x24x128xi1> to vector<16x24x128xi1>
    %19 = vector.broadcast %cst_7 : f32 to vector<16x24x128xf32>
    %20 = arith.select %18, %10, %19 : vector<16x24x128xi1>, vector<16x24x128xf32>
    %cst_8 = arith.constant 0.000000e+00 : f32
    %21 = vector.broadcast %cst_8 : f32 to vector<24x128xf32>
    %c0_9 = arith.constant 0 : index
    %c0_10 = arith.constant 0 : index
    %c0_11 = arith.constant 0 : index
    %22 = vector.load %arg10[%c0_9, %c0_10, %c0_11] : memref<18x24x128xf32, #tpu.memory_space<vmem>>, vector<1x24x128xf32>
    %23 = vector.shape_cast %22 : vector<1x24x128xf32> to vector<24x128xf32>
    %24 = vector.shape_cast %21 : vector<24x128xf32> to vector<1x24x128xf32>
    tpu.vector_store %arg10[%c0_9, %c0_10, %c0_11], %24 {strides = array<i32>} : memref<18x24x128xf32, #tpu.memory_space<vmem>>, vector<1x24x128xf32>,
    %c17 = arith.constant 17 : index
    %c0_12 = arith.constant 0 : index
    %c0_13 = arith.constant 0 : index
    %25 = vector.load %arg10[%c17, %c0_12, %c0_13] : memref<18x24x128xf32, #tpu.memory_space<vmem>>, vector<1x24x128xf32>
    %26 = vector.shape_cast %25 : vector<1x24x128xf32> to vector<24x128xf32>
    %27 = vector.shape_cast %21 : vector<24x128xf32> to vector<1x24x128xf32>
    tpu.vector_store %arg10[%c17, %c0_12, %c0_13], %27 {strides = array<i32>} : memref<18x24x128xf32, #tpu.memory_space<vmem>>, vector<1x24x128xf32>,
    %c1_14 = arith.constant 1 : index
    %c0_15 = arith.constant 0 : index
    %c0_16 = arith.constant 0 : index
    %28 = vector.load %arg10[%c1_14, %c0_15, %c0_16] : memref<18x24x128xf32, #tpu.memory_space<vmem>>, vector<16x24x128xf32>
    tpu.vector_store %arg10[%c1_14, %c0_15, %c0_16], %20 {strides = array<i32>} : memref<18x24x128xf32, #tpu.memory_space<vmem>>, vector<16x24x128xf32>,
    %cst_17 = arith.constant 0.000000e+00 : f32
    %29 = vector.broadcast %cst_17 : f32 to vector<256x128xf32>
    %c0_18 = arith.constant 0 : index
    %c0_19 = arith.constant 0 : index
    %c0_20 = arith.constant 0 : index
    %30 = vector.load %arg10[%c0_18, %c0_19, %c0_20] : memref<18x24x128xf32, #tpu.memory_space<vmem>>, vector<16x16x128xf32>
    %31 = vector.shape_cast %30 : vector<16x16x128xf32> to vector<256x128xf32>
    %32 = arith.truncf %31 : vector<256x128xf32> to vector<256x128xbf16>
    %c0_21 = arith.constant 0 : index
    %c0_22 = arith.constant 0 : index
    %c0_23 = arith.constant 0 : index
    %c0_24 = arith.constant 0 : index
    %33 = vector.load %arg4[%c0_21, %c0_22, %c0_23, %c0_24] : memref<3x3x128x128xbf16, #tpu.memory_space<vmem>>, vector<1x1x128x128xbf16>
    %34 = vector.shape_cast %33 : vector<1x1x128x128xbf16> to vector<128x128xbf16>
    %cst_25 = arith.constant dense<0.000000e+00> : vector<256x128xf32>
    %35 = tpu.matmul %32, %34, %cst_25 {dimension_numbers = #tpu.dot_dimension_numbers<[1], [0], [0], [1], [0, 0, 1, 1], [], []>} : vector<256x128xbf16>, vector<128x128xbf16>, vector<256x128xf32> -> vector<256x128xf32>
    %36 = arith.addf %29, %35 : vector<256x128xf32>
    %c0_26 = arith.constant 0 : index
    %c1_27 = arith.constant 1 : index
    %c0_28 = arith.constant 0 : index
    %37 = vector.load %arg10[%c0_26, %c1_27, %c0_28] : memref<18x24x128xf32, #tpu.memory_space<vmem>>, vector<16x16x128xf32>
    %38 = vector.shape_cast %37 : vector<16x16x128xf32> to vector<256x128xf32>
    %39 = arith.truncf %38 : vector<256x128xf32> to vector<256x128xbf16>
    %c0_29 = arith.constant 0 : index
    %c1_30 = arith.constant 1 : index
    %c0_31 = arith.constant 0 : index
    %c0_32 = arith.constant 0 : index
    %40 = vector.load %arg4[%c0_29, %c1_30, %c0_31, %c0_32] : memref<3x3x128x128xbf16, #tpu.memory_space<vmem>>, vector<1x1x128x128xbf16>
    %41 = vector.shape_cast %40 : vector<1x1x128x128xbf16> to vector<128x128xbf16>
    %cst_33 = arith.constant dense<0.000000e+00> : vector<256x128xf32>
    %42 = tpu.matmul %39, %41, %cst_33 {dimension_numbers = #tpu.dot_dimension_numbers<[1], [0], [0], [1], [0, 0, 1, 1], [], []>} : vector<256x128xbf16>, vector<128x128xbf16>, vector<256x128xf32> -> vector<256x128xf32>
    %43 = arith.addf %36, %42 : vector<256x128xf32>
    %c0_34 = arith.constant 0 : index
    %c2 = arith.constant 2 : index
    %c0_35 = arith.constant 0 : index
    %44 = vector.load %arg10[%c0_34, %c2, %c0_35] : memref<18x24x128xf32, #tpu.memory_space<vmem>>, vector<16x16x128xf32>
    %45 = vector.shape_cast %44 : vector<16x16x128xf32> to vector<256x128xf32>
    %46 = arith.truncf %45 : vector<256x128xf32> to vector<256x128xbf16>
    %c0_36 = arith.constant 0 : index
    %c2_37 = arith.constant 2 : index
    %c0_38 = arith.constant 0 : index
    %c0_39 = arith.constant 0 : index
    %47 = vector.load %arg4[%c0_36, %c2_37, %c0_38, %c0_39] : memref<3x3x128x128xbf16, #tpu.memory_space<vmem>>, vector<1x1x128x128xbf16>
    %48 = vector.shape_cast %47 : vector<1x1x128x128xbf16> to vector<128x128xbf16>
    %cst_40 = arith.constant dense<0.000000e+00> : vector<256x128xf32>
    %49 = tpu.matmul %46, %48, %cst_40 {dimension_numbers = #tpu.dot_dimension_numbers<[1], [0], [0], [1], [0, 0, 1, 1], [], []>} : vector<256x128xbf16>, vector<128x128xbf16>, vector<256x128xf32> -> vector<256x128xf32>
    %50 = arith.addf %43, %49 : vector<256x128xf32>
    %c1_41 = arith.constant 1 : index
    %c0_42 = arith.constant 0 : index
    %c0_43 = arith.constant 0 : index
    %51 = vector.load %arg10[%c1_41, %c0_42, %c0_43] : memref<18x24x128xf32, #tpu.memory_space<vmem>>, vector<16x16x128xf32>
    %52 = vector.shape_cast %51 : vector<16x16x128xf32> to vector<256x128xf32>
    %53 = arith.truncf %52 : vector<256x128xf32> to vector<256x128xbf16>
    %c1_44 = arith.constant 1 : index
    %c0_45 = arith.constant 0 : index
    %c0_46 = arith.constant 0 : index
    %c0_47 = arith.constant 0 : index
    %54 = vector.load %arg4[%c1_44, %c0_45, %c0_46, %c0_47] : memref<3x3x128x128xbf16, #tpu.memory_space<vmem>>, vector<1x1x128x128xbf16>
    %55 = vector.shape_cast %54 : vector<1x1x128x128xbf16> to vector<128x128xbf16>
    %cst_48 = arith.constant dense<0.000000e+00> : vector<256x128xf32>
    %56 = tpu.matmul %53, %55, %cst_48 {dimension_numbers = #tpu.dot_dimension_numbers<[1], [0], [0], [1], [0, 0, 1, 1], [], []>} : vector<256x128xbf16>, vector<128x128xbf16>, vector<256x128xf32> -> vector<256x128xf32>
    %57 = arith.addf %50, %56 : vector<256x128xf32>
    %c1_49 = arith.constant 1 : index
    %c1_50 = arith.constant 1 : index
    %c0_51 = arith.constant 0 : index
    %58 = vector.load %arg10[%c1_49, %c1_50, %c0_51] : memref<18x24x128xf32, #tpu.memory_space<vmem>>, vector<16x16x128xf32>
    %59 = vector.shape_cast %58 : vector<16x16x128xf32> to vector<256x128xf32>
    %60 = arith.truncf %59 : vector<256x128xf32> to vector<256x128xbf16>
    %c1_52 = arith.constant 1 : index
    %c1_53 = arith.constant 1 : index
    %c0_54 = arith.constant 0 : index
    %c0_55 = arith.constant 0 : index
    %61 = vector.load %arg4[%c1_52, %c1_53, %c0_54, %c0_55] : memref<3x3x128x128xbf16, #tpu.memory_space<vmem>>, vector<1x1x128x128xbf16>
    %62 = vector.shape_cast %61 : vector<1x1x128x128xbf16> to vector<128x128xbf16>
    %cst_56 = arith.constant dense<0.000000e+00> : vector<256x128xf32>
    %63 = tpu.matmul %60, %62, %cst_56 {dimension_numbers = #tpu.dot_dimension_numbers<[1], [0], [0], [1], [0, 0, 1, 1], [], []>} : vector<256x128xbf16>, vector<128x128xbf16>, vector<256x128xf32> -> vector<256x128xf32>
    %64 = arith.addf %57, %63 : vector<256x128xf32>
    %c1_57 = arith.constant 1 : index
    %c2_58 = arith.constant 2 : index
    %c0_59 = arith.constant 0 : index
    %65 = vector.load %arg10[%c1_57, %c2_58, %c0_59] : memref<18x24x128xf32, #tpu.memory_space<vmem>>, vector<16x16x128xf32>
    %66 = vector.shape_cast %65 : vector<16x16x128xf32> to vector<256x128xf32>
    %67 = arith.truncf %66 : vector<256x128xf32> to vector<256x128xbf16>
    %c1_60 = arith.constant 1 : index
    %c2_61 = arith.constant 2 : index
    %c0_62 = arith.constant 0 : index
    %c0_63 = arith.constant 0 : index
    %68 = vector.load %arg4[%c1_60, %c2_61, %c0_62, %c0_63] : memref<3x3x128x128xbf16, #tpu.memory_space<vmem>>, vector<1x1x128x128xbf16>
    %69 = vector.shape_cast %68 : vector<1x1x128x128xbf16> to vector<128x128xbf16>
    %cst_64 = arith.constant dense<0.000000e+00> : vector<256x128xf32>
    %70 = tpu.matmul %67, %69, %cst_64 {dimension_numbers = #tpu.dot_dimension_numbers<[1], [0], [0], [1], [0, 0, 1, 1], [], []>} : vector<256x128xbf16>, vector<128x128xbf16>, vector<256x128xf32> -> vector<256x128xf32>
    %71 = arith.addf %64, %70 : vector<256x128xf32>
    %c2_65 = arith.constant 2 : index
    %c0_66 = arith.constant 0 : index
    %c0_67 = arith.constant 0 : index
    %72 = vector.load %arg10[%c2_65, %c0_66, %c0_67] : memref<18x24x128xf32, #tpu.memory_space<vmem>>, vector<16x16x128xf32>
    %73 = vector.shape_cast %72 : vector<16x16x128xf32> to vector<256x128xf32>
    %74 = arith.truncf %73 : vector<256x128xf32> to vector<256x128xbf16>
    %c2_68 = arith.constant 2 : index
    %c0_69 = arith.constant 0 : index
    %c0_70 = arith.constant 0 : index
    %c0_71 = arith.constant 0 : index
    %75 = vector.load %arg4[%c2_68, %c0_69, %c0_70, %c0_71] : memref<3x3x128x128xbf16, #tpu.memory_space<vmem>>, vector<1x1x128x128xbf16>
    %76 = vector.shape_cast %75 : vector<1x1x128x128xbf16> to vector<128x128xbf16>
    %cst_72 = arith.constant dense<0.000000e+00> : vector<256x128xf32>
    %77 = tpu.matmul %74, %76, %cst_72 {dimension_numbers = #tpu.dot_dimension_numbers<[1], [0], [0], [1], [0, 0, 1, 1], [], []>} : vector<256x128xbf16>, vector<128x128xbf16>, vector<256x128xf32> -> vector<256x128xf32>
    %78 = arith.addf %71, %77 : vector<256x128xf32>
    %c2_73 = arith.constant 2 : index
    %c1_74 = arith.constant 1 : index
    %c0_75 = arith.constant 0 : index
    %79 = vector.load %arg10[%c2_73, %c1_74, %c0_75] : memref<18x24x128xf32, #tpu.memory_space<vmem>>, vector<16x16x128xf32>
    %80 = vector.shape_cast %79 : vector<16x16x128xf32> to vector<256x128xf32>
    %81 = arith.truncf %80 : vector<256x128xf32> to vector<256x128xbf16>
    %c2_76 = arith.constant 2 : index
    %c1_77 = arith.constant 1 : index
    %c0_78 = arith.constant 0 : index
    %c0_79 = arith.constant 0 : index
    %82 = vector.load %arg4[%c2_76, %c1_77, %c0_78, %c0_79] : memref<3x3x128x128xbf16, #tpu.memory_space<vmem>>, vector<1x1x128x128xbf16>
    %83 = vector.shape_cast %82 : vector<1x1x128x128xbf16> to vector<128x128xbf16>
    %cst_80 = arith.constant dense<0.000000e+00> : vector<256x128xf32>
    %84 = tpu.matmul %81, %83, %cst_80 {dimension_numbers = #tpu.dot_dimension_numbers<[1], [0], [0], [1], [0, 0, 1, 1], [], []>} : vector<256x128xbf16>, vector<128x128xbf16>, vector<256x128xf32> -> vector<256x128xf32>
    %85 = arith.addf %78, %84 : vector<256x128xf32>
    %c2_81 = arith.constant 2 : index
    %c2_82 = arith.constant 2 : index
    %c0_83 = arith.constant 0 : index
    %86 = vector.load %arg10[%c2_81, %c2_82, %c0_83] : memref<18x24x128xf32, #tpu.memory_space<vmem>>, vector<16x16x128xf32>
    %87 = vector.shape_cast %86 : vector<16x16x128xf32> to vector<256x128xf32>
    %88 = arith.truncf %87 : vector<256x128xf32> to vector<256x128xbf16>
    %c2_84 = arith.constant 2 : index
    %c2_85 = arith.constant 2 : index
    %c0_86 = arith.constant 0 : index
    %c0_87 = arith.constant 0 : index
    %89 = vector.load %arg4[%c2_84, %c2_85, %c0_86, %c0_87] : memref<3x3x128x128xbf16, #tpu.memory_space<vmem>>, vector<1x1x128x128xbf16>
    %90 = vector.shape_cast %89 : vector<1x1x128x128xbf16> to vector<128x128xbf16>
    %cst_88 = arith.constant dense<0.000000e+00> : vector<256x128xf32>
    %91 = tpu.matmul %88, %90, %cst_88 {dimension_numbers = #tpu.dot_dimension_numbers<[1], [0], [0], [1], [0, 0, 1, 1], [], []>} : vector<256x128xbf16>, vector<128x128xbf16>, vector<256x128xf32> -> vector<256x128xf32>
    %92 = arith.addf %85, %91 : vector<256x128xf32>
    %c0_89 = arith.constant 0 : index
    %c0_90 = arith.constant 0 : index
    %93 = vector.load %arg5[%c0_89, %c0_90] : memref<1x128xf32, #tpu.memory_space<vmem>>, vector<1x128xf32>
    %94 = vector.broadcast %93 : vector<1x128xf32> to vector<256x128xf32>
    %95 = arith.addf %92, %94 : vector<256x128xf32>
    %cst_91 = arith.constant 0.000000e+00 : f32
    %96 = vector.broadcast %cst_91 : f32 to vector<256x128xf32>
    %97 = arith.maximumf %95, %96 : vector<256x128xf32>
    %98 = arith.truncf %97 : vector<256x128xf32> to vector<256x128xbf16>
    %c0_92 = arith.constant 0 : index
    %c0_93 = arith.constant 0 : index
    %99 = vector.load %arg6[%c0_92, %c0_93] : memref<128x128xbf16, #tpu.memory_space<vmem>>, vector<128x128xbf16>
    %cst_94 = arith.constant dense<0.000000e+00> : vector<256x128xf32>
    %100 = tpu.matmul %98, %99, %cst_94 {dimension_numbers = #tpu.dot_dimension_numbers<[1], [0], [0], [1], [0, 0, 1, 1], [], []>} : vector<256x128xbf16>, vector<128x128xbf16>, vector<256x128xf32> -> vector<256x128xf32>
    %c0_95 = arith.constant 0 : index
    %c0_96 = arith.constant 0 : index
    %101 = vector.load %arg7[%c0_95, %c0_96] : memref<1x128xf32, #tpu.memory_space<vmem>>, vector<1x128xf32>
    %102 = vector.broadcast %101 : vector<1x128xf32> to vector<256x128xf32>
    %103 = arith.addf %100, %102 : vector<256x128xf32>
    %c0_97 = arith.constant 0 : index
    %c1_98 = arith.constant 1 : index
    %c1_99 = arith.constant 1 : index
    %c0_100 = arith.constant 0 : index
    %104 = vector.load %arg1[%c0_97, %c1_98, %c1_99, %c0_100] : memref<1x18x24x128xf32, #tpu.memory_space<vmem>>, vector<1x16x16x128xf32>
    %105 = vector.shape_cast %104 : vector<1x16x16x128xf32> to vector<256x128xf32>
    %106 = arith.truncf %105 : vector<256x128xf32> to vector<256x128xbf16>
    %c0_101 = arith.constant 0 : index
    %c0_102 = arith.constant 0 : index
    %107 = vector.load %arg8[%c0_101, %c0_102] : memref<128x128xbf16, #tpu.memory_space<vmem>>, vector<128x128xbf16>
    %cst_103 = arith.constant dense<0.000000e+00> : vector<256x128xf32>
    %108 = tpu.matmul %106, %107, %cst_103 {dimension_numbers = #tpu.dot_dimension_numbers<[1], [0], [0], [1], [0, 0, 1, 1], [], []>} : vector<256x128xbf16>, vector<128x128xbf16>, vector<256x128xf32> -> vector<256x128xf32>
    %109 = arith.addf %103, %108 : vector<256x128xf32>
    %cst_104 = arith.constant 0.000000e+00 : f32
    %110 = vector.broadcast %cst_104 : f32 to vector<256x128xf32>
    %111 = arith.maximumf %109, %110 : vector<256x128xf32>
    %112 = vector.shape_cast %111 : vector<256x128xf32> to vector<1x16x16x128xf32>
    %c0_105 = arith.constant 0 : index
    %c0_106 = arith.constant 0 : index
    %c0_107 = arith.constant 0 : index
    %c0_108 = arith.constant 0 : index
    %113 = vector.load %arg9[%c0_105, %c0_106, %c0_107, %c0_108] : memref<1x16x16x128xf32, #tpu.memory_space<vmem>>, vector<1x16x16x128xf32>
    tpu.vector_store %arg9[%c0_105, %c0_106, %c0_107, %c0_108], %112 {strides = array<i32>} : memref<1x16x16x128xf32, #tpu.memory_space<vmem>>, vector<1x16x16x128xf32>,
    return
  }
  func.func @transform_0(%arg0: i32) -> (i32, i32, i32, i32) {
    %c0_i32 = arith.constant 0 : i32
    %c0_i32_0 = arith.constant 0 : i32
    %c0_i32_1 = arith.constant 0 : i32
    %c0_i32_2 = arith.constant 0 : i32
    return %arg0, %c0_i32, %c0_i32_0, %c0_i32_1 : i32, i32, i32, i32
  }
  func.func @transform_1(%arg0: i32) -> (i32, i32) {
    %c0_i32 = arith.constant 0 : i32
    %c0_i32_0 = arith.constant 0 : i32
    %c0_i32_1 = arith.constant 0 : i32
    return %c0_i32, %c0_i32_0 : i32, i32
  }
  func.func @transform_2(%arg0: i32) -> (i32, i32) {
    %c0_i32 = arith.constant 0 : i32
    %c0_i32_0 = arith.constant 0 : i32
    %c0_i32_1 = arith.constant 0 : i32
    return %c0_i32, %c0_i32_0 : i32, i32
  }
  func.func @transform_3(%arg0: i32) -> (i32, i32, i32, i32) {
    %c0_i32 = arith.constant 0 : i32
    %c0_i32_0 = arith.constant 0 : i32
    %c0_i32_1 = arith.constant 0 : i32
    %c0_i32_2 = arith.constant 0 : i32
    %c0_i32_3 = arith.constant 0 : i32
    return %c0_i32, %c0_i32_0, %c0_i32_1, %c0_i32_2 : i32, i32, i32, i32
  }
  func.func @transform_4(%arg0: i32) -> (i32, i32) {
    %c0_i32 = arith.constant 0 : i32
    %c0_i32_0 = arith.constant 0 : i32
    %c0_i32_1 = arith.constant 0 : i32
    return %c0_i32, %c0_i32_0 : i32, i32
  }
  func.func @transform_5(%arg0: i32) -> (i32, i32) {
    %c0_i32 = arith.constant 0 : i32
    %c0_i32_0 = arith.constant 0 : i32
    %c0_i32_1 = arith.constant 0 : i32
    return %c0_i32, %c0_i32_0 : i32, i32
  }
  func.func @transform_6(%arg0: i32) -> (i32, i32) {
    %c0_i32 = arith.constant 0 : i32
    %c0_i32_0 = arith.constant 0 : i32
    %c0_i32_1 = arith.constant 0 : i32
    return %c0_i32, %c0_i32_0 : i32, i32
  }
  func.func @transform_7(%arg0: i32) -> (i32, i32) {
    %c0_i32 = arith.constant 0 : i32
    %c0_i32_0 = arith.constant 0 : i32
    %c0_i32_1 = arith.constant 0 : i32
    return %c0_i32, %c0_i32_0 : i32, i32
  }
  func.func @transform_8(%arg0: i32) -> (i32, i32, i32, i32) {
    %c0_i32 = arith.constant 0 : i32
    %c0_i32_0 = arith.constant 0 : i32
    %c0_i32_1 = arith.constant 0 : i32
    %c0_i32_2 = arith.constant 0 : i32
    return %arg0, %c0_i32, %c0_i32_0, %c0_i32_1 : i32, i32, i32, i32
  }
}

</mosaic_0001>

<llo_original>
// kernel: tpu_custom_call.1
$region0: #{tpu_custom_call.1}
  #allocation0 [shape = 'u32[]', space=smem, size = 0x4, offset = 0x4, fixed_abs, tag = 'smem constant byte address 0x4 - core index']
  #allocation1 [shape = 'u32[144,128]{1,0:T(1,128)}', space=vmem, size = 0x12000, scoped, tag = 'internal scratch']
  #allocation2 [shape = 'f32[18,24,128]{2,1,0:T(8,128)}', space=vmem, size = 0x36000, scoped, tag = 'scratch operand']
  %s0 = inlined_call_operand.hbm [shape: f32[2,18,24,128], index: 0, kind: input, shape index: {}]
  %s1 = inlined_call_operand.hbm [shape: bf16[128,128], index: 1, kind: input, shape index: {}]
  %s2 = inlined_call_operand.hbm [shape: f32[1,128], index: 2, kind: input, shape index: {}]
  %s3 = inlined_call_operand.hbm [shape: bf16[3,3,128,128], index: 3, kind: input, shape index: {}]
  %s4 = inlined_call_operand.hbm [shape: f32[1,128], index: 4, kind: input, shape index: {}]
  %s5 = inlined_call_operand.hbm [shape: bf16[128,128], index: 5, kind: input, shape index: {}]
  %s6 = inlined_call_operand.hbm [shape: f32[1,128], index: 6, kind: input, shape index: {}]
  %s7 = inlined_call_operand.hbm [shape: bf16[128,128], index: 7, kind: input, shape index: {}]
  %s8 = inlined_call_operand.hbm [shape: f32[2,16,16,128], index: 8, kind: output, shape index: {}]
  %s9 = sld [smem:[#allocation0]]
  $region97: #{tpu_custom_call.1} parent=0
    _
  %s11 = ssub.s32 1, %s9
  %s12 = scalar_select 0, %s11, %s9
  $region1: #{tpu_custom_call.1} parent=0
    #allocation3 [shape = 'u8[442368]{0}', space=vmem, size = 0x6c000, scoped, tag = 'input window, operand 0']
    #allocation4 [shape = 's32[2]{0}', space=sflag, size = 0x8, scoped, tag = 'scoped memory for tpu_custom_call.1']
    #allocation5 [shape = 's32[2]{0}', space=sflag, size = 0x8, scoped, tag = 'scoped memory for tpu_custom_call.1']
    #allocation6 [shape = 'u8[32768]{0}', space=vmem, size = 0x8000, scoped, tag = 'input window, operand 1, single buffered']
    #allocation7 [shape = 's32[1]{0}', space=sflag, size = 0x4, scoped, tag = 'scoped memory for tpu_custom_call.1']
    #allocation8 [shape = 'u8[512]{0}', space=vmem, size = 0x400, scoped, tag = 'input window, operand 2, single buffered']
    #allocation9 [shape = 'u8[294912]{0}', space=vmem, size = 0x48000, scoped, tag = 'input window, operand 3, single buffered']
    #allocation10 [shape = 's32[1]{0}', space=sflag, size = 0x4, scoped, tag = 'scoped memory for tpu_custom_call.1']
    #allocation11 [shape = 'u8[512]{0}', space=vmem, size = 0x400, scoped, tag = 'input window, operand 4, single buffered']
    #allocation12 [shape = 'u8[32768]{0}', space=vmem, size = 0x8000, scoped, tag = 'input window, operand 5, single buffered']
    #allocation13 [shape = 's32[1]{0}', space=sflag, size = 0x4, scoped, tag = 'scoped memory for tpu_custom_call.1']
    #allocation14 [shape = 'u8[512]{0}', space=vmem, size = 0x400, scoped, tag = 'input window, operand 6, single buffered']
    #allocation15 [shape = 'u8[32768]{0}', space=vmem, size = 0x8000, scoped, tag = 'input window, operand 7, single buffered']
    #allocation16 [shape = 's32[1]{0}', space=sflag, size = 0x4, scoped, tag = 'scoped memory for tpu_custom_call.1']
    #allocation17 [shape = 'u8[262144]{0}', space=vmem, size = 0x40000, scoped, tag = 'output window, operand 0']
    %13 = vsyncpa [#allocation4], 0
    %s14 = scalar_lea.sflag [#allocation4], 1
    %15 = vsyncpa %s14, 0
    %16 = vsyncpa [#allocation7], 0
    %17 = vsyncpa [#allocation10], 0
    %18 = vsyncpa [#allocation13], 0
    %19 = vsyncpa [#allocation16], 0
    %20 = vsyncpa [#allocation5], 0
    %s21 = scalar_lea.sflag [#allocation5], 1
    %22 = vsyncpa %s21, 0
    loop: start=0, step=1, limit=4
    $region2: #{tpu_custom_call.1} parent=1 // loop_pre_header
      _
    $region3: #{tpu_custom_call.1} parent=1 // loop_header
      %s24 = sphi 0, %s28
      %p25 = scmp.ge.s32.totalorder %s24, 4
      %s34 = sphi 0, %s36
      %s37 = sphi 0, %s34
      %s38 = sphi 0, %s37
      %s54 = sphi 0, %s38
      %s58 = sphi 0, %s58
      %s60 = sphi 0, %s58
      %s61 = sphi 0, %s60
      %s75 = sphi 0, %s61
      %s79 = sphi 0, %s79
      %s81 = sphi 0, %s79
      %s82 = sphi 0, %s81
      %s96 = sphi 0, %s82
      %s100 = sphi 0, %s100
      %s102 = sphi 0, %s100
      %s103 = sphi 0, %s102
      %s117 = sphi 0, %s103
      %s121 = sphi 0, %s121
      %s123 = sphi 0, %s121
      %s124 = sphi 0, %s123
      %s138 = sphi 0, %s124
      %s142 = sphi 0, %s142
      %s144 = sphi 0, %s142
      %s145 = sphi 0, %s144
      %s159 = sphi 0, %s145
      %s163 = sphi 0, %s163
      %s165 = sphi 0, %s163
      %s166 = sphi 0, %s165
      %s180 = sphi 0, %s166
      %s184 = sphi 0, %s184
      %s186 = sphi 0, %s184
      %s187 = sphi 0, %s186
      %s201 = sphi 0, %s187
      %s207 = sphi 0, %s209
      %s210 = sphi 0, %s207
      %s211 = sphi 0, %s210
      %s227 = sphi 0, %s211
    $region4: #{tpu_custom_call.1} parent=1 // loop_header_branch
      %27 = sbr.rel (%p25) target = $region8
    $region5: #{tpu_custom_call.1} parent=1 // loop_body
      %s29 = ssub.s32 %s24, 1
      %s30 = ssub.s32 %s24, 2
      %s31 = sadd.s32 %s24, 1
      %s32 = ssub.s32 %s24, %s31
      %p33 = scmp.eq.s32.totalorder %s32, 0
      %s35 = sadd.s32 %s34, 1
      %s36 = scalar_select %p33, %s34, %s35
      %p39 = pneg %p33
      %p40 = scmp.eq.s32.totalorder %s24, 1
      %p41 = por %p39, %p40
      %p42 = scmp.ne.s32.totalorder %s34, %s37
      %p43 = scmp.eq.s32.totalorder %s24, 0
      %p44 = por %p42, %p43
      %p45 = scmp.ne.s32.totalorder %s34, %s37
      %p46 = scmp.eq.s32.totalorder %s29, 1
      %p47 = por %p45, %p46
      %p48 = scmp.ne.s32.totalorder %s37, %s38
      %p49 = scmp.eq.s32.totalorder %s29, 0
      %p50 = por %p48, %p49
      %p51 = scmp.ne.s32.totalorder %s37, %s38
      %p52 = scmp.eq.s32.totalorder %s30, 1
      %p53 = por %p51, %p52
      %p55 = scmp.ne.s32.totalorder %s38, %s54
      %p56 = scmp.eq.s32.totalorder %s30, 0
      %p57 = por %p55, %p56
      %s59 = sadd.s32 %s58, 1
      %p62 = scmp.eq.s32.totalorder %s24, 1
      %p63 = scmp.ne.s32.totalorder %s58, %s60
      %p64 = scmp.eq.s32.totalorder %s24, 0
      %p65 = por %p63, %p64
      %p66 = scmp.ne.s32.totalorder %s58, %s60
      %p67 = scmp.eq.s32.totalorder %s29, 1
      %p68 = por %p66, %p67
      %p69 = scmp.ne.s32.totalorder %s60, %s61
      %p70 = scmp.eq.s32.totalorder %s29, 0
      %p71 = por %p69, %p70
      %p72 = scmp.ne.s32.totalorder %s60, %s61
      %p73 = scmp.eq.s32.totalorder %s30, 1
      %p74 = por %p72, %p73
      %p76 = scmp.ne.s32.totalorder %s61, %s75
      %p77 = scmp.eq.s32.totalorder %s30, 0
      %p78 = por %p76, %p77
      %s80 = sadd.s32 %s79, 1
      %p83 = scmp.eq.s32.totalorder %s24, 1
      %p84 = scmp.ne.s32.totalorder %s79, %s81
      %p85 = scmp.eq.s32.totalorder %s24, 0
      %p86 = por %p84, %p85
      %p87 = scmp.ne.s32.totalorder %s79, %s81
      %p88 = scmp.eq.s32.totalorder %s29, 1
      %p89 = por %p87, %p88
      %p90 = scmp.ne.s32.totalorder %s81, %s82
      %p91 = scmp.eq.s32.totalorder %s29, 0
      %p92 = por %p90, %p91
      %p93 = scmp.ne.s32.totalorder %s81, %s82
      %p94 = scmp.eq.s32.totalorder %s30, 1
      %p95 = por %p93, %p94
      %p97 = scmp.ne.s32.totalorder %s82, %s96
      %p98 = scmp.eq.s32.totalorder %s30, 0
      %p99 = por %p97, %p98
      %s101 = sadd.s32 %s100, 1
      %p104 = scmp.eq.s32.totalorder %s24, 1
      %p105 = scmp.ne.s32.totalorder %s100, %s102
      %p106 = scmp.eq.s32.totalorder %s24, 0
      %p107 = por %p105, %p106
      %p108 = scmp.ne.s32.totalorder %s100, %s102
      %p109 = scmp.eq.s32.totalorder %s29, 1
      %p110 = por %p108, %p109
      %p111 = scmp.ne.s32.totalorder %s102, %s103
      %p112 = scmp.eq.s32.totalorder %s29, 0
      %p113 = por %p111, %p112
      %p114 = scmp.ne.s32.totalorder %s102, %s103
      %p115 = scmp.eq.s32.totalorder %s30, 1
      %p116 = por %p114, %p115
      %p118 = scmp.ne.s32.totalorder %s103, %s117
      %p119 = scmp.eq.s32.totalorder %s30, 0
      %p120 = por %p118, %p119
      %s122 = sadd.s32 %s121, 1
      %p125 = scmp.eq.s32.totalorder %s24, 1
      %p126 = scmp.ne.s32.totalorder %s121, %s123
      %p127 = scmp.eq.s32.totalorder %s24, 0
      %p128 = por %p126, %p127
      %p129 = scmp.ne.s32.totalorder %s121, %s123
      %p130 = scmp.eq.s32.totalorder %s29, 1
      %p131 = por %p129, %p130
      %p132 = scmp.ne.s32.totalorder %s123, %s124
      %p133 = scmp.eq.s32.totalorder %s29, 0
      %p134 = por %p132, %p133
      %p135 = scmp.ne.s32.totalorder %s123, %s124
      %p136 = scmp.eq.s32.totalorder %s30, 1
      %p137 = por %p135, %p136
      %p139 = scmp.ne.s32.totalorder %s124, %s138
      %p140 = scmp.eq.s32.totalorder %s30, 0
      %p141 = por %p139, %p140
      %s143 = sadd.s32 %s142, 1
      %p146 = scmp.eq.s32.totalorder %s24, 1
      %p147 = scmp.ne.s32.totalorder %s142, %s144
      %p148 = scmp.eq.s32.totalorder %s24, 0
      %p149 = por %p147, %p148
      %p150 = scmp.ne.s32.totalorder %s142, %s144
      %p151 = scmp.eq.s32.totalorder %s29, 1
      %p152 = por %p150, %p151
      %p153 = scmp.ne.s32.totalorder %s144, %s145
      %p154 = scmp.eq.s32.totalorder %s29, 0
      %p155 = por %p153, %p154
      %p156 = scmp.ne.s32.totalorder %s144, %s145
      %p157 = scmp.eq.s32.totalorder %s30, 1
      %p158 = por %p156, %p157
      %p160 = scmp.ne.s32.totalorder %s145, %s159
      %p161 = scmp.eq.s32.totalorder %s30, 0
      %p162 = por %p160, %p161
      %s164 = sadd.s32 %s163, 1
      %p167 = scmp.eq.s32.totalorder %s24, 1
      %p168 = scmp.ne.s32.totalorder %s163, %s165
      %p169 = scmp.eq.s32.totalorder %s24, 0
      %p170 = por %p168, %p169
      %p171 = scmp.ne.s32.totalorder %s163, %s165
      %p172 = scmp.eq.s32.totalorder %s29, 1
      %p173 = por %p171, %p172
      %p174 = scmp.ne.s32.totalorder %s165, %s166
      %p175 = scmp.eq.s32.totalorder %s29, 0
      %p176 = por %p174, %p175
      %p177 = scmp.ne.s32.totalorder %s165, %s166
      %p178 = scmp.eq.s32.totalorder %s30, 1
      %p179 = por %p177, %p178
      %p181 = scmp.ne.s32.totalorder %s166, %s180
      %p182 = scmp.eq.s32.totalorder %s30, 0
      %p183 = por %p181, %p182
      %s185 = sadd.s32 %s184, 1
      %p188 = scmp.eq.s32.totalorder %s24, 1
      %p189 = scmp.ne.s32.totalorder %s184, %s186
      %p190 = scmp.eq.s32.totalorder %s24, 0
      %p191 = por %p189, %p190
      %p192 = scmp.ne.s32.totalorder %s184, %s186
      %p193 = scmp.eq.s32.totalorder %s29, 1
      %p194 = por %p192, %p193
      %p195 = scmp.ne.s32.totalorder %s186, %s187
      %p196 = scmp.eq.s32.totalorder %s29, 0
      %p197 = por %p195, %p196
      %p198 = scmp.ne.s32.totalorder %s186, %s187
      %p199 = scmp.eq.s32.totalorder %s30, 1
      %p200 = por %p198, %p199
      %p202 = scmp.ne.s32.totalorder %s187, %s201
      %p203 = scmp.eq.s32.totalorder %s30, 0
      %p204 = por %p202, %p203
      %s205 = ssub.s32 %s24, %s31
      %p206 = scmp.eq.s32.totalorder %s205, 0
      %s208 = sadd.s32 %s207, 1
      %s209 = scalar_select %p206, %s207, %s208
      %p212 = pneg %p206
      %p213 = scmp.eq.s32.totalorder %s24, 1
      %p214 = por %p212, %p213
      %p215 = scmp.ne.s32.totalorder %s207, %s210
      %p216 = scmp.eq.s32.totalorder %s24, 0
      %p217 = por %p215, %p216
      %p218 = scmp.ne.s32.totalorder %s207, %s210
      %p219 = scmp.eq.s32.totalorder %s29, 1
      %p220 = por %p218, %p219
      %p221 = scmp.ne.s32.totalorder %s210, %s211
      %p222 = scmp.eq.s32.totalorder %s29, 0
      %p223 = por %p221, %p222
      %p224 = scmp.ne.s32.totalorder %s210, %s211
      %p225 = scmp.eq.s32.totalorder %s30, 1
      %p226 = por %p224, %p225
      %p228 = scmp.ne.s32.totalorder %s211, %s227
      %p229 = scmp.eq.s32.totalorder %s30, 0
      %p230 = por %p228, %p229
      %p231 = scmp.le.s32.totalorder 1, %s24
      %p232 = scmp.lt.s32.totalorder %s24, 3
      %p233 = pnand %p231, %p232
      %p234 = pneg %p233
      // Predicated region
      $region9: #{tpu_custom_call.1} parent=5 // pred_check
        _
      $region10: #{tpu_custom_call.1} parent=5 // pred_check_branch
        %236 = sbr.rel (%p233) target = $region12
      $region11: #{tpu_custom_call.1} parent=5 // pred_region
        %s237 = ssub.s32 %s24, 1
        // Predicated region
        $region13: #{tpu_custom_call.1} parent=11 // pred_check
          %p238 = pneg %p71
        $region14: #{tpu_custom_call.1} parent=11 // pred_check_branch
          %240 = sbr.rel (%p238) target = $region16
        $region15: #{tpu_custom_call.1} parent=11 // pred_region
          %s242 = ssub.s32 1024, 1024
          %243 = vsyncadd [#allocation7], %s242
          %s244 = sshll.u32 [#allocation6], 4
          %s245 = int_to_ptr.vmem [resolvable:$true] %s244
          %250 = dma.hbm_to_vmem [thread:$0]  %s1, 1024, %s245, [#allocation7], 64, 64, 4
        $region16: #{tpu_custom_call.1} parent=11 // pred_fallthru
          _
        // Predicated region
        $region17: #{tpu_custom_call.1} parent=11 // pred_check
          %p251 = pneg %p92
        $region18: #{tpu_custom_call.1} parent=11 // pred_check_branch
          %253 = sbr.rel (%p251) target = $region20
        $region19: #{tpu_custom_call.1} parent=11 // pred_region
          %s255 = ssub.s32 16, 16
          %256 = vsyncadd [#allocation7], %s255
          %s258 = sshll.u32 [#allocation8], 4
          %s259 = int_to_ptr.vmem [resolvable:$true] %s258
          %261 = dma.hbm_to_vmem [thread:$0]  %s2, 16, %s259, [#allocation7]
        $region20: #{tpu_custom_call.1} parent=11 // pred_fallthru
          _
        // Predicated region
        $region21: #{tpu_custom_call.1} parent=11 // pred_check
          %p262 = pneg %p113
        $region22: #{tpu_custom_call.1} parent=11 // pred_check_branch
          %264 = sbr.rel (%p262) target = $region24
        $region23: #{tpu_custom_call.1} parent=11 // pred_region
          %s266 = ssub.s32 9216, 9216
          %267 = vsyncadd [#allocation10], %s266
          %s268 = sshll.u32 [#allocation9], 4
          %s269 = int_to_ptr.vmem [resolvable:$true] %s268
          %274 = dma.hbm_to_vmem [thread:$0]  %s3, 9216, %s269, [#allocation10], 64, 64, 4
        $region24: #{tpu_custom_call.1} parent=11 // pred_fallthru
          _
        // Predicated region
        $region25: #{tpu_custom_call.1} parent=11 // pred_check
          %p275 = pneg %p134
        $region26: #{tpu_custom_call.1} parent=11 // pred_check_branch
          %277 = sbr.rel (%p275) target = $region28
        $region27: #{tpu_custom_call.1} parent=11 // pred_region
          %s279 = ssub.s32 16, 16
          %280 = vsyncadd [#allocation10], %s279
          %s282 = sshll.u32 [#allocation11], 4
          %s283 = int_to_ptr.vmem [resolvable:$true] %s282
          %285 = dma.hbm_to_vmem [thread:$0]  %s4, 16, %s283, [#allocation10]
        $region28: #{tpu_custom_call.1} parent=11 // pred_fallthru
          _
        // Predicated region
        $region29: #{tpu_custom_call.1} parent=11 // pred_check
          %p286 = pneg %p155
        $region30: #{tpu_custom_call.1} parent=11 // pred_check_branch
          %288 = sbr.rel (%p286) target = $region32
        $region31: #{tpu_custom_call.1} parent=11 // pred_region
          %s290 = ssub.s32 1024, 1024
          %291 = vsyncadd [#allocation13], %s290
          %s292 = sshll.u32 [#allocation12], 4
          %s293 = int_to_ptr.vmem [resolvable:$true] %s292
          %298 = dma.hbm_to_vmem [thread:$0]  %s5, 1024, %s293, [#allocation13], 64, 64, 4
        $region32: #{tpu_custom_call.1} parent=11 // pred_fallthru
          _
        // Predicated region
        $region33: #{tpu_custom_call.1} parent=11 // pred_check
          %p299 = pneg %p176
        $region34: #{tpu_custom_call.1} parent=11 // pred_check_branch
          %301 = sbr.rel (%p299) target = $region36
        $region35: #{tpu_custom_call.1} parent=11 // pred_region
          %s303 = ssub.s32 16, 16
          %304 = vsyncadd [#allocation13], %s303
          %s306 = sshll.u32 [#allocation14], 4
          %s307 = int_to_ptr.vmem [resolvable:$true] %s306
          %309 = dma.hbm_to_vmem [thread:$0]  %s6, 16, %s307, [#allocation13]
        $region36: #{tpu_custom_call.1} parent=11 // pred_fallthru
          _
        // Predicated region
        $region37: #{tpu_custom_call.1} parent=11 // pred_check
          %p310 = pneg %p197
        $region38: #{tpu_custom_call.1} parent=11 // pred_check_branch
          %312 = sbr.rel (%p310) target = $region40
        $region39: #{tpu_custom_call.1} parent=11 // pred_region
          %s314 = ssub.s32 1024, 1024
          %315 = vsyncadd [#allocation16], %s314
          %s316 = sshll.u32 [#allocation15], 4
          %s317 = int_to_ptr.vmem [resolvable:$true] %s316
          %322 = dma.hbm_to_vmem [thread:$0]  %s7, 1024, %s317, [#allocation16], 64, 64, 4
        $region40: #{tpu_custom_call.1} parent=11 // pred_fallthru
          _
      $region12: #{tpu_custom_call.1} parent=5 // pred_fallthru
        _
      %p323 = scmp.lt.s32.totalorder %s24, 2
      // Predicated region
      $region41: #{tpu_custom_call.1} parent=5 // pred_check
        %p324 = pneg %p323
      $region42: #{tpu_custom_call.1} parent=5 // pred_check_branch
        %326 = sbr.rel (%p324) target = $region44
      $region43: #{tpu_custom_call.1} parent=5 // pred_region
        // Predicated region
        $region45: #{tpu_custom_call.1} parent=43 // pred_check
          %p327 = pneg %p44
        $region46: #{tpu_custom_call.1} parent=43 // pred_check_branch
          %329 = sbr.rel (%p327) target = $region48
        $region47: #{tpu_custom_call.1} parent=43 // pred_region
          %s330 = sand.u32 %s34, 1
          %s331 = scalar_lea.sflag [#allocation4], %s330
          %s332 = sand.u32 %s34, 1
          %s333 = smul.addr %s332, 432
          %s334 = scalar_lea.vmem [#allocation3], %s333
          %s336 = ssub.s32 6912, 6912
          %337 = vsyncadd %s331, %s336
          %s338 = smul.addr %s24, 54
          %s339 = smul.addr %s338, 128
          %s340 = scalar_lea.hbm %s0, %s339
          %s341 = sshll.u32 %s334, 4
          %s342 = int_to_ptr.vmem [resolvable:$true] %s341
          %347 = dma.hbm_to_vmem [thread:$0]  %s340, 6912, %s342, %s331, 128, 128, 8
        $region48: #{tpu_custom_call.1} parent=43 // pred_fallthru
          _
      $region44: #{tpu_custom_call.1} parent=5 // pred_fallthru
        _
      %p348 = scmp.le.s32.totalorder 1, %s24
      %p349 = scmp.lt.s32.totalorder %s24, 3
      %p350 = pnand %p348, %p349
      %p351 = pneg %p350
      // Predicated region
      $region49: #{tpu_custom_call.1} parent=5 // pred_check
        _
      $region50: #{tpu_custom_call.1} parent=5 // pred_check_branch
        %353 = sbr.rel (%p350) target = $region52
      $region51: #{tpu_custom_call.1} parent=5 // pred_region
        %s354 = ssub.s32 %s24, 1
        %s355 = sand.u32 %s37, 1
        %s356 = scalar_lea.sflag [#allocation4], %s355
        %s357 = sand.u32 %s37, 1
        %s358 = smul.addr %s357, 432
        %s359 = scalar_lea.vmem [#allocation3], %s358
        // Predicated region
        $region53: #{tpu_custom_call.1} parent=51 // pred_check
          %p360 = pneg %p50
        $region54: #{tpu_custom_call.1} parent=51 // pred_check_branch
          %362 = sbr.rel (%p360) target = $region56
        $region55: #{tpu_custom_call.1} parent=51 // pred_region
          %363 = dma.done %s356, 6912
        $region56: #{tpu_custom_call.1} parent=51 // pred_fallthru
          _
        // Predicated region
        $region57: #{tpu_custom_call.1} parent=51 // pred_check
          %p364 = pneg %p71
        $region58: #{tpu_custom_call.1} parent=51 // pred_check_branch
          %366 = sbr.rel (%p364) target = $region60
        $region59: #{tpu_custom_call.1} parent=51 // pred_region
          %367 = dma.done [#allocation7], 1024
        $region60: #{tpu_custom_call.1} parent=51 // pred_fallthru
          _
        // Predicated region
        $region61: #{tpu_custom_call.1} parent=51 // pred_check
          %p368 = pneg %p92
        $region62: #{tpu_custom_call.1} parent=51 // pred_check_branch
          %370 = sbr.rel (%p368) target = $region64
        $region63: #{tpu_custom_call.1} parent=51 // pred_region
          %371 = dma.done [#allocation7], 16
        $region64: #{tpu_custom_call.1} parent=51 // pred_fallthru
          _
        // Predicated region
        $region65: #{tpu_custom_call.1} parent=51 // pred_check
          %p372 = pneg %p113
        $region66: #{tpu_custom_call.1} parent=51 // pred_check_branch
          %374 = sbr.rel (%p372) target = $region68
        $region67: #{tpu_custom_call.1} parent=51 // pred_region
          %375 = dma.done [#allocation10], 9216
        $region68: #{tpu_custom_call.1} parent=51 // pred_fallthru
          _
        // Predicated region
        $region69: #{tpu_custom_call.1} parent=51 // pred_check
          %p376 = pneg %p134
        $region70: #{tpu_custom_call.1} parent=51 // pred_check_branch
          %378 = sbr.rel (%p376) target = $region72
        $region71: #{tpu_custom_call.1} parent=51 // pred_region
          %379 = dma.done [#allocation10], 16
        $region72: #{tpu_custom_call.1} parent=51 // pred_fallthru
          _
        // Predicated region
        $region73: #{tpu_custom_call.1} parent=51 // pred_check
          %p380 = pneg %p155
        $region74: #{tpu_custom_call.1} parent=51 // pred_check_branch
          %382 = sbr.rel (%p380) target = $region76
        $region75: #{tpu_custom_call.1} parent=51 // pred_region
          %383 = dma.done [#allocation13], 1024
        $region76: #{tpu_custom_call.1} parent=51 // pred_fallthru
          _
        // Predicated region
        $region77: #{tpu_custom_call.1} parent=51 // pred_check
          %p384 = pneg %p176
        $region78: #{tpu_custom_call.1} parent=51 // pred_check_branch
          %386 = sbr.rel (%p384) target = $region80
        $region79: #{tpu_custom_call.1} parent=51 // pred_region
          %387 = dma.done [#allocation13], 16
        $region80: #{tpu_custom_call.1} parent=51 // pred_fallthru
          _
        // Predicated region
        $region81: #{tpu_custom_call.1} parent=51 // pred_check
          %p388 = pneg %p197
        $region82: #{tpu_custom_call.1} parent=51 // pred_check_branch
          %390 = sbr.rel (%p388) target = $region84
        $region83: #{tpu_custom_call.1} parent=51 // pred_region
          %391 = dma.done [#allocation16], 1024
        $region84: #{tpu_custom_call.1} parent=51 // pred_fallthru
          _
        %s392 = sand.u32 %s37, 1
        %s393 = scalar_lea.sflag [#allocation4], %s392
        %s394 = sand.u32 %s37, 1
        %s395 = smul.addr %s394, 432
        %s396 = scalar_lea.vmem [#allocation3], %s395
        %p397 = pneg %p50
        %p398 = pneg %p47
        %p399 = pneg %p71
        %p400 = pneg %p68
        %p401 = pneg %p92
        %p402 = pneg %p89
        %p403 = pneg %p113
        %p404 = pneg %p110
        %p405 = pneg %p134
        %p406 = pneg %p131
        %p407 = pneg %p155
        %p408 = pneg %p152
        %p409 = pneg %p176
        %p410 = pneg %p173
        %p411 = pneg %p197
        %p412 = pneg %p194
        %p413 = pneg %p223
        %p414 = pneg %p220
        %s415 = sand.u32 %s210, 1
        %s416 = scalar_lea.sflag [#allocation5], %s415
        %s417 = sand.u32 %s210, 1
        %s418 = smul.addr %s417, 256
        %s419 = scalar_lea.vmem [#allocation17], %s418
        %s421 = scalar_lea.vmem %s359, 24 [#allocation3]
        %v422 = vld [vmem:[%s421] sm:$0xff]
        %v423 = vld [vmem:[%s421 + $0x8] sm:$0xff]
        %v424 = vld [vmem:[%s421 + $0x10] sm:$0xff]
        %v425 = vld [vmem:[%s421 + $0x18] sm:$0xff]
        %v426 = vld [vmem:[%s421 + $0x20] sm:$0xff]
        %v427 = vld [vmem:[%s421 + $0x28] sm:$0xff]
        %v428 = vld [vmem:[%s421 + $0x30] sm:$0xff]
        %v429 = vld [vmem:[%s421 + $0x38] sm:$0xff]
        %v430 = vld [vmem:[%s421 + $0x40] sm:$0xff]
        %v431 = vld [vmem:[%s421 + $0x48] sm:$0xff]
        %v432 = vld [vmem:[%s421 + $0x50] sm:$0xff]
        %v433 = vld [vmem:[%s421 + $0x58] sm:$0xff]
        %v434 = vld [vmem:[%s421 + $0x60] sm:$0xff]
        %v435 = vld [vmem:[%s421 + $0x68] sm:$0xff]
        %v436 = vld [vmem:[%s421 + $0x70] sm:$0xff]
        %v437 = vld [vmem:[%s421 + $0x78] sm:$0xff]
        %v438 = vld [vmem:[%s421 + $0x80] sm:$0xff]
        %v439 = vld [vmem:[%s421 + $0x88] sm:$0xff]
        %v440 = vld [vmem:[%s421 + $0x90] sm:$0xff]
        %v441 = vld [vmem:[%s421 + $0x98] sm:$0xff]
        %v442 = vld [vmem:[%s421 + $0xa0] sm:$0xff]
        %v443 = vld [vmem:[%s421 + $0xa8] sm:$0xff]
        %v444 = vld [vmem:[%s421 + $0xb0] sm:$0xff]
        %v445 = vld [vmem:[%s421 + $0xb8] sm:$0xff]
        %v446 = vld [vmem:[%s421 + $0xc0] sm:$0xff]
        %v447 = vld [vmem:[%s421 + $0xc8] sm:$0xff]
        %v448 = vld [vmem:[%s421 + $0xd0] sm:$0xff]
        %v449 = vld [vmem:[%s421 + $0xd8] sm:$0xff]
        %v450 = vld [vmem:[%s421 + $0xe0] sm:$0xff]
        %v451 = vld [vmem:[%s421 + $0xe8] sm:$0xff]
        %v452 = vld [vmem:[%s421 + $0xf0] sm:$0xff]
        %v453 = vld [vmem:[%s421 + $0xf8] sm:$0xff]
        %v454 = vld [vmem:[%s421 + $0x100] sm:$0xff]
        %v455 = vld [vmem:[%s421 + $0x108] sm:$0xff]
        %v456 = vld [vmem:[%s421 + $0x110] sm:$0xff]
        %v457 = vld [vmem:[%s421 + $0x118] sm:$0xff]
        %v458 = vld [vmem:[%s421 + $0x120] sm:$0xff]
        %v459 = vld [vmem:[%s421 + $0x128] sm:$0xff]
        %v460 = vld [vmem:[%s421 + $0x130] sm:$0xff]
        %v461 = vld [vmem:[%s421 + $0x138] sm:$0xff]
        %v462 = vld [vmem:[%s421 + $0x140] sm:$0xff]
        %v463 = vld [vmem:[%s421 + $0x148] sm:$0xff]
        %v464 = vld [vmem:[%s421 + $0x150] sm:$0xff]
        %v465 = vld [vmem:[%s421 + $0x158] sm:$0xff]
        %v466 = vld [vmem:[%s421 + $0x160] sm:$0xff]
        %v467 = vld [vmem:[%s421 + $0x168] sm:$0xff]
        %v468 = vld [vmem:[%s421 + $0x170] sm:$0xff]
        %v469 = vld [vmem:[%s421 + $0x178] sm:$0xff]
        %v470 = vpack.c.bf16 %v423, %v422
        %v471 = vpack.c.bf16 %v425, %v424
        %v472 = vpack.c.bf16 %v427, %v426
        %v473 = vpack.c.bf16 %v429, %v428
        %v474 = vpack.c.bf16 %v431, %v430
        %v475 = vpack.c.bf16 %v433, %v432
        %v476 = vpack.c.bf16 %v435, %v434
        %v477 = vpack.c.bf16 %v437, %v436
        %v478 = vpack.c.bf16 %v439, %v438
        %v479 = vpack.c.bf16 %v441, %v440
        %v480 = vpack.c.bf16 %v443, %v442
        %v481 = vpack.c.bf16 %v445, %v444
        %v482 = vpack.c.bf16 %v447, %v446
        %v483 = vpack.c.bf16 %v449, %v448
        %v484 = vpack.c.bf16 %v451, %v450
        %v485 = vpack.c.bf16 %v453, %v452
        %v486 = vpack.c.bf16 %v455, %v454
        %v487 = vpack.c.bf16 %v457, %v456
        %v488 = vpack.c.bf16 %v459, %v458
        %v489 = vpack.c.bf16 %v461, %v460
        %v490 = vpack.c.bf16 %v463, %v462
        %v491 = vpack.c.bf16 %v465, %v464
        %v492 = vpack.c.bf16 %v467, %v466
        %v493 = vpack.c.bf16 %v469, %v468
        %v494 = vld [vmem:[#allocation6] sm:$0xf]
        %v495 = vld [vmem:[#allocation6 + $0x4] sm:$0xf]
        %v496 = vld [vmem:[#allocation6 + $0x8] sm:$0xf]
        %v497 = vld [vmem:[#allocation6 + $0xc] sm:$0xf]
        %v498 = vld [vmem:[#allocation6 + $0x10] sm:$0xf]
        %v499 = vld [vmem:[#allocation6 + $0x14] sm:$0xf]
        %v500 = vld [vmem:[#allocation6 + $0x18] sm:$0xf]
        %v501 = vld [vmem:[#allocation6 + $0x1c] sm:$0xf]
        %v502 = vld [vmem:[#allocation6 + $0x20] sm:$0xf]
        %v503 = vld [vmem:[#allocation6 + $0x24] sm:$0xf]
        %v504 = vld [vmem:[#allocation6 + $0x28] sm:$0xf]
        %v505 = vld [vmem:[#allocation6 + $0x2c] sm:$0xf]
        %v506 = vld [vmem:[#allocation6 + $0x30] sm:$0xf]
        %v507 = vld [vmem:[#allocation6 + $0x34] sm:$0xf]
        %v508 = vld [vmem:[#allocation6 + $0x38] sm:$0xf]
        %v509 = vld [vmem:[#allocation6 + $0x3c] sm:$0xf]
        %v510 = vld [vmem:[#allocation8] sm:$0x1]
        %v512 = vlaneseq
        %v513 = vshrl.u32 %v512, 7
        %v514 = vsub.s32 0, %v513
        %v515 = vrot.slane %v510, %v514
        %v533 = vunpack.c.l.b16 %v494
        %v534 = vunpack.c.l.b16 %v495
        %v535 = vunpack.c.l.b16 %v496
        %v536 = vunpack.c.l.b16 %v497
        %v537 = vunpack.c.l.b16 %v498
        %v538 = vunpack.c.l.b16 %v499
        %v539 = vunpack.c.l.b16 %v500
        %v540 = vunpack.c.l.b16 %v501
        %v541 = vunpack.c.l.b16 %v502
        %v542 = vunpack.c.l.b16 %v503
        %v543 = vunpack.c.l.b16 %v504
        %v544 = vunpack.c.l.b16 %v505
        %v545 = vunpack.c.l.b16 %v506
        %v546 = vunpack.c.l.b16 %v507
        %v547 = vunpack.c.l.b16 %v508
        %v548 = vunpack.c.l.b16 %v509
        %v549 = vpack.c.b16 %v534, %v533
        %v550 = vpack.c.b16 %v536, %v535
        %v551 = vpack.c.b16 %v538, %v537
        %v552 = vpack.c.b16 %v540, %v539
        %v553 = vpack.c.b16 %v542, %v541
        %v554 = vpack.c.b16 %v544, %v543
        %v555 = vpack.c.b16 %v546, %v545
        %v556 = vpack.c.b16 %v548, %v547
        %565 = vmatprep.subr.bf16.mxu0 0
        %566 = vmatpush1.bf16.msra.mxu0 %v549
        %567 = vmatprep.subr.bf16.mxu0 0
        %568 = vmatpush1.bf16.msra.mxu0 %v550
        %569 = vmatprep.subr.bf16.mxu0 0
        %570 = vmatpush1.bf16.msra.mxu0 %v551
        %571 = vmatprep.subr.bf16.mxu0 0
        %572 = vmatpush1.bf16.msra.mxu0 %v552
        %573 = vmatprep.subr.bf16.mxu0 0
        %574 = vmatpush1.bf16.msra.mxu0 %v553
        %575 = vmatprep.subr.bf16.mxu0 0
        %576 = vmatpush1.bf16.msra.mxu0 %v554
        %577 = vmatprep.subr.bf16.mxu0 0
        %578 = vmatpush1.bf16.msra.mxu0 %v555
        %579 = vmatprep.subr.bf16.mxu0 0
        %580 = vmatpush1.bf16.msra.mxu0 %v556
        %581 = vmatprep.subr.bf16.mxu0 0
        %582 = vmatpush1.bf16.msra.mxu0 0
        %583 = vmatprep.subr.bf16.mxu0 0
        %584 = vmatpush1.bf16.msra.mxu0 0
        %585 = vmatprep.subr.bf16.mxu0 0
        %586 = vmatpush1.bf16.msra.mxu0 0
        %587 = vmatprep.subr.bf16.mxu0 0
        %588 = vmatpush1.bf16.msra.mxu0 0
        %589 = vmatprep.subr.bf16.mxu0 0
        %590 = vmatpush1.bf16.msra.mxu0 0
        %591 = vmatprep.subr.bf16.mxu0 0
        %592 = vmatpush1.bf16.msra.mxu0 0
        %593 = vmatprep.subr.bf16.mxu0 0
        %594 = vmatpush1.bf16.msra.mxu0 0
        %595 = vmatprep.subr.bf16.mxu0 0
        %596 = vmatpush1.bf16.msra.mxu0 0
        %597 = vmatprep.mubr.bf16.mxu0 0
        %598 = vmatmul.mubr.bf16.gmra.mrb[0].mxu0 %v470
        %v599 = vpop.f32.mrb[0].mxu0
        %v600 = vadd.f32 %v515, %v599
        %v601 = vpop.f32.mrb[0].mxu0
        %v602 = vpop.f32.mrb[0].mxu0
        %v603 = vadd.f32 %v515, %v602
        %v604 = vpop.f32.mrb[0].mxu0
        %605 = vmatprep.mubr.bf16.mxu0 0
        %606 = vmatmul.mubr.bf16.gmra.mrb[0].mxu0 %v471
        %v607 = vpop.f32.mrb[0].mxu0
        %v608 = vadd.f32 %v515, %v607
        %v609 = vpop.f32.mrb[0].mxu0
        %v610 = vpop.f32.mrb[0].mxu0
        %v611 = vadd.f32 %v515, %v610
        %v612 = vpop.f32.mrb[0].mxu0
        %613 = vmatprep.mubr.bf16.mxu0 0
        %614 = vmatmul.mubr.bf16.gmra.mrb[0].mxu0 %v472
        %v615 = vpop.f32.mrb[0].mxu0
        %v616 = vadd.f32 %v515, %v615
        %v617 = vpop.f32.mrb[0].mxu0
        %v618 = vpop.f32.mrb[0].mxu0
        %v619 = vadd.f32 %v515, %v618
        %v620 = vpop.f32.mrb[0].mxu0
        %621 = vmatprep.mubr.bf16.mxu0 0
        %622 = vmatmul.mubr.bf16.gmra.mrb[0].mxu0 %v473
        %v623 = vpop.f32.mrb[0].mxu0
        %v624 = vadd.f32 %v515, %v623
        %v625 = vpop.f32.mrb[0].mxu0
        %v626 = vpop.f32.mrb[0].mxu0
        %v627 = vadd.f32 %v515, %v626
        %v628 = vpop.f32.mrb[0].mxu0
        %629 = vmatprep.mubr.bf16.mxu0 0
        %630 = vmatmul.mubr.bf16.gmra.mrb[0].mxu0 %v474
        %v631 = vpop.f32.mrb[0].mxu0
        %v632 = vadd.f32 %v515, %v631
        %v633 = vpop.f32.mrb[0].mxu0
        %v634 = vpop.f32.mrb[0].mxu0
        %v635 = vadd.f32 %v515, %v634
        %v636 = vpop.f32.mrb[0].mxu0
        %637 = vmatprep.mubr.bf16.mxu0 0
        %638 = vmatmul.mubr.bf16.gmra.mrb[0].mxu0 %v475
        %v639 = vpop.f32.mrb[0].mxu0
        %v640 = vadd.f32 %v515, %v639
        %v641 = vpop.f32.mrb[0].mxu0
        %v642 = vpop.f32.mrb[0].mxu0
        %v643 = vadd.f32 %v515, %v642
        %v644 = vpop.f32.mrb[0].mxu0
        %645 = vmatprep.mubr.bf16.mxu0 0
        %646 = vmatmul.mubr.bf16.gmra.mrb[0].mxu0 %v476
        %v647 = vpop.f32.mrb[0].mxu0
        %v648 = vadd.f32 %v515, %v647
        %v649 = vpop.f32.mrb[0].mxu0
        %v650 = vpop.f32.mrb[0].mxu0
        %v651 = vadd.f32 %v515, %v650
        %v652 = vpop.f32.mrb[0].mxu0
        %653 = vmatprep.mubr.bf16.mxu0 0
        %654 = vmatmul.mubr.bf16.gmra.mrb[0].mxu0 %v477
        %v655 = vpop.f32.mrb[0].mxu0
        %v656 = vadd.f32 %v515, %v655
        %v657 = vpop.f32.mrb[0].mxu0
        %v658 = vpop.f32.mrb[0].mxu0
        %v659 = vadd.f32 %v515, %v658
        %v660 = vpop.f32.mrb[0].mxu0
        %661 = vmatprep.mubr.bf16.mxu0 0
        %662 = vmatmul.mubr.bf16.gmra.mrb[0].mxu0 %v478
        %v663 = vpop.f32.mrb[0].mxu0
        %v664 = vadd.f32 %v515, %v663
        %v665 = vpop.f32.mrb[0].mxu0
        %v666 = vpop.f32.mrb[0].mxu0
        %v667 = vadd.f32 %v515, %v666
        %v668 = vpop.f32.mrb[0].mxu0
        %669 = vmatprep.mubr.bf16.mxu0 0
        %670 = vmatmul.mubr.bf16.gmra.mrb[0].mxu0 %v479
        %v671 = vpop.f32.mrb[0].mxu0
        %v672 = vadd.f32 %v515, %v671
        %v673 = vpop.f32.mrb[0].mxu0
        %v674 = vpop.f32.mrb[0].mxu0
        %v675 = vadd.f32 %v515, %v674
        %v676 = vpop.f32.mrb[0].mxu0
        %677 = vmatprep.mubr.bf16.mxu0 0
        %678 = vmatmul.mubr.bf16.gmra.mrb[0].mxu0 %v480
        %v679 = vpop.f32.mrb[0].mxu0
        %v680 = vadd.f32 %v515, %v679
        %v681 = vpop.f32.mrb[0].mxu0
        %v682 = vpop.f32.mrb[0].mxu0
        %v683 = vadd.f32 %v515, %v682
        %v684 = vpop.f32.mrb[0].mxu0
        %685 = vmatprep.mubr.bf16.mxu0 0
        %686 = vmatmul.mubr.bf16.gmra.mrb[0].mxu0 %v481
        %v687 = vpop.f32.mrb[0].mxu0
        %v688 = vadd.f32 %v515, %v687
        %v689 = vpop.f32.mrb[0].mxu0
        %v690 = vpop.f32.mrb[0].mxu0
        %v691 = vadd.f32 %v515, %v690
        %v692 = vpop.f32.mrb[0].mxu0
        %693 = vmatprep.mubr.bf16.mxu0 0
        %694 = vmatmul.mubr.bf16.gmra.mrb[0].mxu0 %v482
        %v695 = vpop.f32.mrb[0].mxu0
        %v696 = vadd.f32 %v515, %v695
        %v697 = vpop.f32.mrb[0].mxu0
        %v698 = vpop.f32.mrb[0].mxu0
        %v699 = vadd.f32 %v515, %v698
        %v700 = vpop.f32.mrb[0].mxu0
        %701 = vmatprep.mubr.bf16.mxu0 0
        %702 = vmatmul.mubr.bf16.gmra.mrb[0].mxu0 %v483
        %v703 = vpop.f32.mrb[0].mxu0
        %v704 = vadd.f32 %v515, %v703
        %v705 = vpop.f32.mrb[0].mxu0
        %v706 = vpop.f32.mrb[0].mxu0
        %v707 = vadd.f32 %v515, %v706
        %v708 = vpop.f32.mrb[0].mxu0
        %709 = vmatprep.mubr.bf16.mxu0 0
        %710 = vmatmul.mubr.bf16.gmra.mrb[0].mxu0 %v484
        %v711 = vpop.f32.mrb[0].mxu0
        %v712 = vadd.f32 %v515, %v711
        %v713 = vpop.f32.mrb[0].mxu0
        %v714 = vpop.f32.mrb[0].mxu0
        %v715 = vadd.f32 %v515, %v714
        %v716 = vpop.f32.mrb[0].mxu0
        %717 = vmatprep.mubr.bf16.mxu0 0
        %718 = vmatmul.mubr.bf16.gmra.mrb[0].mxu0 %v485
        %v719 = vpop.f32.mrb[0].mxu0
        %v720 = vadd.f32 %v515, %v719
        %v721 = vpop.f32.mrb[0].mxu0
        %v722 = vpop.f32.mrb[0].mxu0
        %v723 = vadd.f32 %v515, %v722
        %v724 = vpop.f32.mrb[0].mxu0
        %725 = vmatprep.mubr.bf16.mxu0 0
        %726 = vmatmul.mubr.bf16.gmra.mrb[0].mxu0 %v486
        %v727 = vpop.f32.mrb[0].mxu0
        %v728 = vadd.f32 %v515, %v727
        %v729 = vpop.f32.mrb[0].mxu0
        %v730 = vpop.f32.mrb[0].mxu0
        %v731 = vadd.f32 %v515, %v730
        %v732 = vpop.f32.mrb[0].mxu0
        %733 = vmatprep.mubr.bf16.mxu0 0
        %734 = vmatmul.mubr.bf16.gmra.mrb[0].mxu0 %v487
        %v735 = vpop.f32.mrb[0].mxu0
        %v736 = vadd.f32 %v515, %v735
        %v737 = vpop.f32.mrb[0].mxu0
        %v738 = vpop.f32.mrb[0].mxu0
        %v739 = vadd.f32 %v515, %v738
        %v740 = vpop.f32.mrb[0].mxu0
        %741 = vmatprep.mubr.bf16.mxu0 0
        %742 = vmatmul.mubr.bf16.gmra.mrb[0].mxu0 %v488
        %v743 = vpop.f32.mrb[0].mxu0
        %v744 = vadd.f32 %v515, %v743
        %v745 = vpop.f32.mrb[0].mxu0
        %v746 = vpop.f32.mrb[0].mxu0
        %v747 = vadd.f32 %v515, %v746
        %v748 = vpop.f32.mrb[0].mxu0
        %749 = vmatprep.mubr.bf16.mxu0 0
        %750 = vmatmul.mubr.bf16.gmra.mrb[0].mxu0 %v489
        %v751 = vpop.f32.mrb[0].mxu0
        %v752 = vadd.f32 %v515, %v751
        %v753 = vpop.f32.mrb[0].mxu0
        %v754 = vpop.f32.mrb[0].mxu0
        %v755 = vadd.f32 %v515, %v754
        %v756 = vpop.f32.mrb[0].mxu0
        %757 = vmatprep.mubr.bf16.mxu0 0
        %758 = vmatmul.mubr.bf16.gmra.mrb[0].mxu0 %v490
        %v759 = vpop.f32.mrb[0].mxu0
        %v760 = vadd.f32 %v515, %v759
        %v761 = vpop.f32.mrb[0].mxu0
        %v762 = vpop.f32.mrb[0].mxu0
        %v763 = vadd.f32 %v515, %v762
        %v764 = vpop.f32.mrb[0].mxu0
        %765 = vmatprep.mubr.bf16.mxu0 0
        %766 = vmatmul.mubr.bf16.gmra.mrb[0].mxu0 %v491
        %v767 = vpop.f32.mrb[0].mxu0
        %v768 = vadd.f32 %v515, %v767
        %v769 = vpop.f32.mrb[0].mxu0
        %v770 = vpop.f32.mrb[0].mxu0
        %v771 = vadd.f32 %v515, %v770
        %v772 = vpop.f32.mrb[0].mxu0
        %773 = vmatprep.mubr.bf16.mxu0 0
        %774 = vmatmul.mubr.bf16.gmra.mrb[0].mxu0 %v492
        %v775 = vpop.f32.mrb[0].mxu0
        %v776 = vadd.f32 %v515, %v775
        %v777 = vpop.f32.mrb[0].mxu0
        %v778 = vpop.f32.mrb[0].mxu0
        %v779 = vadd.f32 %v515, %v778
        %v780 = vpop.f32.mrb[0].mxu0
        %781 = vmatprep.mubr.bf16.mxu0 0
        %782 = vmatmul.mubr.bf16.gmra.mrb[0].mxu0 %v493
        %v783 = vpop.f32.mrb[0].mxu0
        %v784 = vadd.f32 %v515, %v783
        %v785 = vpop.f32.mrb[0].mxu0
        %v786 = vpop.f32.mrb[0].mxu0
        %v787 = vadd.f32 %v515, %v786
        %v788 = vpop.f32.mrb[0].mxu0
        %789 = vdwg.mxu0
        %v790 = vmax.f32 %v600, 0.0
        %v791 = vmax.f32 %v603, 0.0
        %v792 = vmax.f32 %v608, 0.0
        %v793 = vmax.f32 %v611, 0.0
        %v794 = vmax.f32 %v616, 0.0
        %v795 = vmax.f32 %v619, 0.0
        %v796 = vmax.f32 %v624, 0.0
        %v797 = vmax.f32 %v627, 0.0
        %v798 = vmax.f32 %v632, 0.0
        %v799 = vmax.f32 %v635, 0.0
        %v800 = vmax.f32 %v640, 0.0
        %v801 = vmax.f32 %v643, 0.0
        %v802 = vmax.f32 %v648, 0.0
        %v803 = vmax.f32 %v651, 0.0
        %v804 = vmax.f32 %v656, 0.0
        %v805 = vmax.f32 %v659, 0.0
        %v806 = vmax.f32 %v664, 0.0
        %v807 = vmax.f32 %v667, 0.0
        %v808 = vmax.f32 %v672, 0.0
        %v809 = vmax.f32 %v675, 0.0
        %v810 = vmax.f32 %v680, 0.0
        %v811 = vmax.f32 %v683, 0.0
        %v812 = vmax.f32 %v688, 0.0
        %v813 = vmax.f32 %v691, 0.0
        %v814 = vmax.f32 %v696, 0.0
        %v815 = vmax.f32 %v699, 0.0
        %v816 = vmax.f32 %v704, 0.0
        %v817 = vmax.f32 %v707, 0.0
        %v818 = vmax.f32 %v712, 0.0
        %v819 = vmax.f32 %v715, 0.0
        %v820 = vmax.f32 %v720, 0.0
        %v821 = vmax.f32 %v723, 0.0
        %v822 = vmax.f32 %v728, 0.0
        %v823 = vmax.f32 %v731, 0.0
        %v824 = vmax.f32 %v736, 0.0
        %v825 = vmax.f32 %v739, 0.0
        %v826 = vmax.f32 %v744, 0.0
        %v827 = vmax.f32 %v747, 0.0
        %v828 = vmax.f32 %v752, 0.0
        %v829 = vmax.f32 %v755, 0.0
        %v830 = vmax.f32 %v760, 0.0
        %v831 = vmax.f32 %v763, 0.0
        %v832 = vmax.f32 %v768, 0.0
        %v833 = vmax.f32 %v771, 0.0
        %v834 = vmax.f32 %v776, 0.0
        %v835 = vmax.f32 %v779, 0.0
        %v836 = vmax.f32 %v784, 0.0
        %v837 = vmax.f32 %v787, 0.0
        %v838 = vlaneseq
        %v839 = vshrl.u32 %v838, 7
        %v840 = vadd.s32 %v839, 8
        %v841 = vadd.s32 %v839, 16
        %vm842 = vcmp.ge.s32.totalorder %v839, 1
        %vm843 = vcmp.ge.s32.totalorder %v840, 1
        %vm844 = vcmp.ge.s32.totalorder %v841, 1
        %vm845 = vcmp.le.s32.totalorder %v839, 16
        %vm846 = vcmp.le.s32.totalorder %v840, 16
        %vm847 = vcmp.le.s32.totalorder %v841, 16
        %vm848 = vmand %vm842, %vm845
        %vm849 = vmand %vm843, %vm846
        %vm850 = vmand %vm844, %vm847
        %v851 = vsel %vm848, 1, 0
        %v852 = vsel %vm849, 1, 0
        %v853 = vsel %vm850, 1, 0
        %vm854 = vcmp.eq.s32.totalorder %v851, 1
        %vm855 = vcmp.eq.s32.totalorder %v852, 1
        %vm856 = vcmp.eq.s32.totalorder %v853, 1
        %v857 = vsel %vm854, %v790, 0.0
        %v858 = vsel %vm855, %v791, 0.0
        %v859 = vsel %vm856, %v792, 0.0
        %v860 = vsel %vm854, %v793, 0.0
        %v861 = vsel %vm855, %v794, 0.0
        %v862 = vsel %vm856, %v795, 0.0
        %v863 = vsel %vm854, %v796, 0.0
        %v864 = vsel %vm855, %v797, 0.0
        %v865 = vsel %vm856, %v798, 0.0
        %v866 = vsel %vm854, %v799, 0.0
        %v867 = vsel %vm855, %v800, 0.0
        %v868 = vsel %vm856, %v801, 0.0
        %v869 = vsel %vm854, %v802, 0.0
        %v870 = vsel %vm855, %v803, 0.0
        %v871 = vsel %vm856, %v804, 0.0
        %v872 = vsel %vm854, %v805, 0.0
        %v873 = vsel %vm855, %v806, 0.0
        %v874 = vsel %vm856, %v807, 0.0
        %v875 = vsel %vm854, %v808, 0.0
        %v876 = vsel %vm855, %v809, 0.0
        %v877 = vsel %vm856, %v810, 0.0
        %v878 = vsel %vm854, %v811, 0.0
        %v879 = vsel %vm855, %v812, 0.0
        %v880 = vsel %vm856, %v813, 0.0
        %v881 = vsel %vm854, %v814, 0.0
        %v882 = vsel %vm855, %v815, 0.0
        %v883 = vsel %vm856, %v816, 0.0
        %v884 = vsel %vm854, %v817, 0.0
        %v885 = vsel %vm855, %v818, 0.0
        %v886 = vsel %vm856, %v819, 0.0
        %v887 = vsel %vm854, %v820, 0.0
        %v888 = vsel %vm855, %v821, 0.0
        %v889 = vsel %vm856, %v822, 0.0
        %v890 = vsel %vm854, %v823, 0.0
        %v891 = vsel %vm855, %v824, 0.0
        %v892 = vsel %vm856, %v825, 0.0
        %v893 = vsel %vm854, %v826, 0.0
        %v894 = vsel %vm855, %v827, 0.0
        %v895 = vsel %vm856, %v828, 0.0
        %v896 = vsel %vm854, %v829, 0.0
        %v897 = vsel %vm855, %v830, 0.0
        %v898 = vsel %vm856, %v831, 0.0
        %v899 = vsel %vm854, %v832, 0.0
        %v900 = vsel %vm855, %v833, 0.0
        %v901 = vsel %vm856, %v834, 0.0
        %v902 = vsel %vm854, %v835, 0.0
        %v903 = vsel %vm855, %v836, 0.0
        %v904 = vsel %vm856, %v837, 0.0
        %905 = vst [vmem:[#allocation2] sm:$0xff] 0.0
        %906 = vst [vmem:[#allocation2 + $0x8] sm:$0xff] 0.0
        %907 = vst [vmem:[#allocation2 + $0x10] sm:$0xff] 0.0
        %s908 = scalar_lea.vmem [#allocation2], 408
        %909 = vst [vmem:[%s908] sm:$0xff] 0.0
        %910 = vst [vmem:[%s908 + $0x8] sm:$0xff] 0.0
        %911 = vst [vmem:[%s908 + $0x10] sm:$0xff] 0.0
        %s912 = scalar_lea.vmem [#allocation2], 24
        %913 = vst [vmem:[%s912] sm:$0xff] %v857
        %914 = vst [vmem:[%s912 + $0x8] sm:$0xff] %v858
        %915 = vst [vmem:[%s912 + $0x10] sm:$0xff] %v859
        %916 = vst [vmem:[%s912 + $0x18] sm:$0xff] %v860
        %917 = vst [vmem:[%s912 + $0x20] sm:$0xff] %v861
        %918 = vst [vmem:[%s912 + $0x28] sm:$0xff] %v862
        %919 = vst [vmem:[%s912 + $0x30] sm:$0xff] %v863
        %920 = vst [vmem:[%s912 + $0x38] sm:$0xff] %v864
        %921 = vst [vmem:[%s912 + $0x40] sm:$0xff] %v865
        %922 = vst [vmem:[%s912 + $0x48] sm:$0xff] %v866
        %923 = vst [vmem:[%s912 + $0x50] sm:$0xff] %v867
        %924 = vst [vmem:[%s912 + $0x58] sm:$0xff] %v868
        %925 = vst [vmem:[%s912 + $0x60] sm:$0xff] %v869
        %926 = vst [vmem:[%s912 + $0x68] sm:$0xff] %v870
        %927 = vst [vmem:[%s912 + $0x70] sm:$0xff] %v871
        %928 = vst [vmem:[%s912 + $0x78] sm:$0xff] %v872
        %929 = vst [vmem:[%s912 + $0x80] sm:$0xff] %v873
        %930 = vst [vmem:[%s912 + $0x88] sm:$0xff] %v874
        %931 = vst [vmem:[%s912 + $0x90] sm:$0xff] %v875
        %932 = vst [vmem:[%s912 + $0x98] sm:$0xff] %v876
        %933 = vst [vmem:[%s912 + $0xa0] sm:$0xff] %v877
        %934 = vst [vmem:[%s912 + $0xa8] sm:$0xff] %v878
        %935 = vst [vmem:[%s912 + $0xb0] sm:$0xff] %v879
        %936 = vst [vmem:[%s912 + $0xb8] sm:$0xff] %v880
        %937 = vst [vmem:[%s912 + $0xc0] sm:$0xff] %v881
        %938 = vst [vmem:[%s912 + $0xc8] sm:$0xff] %v882
        %939 = vst [vmem:[%s912 + $0xd0] sm:$0xff] %v883
        %940 = vst [vmem:[%s912 + $0xd8] sm:$0xff] %v884
        %941 = vst [vmem:[%s912 + $0xe0] sm:$0xff] %v885
        %942 = vst [vmem:[%s912 + $0xe8] sm:$0xff] %v886
        %943 = vst [vmem:[%s912 + $0xf0] sm:$0xff] %v887
        %944 = vst [vmem:[%s912 + $0xf8] sm:$0xff] %v888
        %945 = vst [vmem:[%s912 + $0x100] sm:$0xff] %v889
        %946 = vst [vmem:[%s912 + $0x108] sm:$0xff] %v890
        %947 = vst [vmem:[%s912 + $0x110] sm:$0xff] %v891
        %948 = vst [vmem:[%s912 + $0x118] sm:$0xff] %v892
        %949 = vst [vmem:[%s912 + $0x120] sm:$0xff] %v893
        %950 = vst [vmem:[%s912 + $0x128] sm:$0xff] %v894
        %951 = vst [vmem:[%s912 + $0x130] sm:$0xff] %v895
        %952 = vst [vmem:[%s912 + $0x138] sm:$0xff] %v896
        %953 = vst [vmem:[%s912 + $0x140] sm:$0xff] %v897
        %954 = vst [vmem:[%s912 + $0x148] sm:$0xff] %v898
        %955 = vst [vmem:[%s912 + $0x150] sm:$0xff] %v899
        %956 = vst [vmem:[%s912 + $0x158] sm:$0xff] %v900
        %957 = vst [vmem:[%s912 + $0x160] sm:$0xff] %v901
        %958 = vst [vmem:[%s912 + $0x168] sm:$0xff] %v902
        %959 = vst [vmem:[%s912 + $0x170] sm:$0xff] %v903
        %960 = vst [vmem:[%s912 + $0x178] sm:$0xff] %v904
        %v961 = vld [vmem:[#allocation2] sm:$0xff]
        %v962 = vld [vmem:[#allocation2 + $0x8] sm:$0xff]
        %v963 = vld [vmem:[#allocation2 + $0x18] sm:$0xff]
        %v964 = vld [vmem:[#allocation2 + $0x20] sm:$0xff]
        %v965 = vld [vmem:[#allocation2 + $0x30] sm:$0xff]
        %v966 = vld [vmem:[#allocation2 + $0x38] sm:$0xff]
        %v967 = vld [vmem:[#allocation2 + $0x48] sm:$0xff]
        %v968 = vld [vmem:[#allocation2 + $0x50] sm:$0xff]
        %v969 = vld [vmem:[#allocation2 + $0x60] sm:$0xff]
        %v970 = vld [vmem:[#allocation2 + $0x68] sm:$0xff]
        %v971 = vld [vmem:[#allocation2 + $0x78] sm:$0xff]
        %v972 = vld [vmem:[#allocation2 + $0x80] sm:$0xff]
        %v973 = vld [vmem:[#allocation2 + $0x90] sm:$0xff]
        %v974 = vld [vmem:[#allocation2 + $0x98] sm:$0xff]
        %v975 = vld [vmem:[#allocation2 + $0xa8] sm:$0xff]
        %v976 = vld [vmem:[#allocation2 + $0xb0] sm:$0xff]
        %v977 = vld [vmem:[#allocation2 + $0xc0] sm:$0xff]
        %v978 = vld [vmem:[#allocation2 + $0xc8] sm:$0xff]
        %v979 = vld [vmem:[#allocation2 + $0xd8] sm:$0xff]
        %v980 = vld [vmem:[#allocation2 + $0xe0] sm:$0xff]
        %v981 = vld [vmem:[#allocation2 + $0xf0] sm:$0xff]
        %v982 = vld [vmem:[#allocation2 + $0xf8] sm:$0xff]
        %v983 = vld [vmem:[#allocation2 + $0x108] sm:$0xff]
        %v984 = vld [vmem:[#allocation2 + $0x110] sm:$0xff]
        %v985 = vld [vmem:[#allocation2 + $0x120] sm:$0xff]
        %v986 = vld [vmem:[#allocation2 + $0x128] sm:$0xff]
        %v987 = vld [vmem:[#allocation2 + $0x138] sm:$0xff]
        %v988 = vld [vmem:[#allocation2 + $0x140] sm:$0xff]
        %v989 = vld [vmem:[#allocation2 + $0x150] sm:$0xff]
        %v990 = vld [vmem:[#allocation2 + $0x158] sm:$0xff]
        %v991 = vld [vmem:[#allocation2 + $0x168] sm:$0xff]
        %v992 = vld [vmem:[#allocation2 + $0x170] sm:$0xff]
        %v993 = vpack.c.bf16 %v962, %v961
        %v994 = vpack.c.bf16 %v964, %v963
        %v995 = vpack.c.bf16 %v966, %v965
        %v996 = vpack.c.bf16 %v968, %v967
        %v997 = vpack.c.bf16 %v970, %v969
        %v998 = vpack.c.bf16 %v972, %v971
        %v999 = vpack.c.bf16 %v974, %v973
        %v1000 = vpack.c.bf16 %v976, %v975
        %v1001 = vpack.c.bf16 %v978, %v977
        %v1002 = vpack.c.bf16 %v980, %v979
        %v1003 = vpack.c.bf16 %v982, %v981
        %v1004 = vpack.c.bf16 %v984, %v983
        %v1005 = vpack.c.bf16 %v986, %v985
        %v1006 = vpack.c.bf16 %v988, %v987
        %v1007 = vpack.c.bf16 %v990, %v989
        %v1008 = vpack.c.bf16 %v992, %v991
        %v1009 = vld [vmem:[#allocation9] sm:$0xf]
        %v1010 = vld [vmem:[#allocation9 + $0x4] sm:$0xf]
        %v1011 = vld [vmem:[#allocation9 + $0x8] sm:$0xf]
        %v1012 = vld [vmem:[#allocation9 + $0xc] sm:$0xf]
        %v1013 = vld [vmem:[#allocation9 + $0x10] sm:$0xf]
        %v1014 = vld [vmem:[#allocation9 + $0x14] sm:$0xf]
        %v1015 = vld [vmem:[#allocation9 + $0x18] sm:$0xf]
        %v1016 = vld [vmem:[#allocation9 + $0x1c] sm:$0xf]
        %v1017 = vld [vmem:[#allocation9 + $0x20] sm:$0xf]
        %v1018 = vld [vmem:[#allocation9 + $0x24] sm:$0xf]
        %v1019 = vld [vmem:[#allocation9 + $0x28] sm:$0xf]
        %v1020 = vld [vmem:[#allocation9 + $0x2c] sm:$0xf]
        %v1021 = vld [vmem:[#allocation9 + $0x30] sm:$0xf]
        %v1022 = vld [vmem:[#allocation9 + $0x34] sm:$0xf]
        %v1023 = vld [vmem:[#allocation9 + $0x38] sm:$0xf]
        %v1024 = vld [vmem:[#allocation9 + $0x3c] sm:$0xf]
        %v1025 = vld [vmem:[#allocation2 + $0x1] sm:$0xff]
        %v1026 = vld [vmem:[#allocation2 + $0x9] sm:$0xff]
        %v1027 = vld [vmem:[#allocation2 + $0x19] sm:$0xff]
        %v1028 = vld [vmem:[#allocation2 + $0x21] sm:$0xff]
        %v1029 = vld [vmem:[#allocation2 + $0x31] sm:$0xff]
        %v1030 = vld [vmem:[#allocation2 + $0x39] sm:$0xff]
        %v1031 = vld [vmem:[#allocation2 + $0x49] sm:$0xff]
        %v1032 = vld [vmem:[#allocation2 + $0x51] sm:$0xff]
        %v1033 = vld [vmem:[#allocation2 + $0x61] sm:$0xff]
        %v1034 = vld [vmem:[#allocation2 + $0x69] sm:$0xff]
        %v1035 = vld [vmem:[#allocation2 + $0x79] sm:$0xff]
        %v1036 = vld [vmem:[#allocation2 + $0x81] sm:$0xff]
        %v1037 = vld [vmem:[#allocation2 + $0x91] sm:$0xff]
        %v1038 = vld [vmem:[#allocation2 + $0x99] sm:$0xff]
        %v1039 = vld [vmem:[#allocation2 + $0xa9] sm:$0xff]
        %v1040 = vld [vmem:[#allocation2 + $0xb1] sm:$0xff]
        %v1041 = vld [vmem:[#allocation2 + $0xc1] sm:$0xff]
        %v1042 = vld [vmem:[#allocation2 + $0xc9] sm:$0xff]
        %v1043 = vld [vmem:[#allocation2 + $0xd9] sm:$0xff]
        %v1044 = vld [vmem:[#allocation2 + $0xe1] sm:$0xff]
        %v1045 = vld [vmem:[#allocation2 + $0xf1] sm:$0xff]
        %v1046 = vld [vmem:[#allocation2 + $0xf9] sm:$0xff]
        %v1047 = vld [vmem:[#allocation2 + $0x109] sm:$0xff]
        %v1048 = vld [vmem:[#allocation2 + $0x111] sm:$0xff]
        %v1049 = vld [vmem:[#allocation2 + $0x121] sm:$0xff]
        %v1050 = vld [vmem:[#allocation2 + $0x129] sm:$0xff]
        %v1051 = vld [vmem:[#allocation2 + $0x139] sm:$0xff]
        %v1052 = vld [vmem:[#allocation2 + $0x141] sm:$0xff]
        %v1053 = vld [vmem:[#allocation2 + $0x151] sm:$0xff]
        %v1054 = vld [vmem:[#allocation2 + $0x159] sm:$0xff]
        %v1055 = vld [vmem:[#allocation2 + $0x169] sm:$0xff]
        %v1056 = vld [vmem:[#allocation2 + $0x171] sm:$0xff]
        %v1057 = vpack.c.bf16 %v1026, %v1025
        %v1058 = vpack.c.bf16 %v1028, %v1027
        %v1059 = vpack.c.bf16 %v1030, %v1029
        %v1060 = vpack.c.bf16 %v1032, %v1031
        %v1061 = vpack.c.bf16 %v1034, %v1033
        %v1062 = vpack.c.bf16 %v1036, %v1035
        %v1063 = vpack.c.bf16 %v1038, %v1037
        %v1064 = vpack.c.bf16 %v1040, %v1039
        %v1065 = vpack.c.bf16 %v1042, %v1041
        %v1066 = vpack.c.bf16 %v1044, %v1043
        %v1067 = vpack.c.bf16 %v1046, %v1045
        %v1068 = vpack.c.bf16 %v1048, %v1047
        %v1069 = vpack.c.bf16 %v1050, %v1049
        %v1070 = vpack.c.bf16 %v1052, %v1051
        %v1071 = vpack.c.bf16 %v1054, %v1053
        %v1072 = vpack.c.bf16 %v1056, %v1055
        %s1073 = scalar_lea.vmem [#allocation9], 64
        %v1074 = vld [vmem:[%s1073] sm:$0xf]
        %v1075 = vld [vmem:[%s1073 + $0x4] sm:$0xf]
        %v1076 = vld [vmem:[%s1073 + $0x8] sm:$0xf]
        %v1077 = vld [vmem:[%s1073 + $0xc] sm:$0xf]
        %v1078 = vld [vmem:[%s1073 + $0x10] sm:$0xf]
        %v1079 = vld [vmem:[%s1073 + $0x14] sm:$0xf]
        %v1080 = vld [vmem:[%s1073 + $0x18] sm:$0xf]
        %v1081 = vld [vmem:[%s1073 + $0x1c] sm:$0xf]
        %v1082 = vld [vmem:[%s1073 + $0x20] sm:$0xf]
        %v1083 = vld [vmem:[%s1073 + $0x24] sm:$0xf]
        %v1084 = vld [vmem:[%s1073 + $0x28] sm:$0xf]
        %v1085 = vld [vmem:[%s1073 + $0x2c] sm:$0xf]
        %v1086 = vld [vmem:[%s1073 + $0x30] sm:$0xf]
        %v1087 = vld [vmem:[%s1073 + $0x34] sm:$0xf]
        %v1088 = vld [vmem:[%s1073 + $0x38] sm:$0xf]
        %v1089 = vld [vmem:[%s1073 + $0x3c] sm:$0xf]
        %v1106 = vunpack.c.l.b16 %v1074
        %v1107 = vunpack.c.l.b16 %v1075
        %v1108 = vunpack.c.l.b16 %v1076
        %v1109 = vunpack.c.l.b16 %v1077
        %v1110 = vunpack.c.l.b16 %v1078
        %v1111 = vunpack.c.l.b16 %v1079
        %v1112 = vunpack.c.l.b16 %v1080
        %v1113 = vunpack.c.l.b16 %v1081
        %v1114 = vunpack.c.l.b16 %v1082
        %v1115 = vunpack.c.l.b16 %v1083
        %v1116 = vunpack.c.l.b16 %v1084
        %v1117 = vunpack.c.l.b16 %v1085
        %v1118 = vunpack.c.l.b16 %v1086
        %v1119 = vunpack.c.l.b16 %v1087
        %v1120 = vunpack.c.l.b16 %v1088
        %v1121 = vunpack.c.l.b16 %v1089
        %v1122 = vpack.c.b16 %v1107, %v1106
        %v1123 = vpack.c.b16 %v1109, %v1108
        %v1124 = vpack.c.b16 %v1111, %v1110
        %v1125 = vpack.c.b16 %v1113, %v1112
        %v1126 = vpack.c.b16 %v1115, %v1114
        %v1127 = vpack.c.b16 %v1117, %v1116
        %v1128 = vpack.c.b16 %v1119, %v1118
        %v1129 = vpack.c.b16 %v1121, %v1120
        %1138 = vmatprep.subr.bf16.mxu0 0
        %1139 = vmatpush1.bf16.msra.mxu0 %v1122
        %1140 = vmatprep.subr.bf16.mxu0 0
        %1141 = vmatpush1.bf16.msra.mxu0 %v1123
        %1142 = vmatprep.subr.bf16.mxu0 0
        %1143 = vmatpush1.bf16.msra.mxu0 %v1124
        %1144 = vmatprep.subr.bf16.mxu0 0
        %1145 = vmatpush1.bf16.msra.mxu0 %v1125
        %1146 = vmatprep.subr.bf16.mxu0 0
        %1147 = vmatpush1.bf16.msra.mxu0 %v1126
        %1148 = vmatprep.subr.bf16.mxu0 0
        %1149 = vmatpush1.bf16.msra.mxu0 %v1127
        %1150 = vmatprep.subr.bf16.mxu0 0
        %1151 = vmatpush1.bf16.msra.mxu0 %v1128
        %1152 = vmatprep.subr.bf16.mxu0 0
        %1153 = vmatpush1.bf16.msra.mxu0 %v1129
        %1154 = vmatprep.subr.bf16.mxu0 0
        %1155 = vmatpush1.bf16.msra.mxu0 0
        %1156 = vmatprep.subr.bf16.mxu0 0
        %1157 = vmatpush1.bf16.msra.mxu0 0
        %1158 = vmatprep.subr.bf16.mxu0 0
        %1159 = vmatpush1.bf16.msra.mxu0 0
        %1160 = vmatprep.subr.bf16.mxu0 0
        %1161 = vmatpush1.bf16.msra.mxu0 0
        %1162 = vmatprep.subr.bf16.mxu0 0
        %1163 = vmatpush1.bf16.msra.mxu0 0
        %1164 = vmatprep.subr.bf16.mxu0 0
        %1165 = vmatpush1.bf16.msra.mxu0 0
        %1166 = vmatprep.subr.bf16.mxu0 0
        %1167 = vmatpush1.bf16.msra.mxu0 0
        %1168 = vmatprep.subr.bf16.mxu0 0
        %1169 = vmatpush1.bf16.msra.mxu0 0
        %1170 = vmatprep.mubr.bf16.mxu0 0
        %1171 = vmatmul.mubr.bf16.gmra.mrb[0].mxu0 %v1057
        %v1172 = vpop.f32.mrb[0].mxu0
        %v1173 = vadd.f32 0.0, %v1172
        %v1174 = vpop.f32.mrb[0].mxu0
        %v1175 = vpop.f32.mrb[0].mxu0
        %v1176 = vadd.f32 0.0, %v1175
        %v1177 = vpop.f32.mrb[0].mxu0
        %1178 = vmatprep.mubr.bf16.mxu0 0
        %1179 = vmatmul.mubr.bf16.gmra.mrb[0].mxu0 %v1058
        %v1180 = vpop.f32.mrb[0].mxu0
        %v1181 = vadd.f32 0.0, %v1180
        %v1182 = vpop.f32.mrb[0].mxu0
        %v1183 = vpop.f32.mrb[0].mxu0
        %v1184 = vadd.f32 0.0, %v1183
        %v1185 = vpop.f32.mrb[0].mxu0
        %1186 = vmatprep.mubr.bf16.mxu0 0
        %1187 = vmatmul.mubr.bf16.gmra.mrb[0].mxu0 %v1059
        %v1188 = vpop.f32.mrb[0].mxu0
        %v1189 = vadd.f32 0.0, %v1188
        %v1190 = vpop.f32.mrb[0].mxu0
        %v1191 = vpop.f32.mrb[0].mxu0
        %v1192 = vadd.f32 0.0, %v1191
        %v1193 = vpop.f32.mrb[0].mxu0
        %1194 = vmatprep.mubr.bf16.mxu0 0
        %1195 = vmatmul.mubr.bf16.gmra.mrb[0].mxu0 %v1060
        %v1196 = vpop.f32.mrb[0].mxu0
        %v1197 = vadd.f32 0.0, %v1196
        %v1198 = vpop.f32.mrb[0].mxu0
        %v1199 = vpop.f32.mrb[0].mxu0
        %v1200 = vadd.f32 0.0, %v1199
        %v1201 = vpop.f32.mrb[0].mxu0
        %1202 = vmatprep.mubr.bf16.mxu0 0
        %1203 = vmatmul.mubr.bf16.gmra.mrb[0].mxu0 %v1061
        %v1204 = vpop.f32.mrb[0].mxu0
        %v1205 = vadd.f32 0.0, %v1204
        %v1206 = vpop.f32.mrb[0].mxu0
        %v1207 = vpop.f32.mrb[0].mxu0
        %v1208 = vadd.f32 0.0, %v1207
        %v1209 = vpop.f32.mrb[0].mxu0
        %1210 = vmatprep.mubr.bf16.mxu0 0
        %1211 = vmatmul.mubr.bf16.gmra.mrb[0].mxu0 %v1062
        %v1212 = vpop.f32.mrb[0].mxu0
        %v1213 = vadd.f32 0.0, %v1212
        %v1214 = vpop.f32.mrb[0].mxu0
        %v1215 = vpop.f32.mrb[0].mxu0
        %v1216 = vadd.f32 0.0, %v1215
        %v1217 = vpop.f32.mrb[0].mxu0
        %1218 = vmatprep.mubr.bf16.mxu0 0
        %1219 = vmatmul.mubr.bf16.gmra.mrb[0].mxu0 %v1063
        %v1220 = vpop.f32.mrb[0].mxu0
        %v1221 = vadd.f32 0.0, %v1220
        %v1222 = vpop.f32.mrb[0].mxu0
        %v1223 = vpop.f32.mrb[0].mxu0
        %v1224 = vadd.f32 0.0, %v1223
        %v1225 = vpop.f32.mrb[0].mxu0
        %1226 = vmatprep.mubr.bf16.mxu0 0
        %1227 = vmatmul.mubr.bf16.gmra.mrb[0].mxu0 %v1064
        %v1228 = vpop.f32.mrb[0].mxu0
        %v1229 = vadd.f32 0.0, %v1228
        %v1230 = vpop.f32.mrb[0].mxu0
        %v1231 = vpop.f32.mrb[0].mxu0
        %v1232 = vadd.f32 0.0, %v1231
        %v1233 = vpop.f32.mrb[0].mxu0
        %1234 = vmatprep.mubr.bf16.mxu0 0
        %1235 = vmatmul.mubr.bf16.gmra.mrb[0].mxu0 %v1065
        %v1236 = vpop.f32.mrb[0].mxu0
        %v1237 = vadd.f32 0.0, %v1236
        %v1238 = vpop.f32.mrb[0].mxu0
        %v1239 = vpop.f32.mrb[0].mxu0
        %v1240 = vadd.f32 0.0, %v1239
        %v1241 = vpop.f32.mrb[0].mxu0
        %1242 = vmatprep.mubr.bf16.mxu0 0
        %1243 = vmatmul.mubr.bf16.gmra.mrb[0].mxu0 %v1066
        %v1244 = vpop.f32.mrb[0].mxu0
        %v1245 = vadd.f32 0.0, %v1244
        %v1246 = vpop.f32.mrb[0].mxu0
        %v1247 = vpop.f32.mrb[0].mxu0
        %v1248 = vadd.f32 0.0, %v1247
        %v1249 = vpop.f32.mrb[0].mxu0
        %1250 = vmatprep.mubr.bf16.mxu0 0
        %1251 = vmatmul.mubr.bf16.gmra.mrb[0].mxu0 %v1067
        %v1252 = vpop.f32.mrb[0].mxu0
        %v1253 = vadd.f32 0.0, %v1252
        %v1254 = vpop.f32.mrb[0].mxu0
        %v1255 = vpop.f32.mrb[0].mxu0
        %v1256 = vadd.f32 0.0, %v1255
        %v1257 = vpop.f32.mrb[0].mxu0
        %1258 = vmatprep.mubr.bf16.mxu0 0
        %1259 = vmatmul.mubr.bf16.gmra.mrb[0].mxu0 %v1068
        %v1260 = vpop.f32.mrb[0].mxu0
        %v1261 = vadd.f32 0.0, %v1260
        %v1262 = vpop.f32.mrb[0].mxu0
        %v1263 = vpop.f32.mrb[0].mxu0
        %v1264 = vadd.f32 0.0, %v1263
        %v1265 = vpop.f32.mrb[0].mxu0
        %1266 = vmatprep.mubr.bf16.mxu0 0
        %1267 = vmatmul.mubr.bf16.gmra.mrb[0].mxu0 %v1069
        %v1268 = vpop.f32.mrb[0].mxu0
        %v1269 = vadd.f32 0.0, %v1268
        %v1270 = vpop.f32.mrb[0].mxu0
        %v1271 = vpop.f32.mrb[0].mxu0
        %v1272 = vadd.f32 0.0, %v1271
        %v1273 = vpop.f32.mrb[0].mxu0
        %1274 = vmatprep.mubr.bf16.mxu0 0
        %1275 = vmatmul.mubr.bf16.gmra.mrb[0].mxu0 %v1070
        %v1276 = vpop.f32.mrb[0].mxu0
        %v1277 = vadd.f32 0.0, %v1276
        %v1278 = vpop.f32.mrb[0].mxu0
        %v1279 = vpop.f32.mrb[0].mxu0
        %v1280 = vadd.f32 0.0, %v1279
        %v1281 = vpop.f32.mrb[0].mxu0
        %1282 = vmatprep.mubr.bf16.mxu0 0
        %1283 = vmatmul.mubr.bf16.gmra.mrb[0].mxu0 %v1071
        %v1284 = vpop.f32.mrb[0].mxu0
        %v1285 = vadd.f32 0.0, %v1284
        %v1286 = vpop.f32.mrb[0].mxu0
        %v1287 = vpop.f32.mrb[0].mxu0
        %v1288 = vadd.f32 0.0, %v1287
        %v1289 = vpop.f32.mrb[0].mxu0
        %1290 = vmatprep.mubr.bf16.mxu0 0
        %1291 = vmatmul.mubr.bf16.gmra.mrb[0].mxu0 %v1072
        %v1292 = vpop.f32.mrb[0].mxu0
        %v1293 = vadd.f32 0.0, %v1292
        %v1294 = vpop.f32.mrb[0].mxu0
        %v1295 = vpop.f32.mrb[0].mxu0
        %v1296 = vadd.f32 0.0, %v1295
        %v1297 = vpop.f32.mrb[0].mxu0
        %1298 = vdwg.mxu0
        %v1315 = vunpack.c.l.b16 %v1009
        %v1316 = vunpack.c.l.b16 %v1010
        %v1317 = vunpack.c.l.b16 %v1011
        %v1318 = vunpack.c.l.b16 %v1012
        %v1319 = vunpack.c.l.b16 %v1013
        %v1320 = vunpack.c.l.b16 %v1014
        %v1321 = vunpack.c.l.b16 %v1015
        %v1322 = vunpack.c.l.b16 %v1016
        %v1323 = vunpack.c.l.b16 %v1017
        %v1324 = vunpack.c.l.b16 %v1018
        %v1325 = vunpack.c.l.b16 %v1019
        %v1326 = vunpack.c.l.b16 %v1020
        %v1327 = vunpack.c.l.b16 %v1021
        %v1328 = vunpack.c.l.b16 %v1022
        %v1329 = vunpack.c.l.b16 %v1023
        %v1330 = vunpack.c.l.b16 %v1024
        %v1331 = vpack.c.b16 %v1316, %v1315
        %v1332 = vpack.c.b16 %v1318, %v1317
        %v1333 = vpack.c.b16 %v1320, %v1319
        %v1334 = vpack.c.b16 %v1322, %v1321
        %v1335 = vpack.c.b16 %v1324, %v1323
        %v1336 = vpack.c.b16 %v1326, %v1325
        %v1337 = vpack.c.b16 %v1328, %v1327
        %v1338 = vpack.c.b16 %v1330, %v1329
        %1347 = vmatprep.subr.bf16.mxu0 0
        %1348 = vmatpush1.bf16.msra.mxu0 %v1331
        %1349 = vmatprep.subr.bf16.mxu0 0
        %1350 = vmatpush1.bf16.msra.mxu0 %v1332
        %1351 = vmatprep.subr.bf16.mxu0 0
        %1352 = vmatpush1.bf16.msra.mxu0 %v1333
        %1353 = vmatprep.subr.bf16.mxu0 0
        %1354 = vmatpush1.bf16.msra.mxu0 %v1334
        %1355 = vmatprep.subr.bf16.mxu0 0
        %1356 = vmatpush1.bf16.msra.mxu0 %v1335
        %1357 = vmatprep.subr.bf16.mxu0 0
        %1358 = vmatpush1.bf16.msra.mxu0 %v1336
        %1359 = vmatprep.subr.bf16.mxu0 0
        %1360 = vmatpush1.bf16.msra.mxu0 %v1337
        %1361 = vmatprep.subr.bf16.mxu0 0
        %1362 = vmatpush1.bf16.msra.mxu0 %v1338
        %1363 = vmatprep.subr.bf16.mxu0 0
        %1364 = vmatpush1.bf16.msra.mxu0 0
        %1365 = vmatprep.subr.bf16.mxu0 0
        %1366 = vmatpush1.bf16.msra.mxu0 0
        %1367 = vmatprep.subr.bf16.mxu0 0
        %1368 = vmatpush1.bf16.msra.mxu0 0
        %1369 = vmatprep.subr.bf16.mxu0 0
        %1370 = vmatpush1.bf16.msra.mxu0 0
        %1371 = vmatprep.subr.bf16.mxu0 0
        %1372 = vmatpush1.bf16.msra.mxu0 0
        %1373 = vmatprep.subr.bf16.mxu0 0
        %1374 = vmatpush1.bf16.msra.mxu0 0
        %1375 = vmatprep.subr.bf16.mxu0 0
        %1376 = vmatpush1.bf16.msra.mxu0 0
        %1377 = vmatprep.subr.bf16.mxu0 0
        %1378 = vmatpush1.bf16.msra.mxu0 0
        %1379 = vmatprep.mubr.bf16.mxu0 0
        %1380 = vmatmul.mubr.bf16.gmra.mrb[0].mxu0 %v993
        %v1381 = vpop.f32.mrb[0].mxu0
        %v1382 = vadd.f32 %v1173, %v1381
        %v1383 = vpop.f32.mrb[0].mxu0
        %v1384 = vpop.f32.mrb[0].mxu0
        %v1385 = vadd.f32 %v1176, %v1384
        %v1386 = vpop.f32.mrb[0].mxu0
        %1387 = vmatprep.mubr.bf16.mxu0 0
        %1388 = vmatmul.mubr.bf16.gmra.mrb[0].mxu0 %v994
        %v1389 = vpop.f32.mrb[0].mxu0
        %v1390 = vadd.f32 %v1181, %v1389
        %v1391 = vpop.f32.mrb[0].mxu0
        %v1392 = vpop.f32.mrb[0].mxu0
        %v1393 = vadd.f32 %v1184, %v1392
        %v1394 = vpop.f32.mrb[0].mxu0
        %1395 = vmatprep.mubr.bf16.mxu0 0
        %1396 = vmatmul.mubr.bf16.gmra.mrb[0].mxu0 %v995
        %v1397 = vpop.f32.mrb[0].mxu0
        %v1398 = vadd.f32 %v1189, %v1397
        %v1399 = vpop.f32.mrb[0].mxu0
        %v1400 = vpop.f32.mrb[0].mxu0
        %v1401 = vadd.f32 %v1192, %v1400
        %v1402 = vpop.f32.mrb[0].mxu0
        %1403 = vmatprep.mubr.bf16.mxu0 0
        %1404 = vmatmul.mubr.bf16.gmra.mrb[0].mxu0 %v996
        %v1405 = vpop.f32.mrb[0].mxu0
        %v1406 = vadd.f32 %v1197, %v1405
        %v1407 = vpop.f32.mrb[0].mxu0
        %v1408 = vpop.f32.mrb[0].mxu0
        %v1409 = vadd.f32 %v1200, %v1408
        %v1410 = vpop.f32.mrb[0].mxu0
        %1411 = vmatprep.mubr.bf16.mxu0 0
        %1412 = vmatmul.mubr.bf16.gmra.mrb[0].mxu0 %v997
        %v1413 = vpop.f32.mrb[0].mxu0
        %v1414 = vadd.f32 %v1205, %v1413
        %v1415 = vpop.f32.mrb[0].mxu0
        %v1416 = vpop.f32.mrb[0].mxu0
        %v1417 = vadd.f32 %v1208, %v1416
        %v1418 = vpop.f32.mrb[0].mxu0
        %1419 = vmatprep.mubr.bf16.mxu0 0
        %1420 = vmatmul.mubr.bf16.gmra.mrb[0].mxu0 %v998
        %v1421 = vpop.f32.mrb[0].mxu0
        %v1422 = vadd.f32 %v1213, %v1421
        %v1423 = vpop.f32.mrb[0].mxu0
        %v1424 = vpop.f32.mrb[0].mxu0
        %v1425 = vadd.f32 %v1216, %v1424
        %v1426 = vpop.f32.mrb[0].mxu0
        %1427 = vmatprep.mubr.bf16.mxu0 0
        %1428 = vmatmul.mubr.bf16.gmra.mrb[0].mxu0 %v999
        %v1429 = vpop.f32.mrb[0].mxu0
        %v1430 = vadd.f32 %v1221, %v1429
        %v1431 = vpop.f32.mrb[0].mxu0
        %v1432 = vpop.f32.mrb[0].mxu0
        %v1433 = vadd.f32 %v1224, %v1432
        %v1434 = vpop.f32.mrb[0].mxu0
        %1435 = vmatprep.mubr.bf16.mxu0 0
        %1436 = vmatmul.mubr.bf16.gmra.mrb[0].mxu0 %v1000
        %v1437 = vpop.f32.mrb[0].mxu0
        %v1438 = vadd.f32 %v1229, %v1437
        %v1439 = vpop.f32.mrb[0].mxu0
        %v1440 = vpop.f32.mrb[0].mxu0
        %v1441 = vadd.f32 %v1232, %v1440
        %v1442 = vpop.f32.mrb[0].mxu0
        %1443 = vmatprep.mubr.bf16.mxu0 0
        %1444 = vmatmul.mubr.bf16.gmra.mrb[0].mxu0 %v1001
        %v1445 = vpop.f32.mrb[0].mxu0
        %v1446 = vadd.f32 %v1237, %v1445
        %v1447 = vpop.f32.mrb[0].mxu0
        %v1448 = vpop.f32.mrb[0].mxu0
        %v1449 = vadd.f32 %v1240, %v1448
        %v1450 = vpop.f32.mrb[0].mxu0
        %1451 = vmatprep.mubr.bf16.mxu0 0
        %1452 = vmatmul.mubr.bf16.gmra.mrb[0].mxu0 %v1002
        %v1453 = vpop.f32.mrb[0].mxu0
        %v1454 = vadd.f32 %v1245, %v1453
        %v1455 = vpop.f32.mrb[0].mxu0
        %v1456 = vpop.f32.mrb[0].mxu0
        %v1457 = vadd.f32 %v1248, %v1456
        %v1458 = vpop.f32.mrb[0].mxu0
        %1459 = vmatprep.mubr.bf16.mxu0 0
        %1460 = vmatmul.mubr.bf16.gmra.mrb[0].mxu0 %v1003
        %v1461 = vpop.f32.mrb[0].mxu0
        %v1462 = vadd.f32 %v1253, %v1461
        %v1463 = vpop.f32.mrb[0].mxu0
        %v1464 = vpop.f32.mrb[0].mxu0
        %v1465 = vadd.f32 %v1256, %v1464
        %v1466 = vpop.f32.mrb[0].mxu0
        %1467 = vmatprep.mubr.bf16.mxu0 0
        %1468 = vmatmul.mubr.bf16.gmra.mrb[0].mxu0 %v1004
        %v1469 = vpop.f32.mrb[0].mxu0
        %v1470 = vadd.f32 %v1261, %v1469
        %v1471 = vpop.f32.mrb[0].mxu0
        %v1472 = vpop.f32.mrb[0].mxu0
        %v1473 = vadd.f32 %v1264, %v1472
        %v1474 = vpop.f32.mrb[0].mxu0
        %1475 = vmatprep.mubr.bf16.mxu0 0
        %1476 = vmatmul.mubr.bf16.gmra.mrb[0].mxu0 %v1005
        %v1477 = vpop.f32.mrb[0].mxu0
        %v1478 = vadd.f32 %v1269, %v1477
        %v1479 = vpop.f32.mrb[0].mxu0
        %v1480 = vpop.f32.mrb[0].mxu0
        %v1481 = vadd.f32 %v1272, %v1480
        %v1482 = vpop.f32.mrb[0].mxu0
        %1483 = vmatprep.mubr.bf16.mxu0 0
        %1484 = vmatmul.mubr.bf16.gmra.mrb[0].mxu0 %v1006
        %v1485 = vpop.f32.mrb[0].mxu0
        %v1486 = vadd.f32 %v1277, %v1485
        %v1487 = vpop.f32.mrb[0].mxu0
        %v1488 = vpop.f32.mrb[0].mxu0
        %v1489 = vadd.f32 %v1280, %v1488
        %v1490 = vpop.f32.mrb[0].mxu0
        %1491 = vmatprep.mubr.bf16.mxu0 0
        %1492 = vmatmul.mubr.bf16.gmra.mrb[0].mxu0 %v1007
        %v1493 = vpop.f32.mrb[0].mxu0
        %v1494 = vadd.f32 %v1285, %v1493
        %v1495 = vpop.f32.mrb[0].mxu0
        %v1496 = vpop.f32.mrb[0].mxu0
        %v1497 = vadd.f32 %v1288, %v1496
        %v1498 = vpop.f32.mrb[0].mxu0
        %1499 = vmatprep.mubr.bf16.mxu0 0
        %1500 = vmatmul.mubr.bf16.gmra.mrb[0].mxu0 %v1008
        %v1501 = vpop.f32.mrb[0].mxu0
        %v1502 = vadd.f32 %v1293, %v1501
        %v1503 = vpop.f32.mrb[0].mxu0
        %v1504 = vpop.f32.mrb[0].mxu0
        %v1505 = vadd.f32 %v1296, %v1504
        %v1506 = vpop.f32.mrb[0].mxu0
        %1507 = vdwg.mxu0
        %v1508 = vld [vmem:[#allocation2 + $0x2] sm:$0xff]
        %v1509 = vld [vmem:[#allocation2 + $0xa] sm:$0xff]
        %v1510 = vld [vmem:[#allocation2 + $0x1a] sm:$0xff]
        %v1511 = vld [vmem:[#allocation2 + $0x22] sm:$0xff]
        %v1512 = vld [vmem:[#allocation2 + $0x32] sm:$0xff]
        %v1513 = vld [vmem:[#allocation2 + $0x3a] sm:$0xff]
        %v1514 = vld [vmem:[#allocation2 + $0x4a] sm:$0xff]
        %v1515 = vld [vmem:[#allocation2 + $0x52] sm:$0xff]
        %v1516 = vld [vmem:[#allocation2 + $0x62] sm:$0xff]
        %v1517 = vld [vmem:[#allocation2 + $0x6a] sm:$0xff]
        %v1518 = vld [vmem:[#allocation2 + $0x7a] sm:$0xff]
        %v1519 = vld [vmem:[#allocation2 + $0x82] sm:$0xff]
        %v1520 = vld [vmem:[#allocation2 + $0x92] sm:$0xff]
        %v1521 = vld [vmem:[#allocation2 + $0x9a] sm:$0xff]
        %v1522 = vld [vmem:[#allocation2 + $0xaa] sm:$0xff]
        %v1523 = vld [vmem:[#allocation2 + $0xb2] sm:$0xff]
        %v1524 = vld [vmem:[#allocation2 + $0xc2] sm:$0xff]
        %v1525 = vld [vmem:[#allocation2 + $0xca] sm:$0xff]
        %v1526 = vld [vmem:[#allocation2 + $0xda] sm:$0xff]
        %v1527 = vld [vmem:[#allocation2 + $0xe2] sm:$0xff]
        %v1528 = vld [vmem:[#allocation2 + $0xf2] sm:$0xff]
        %v1529 = vld [vmem:[#allocation2 + $0xfa] sm:$0xff]
        %v1530 = vld [vmem:[#allocation2 + $0x10a] sm:$0xff]
        %v1531 = vld [vmem:[#allocation2 + $0x112] sm:$0xff]
        %v1532 = vld [vmem:[#allocation2 + $0x122] sm:$0xff]
        %v1533 = vld [vmem:[#allocation2 + $0x12a] sm:$0xff]
        %v1534 = vld [vmem:[#allocation2 + $0x13a] sm:$0xff]
        %v1535 = vld [vmem:[#allocation2 + $0x142] sm:$0xff]
        %v1536 = vld [vmem:[#allocation2 + $0x152] sm:$0xff]
        %v1537 = vld [vmem:[#allocation2 + $0x15a] sm:$0xff]
        %v1538 = vld [vmem:[#allocation2 + $0x16a] sm:$0xff]
        %v1539 = vld [vmem:[#allocation2 + $0x172] sm:$0xff]
        %v1540 = vpack.c.bf16 %v1509, %v1508
        %v1541 = vpack.c.bf16 %v1511, %v1510
        %v1542 = vpack.c.bf16 %v1513, %v1512
        %v1543 = vpack.c.bf16 %v1515, %v1514
        %v1544 = vpack.c.bf16 %v1517, %v1516
        %v1545 = vpack.c.bf16 %v1519, %v1518
        %v1546 = vpack.c.bf16 %v1521, %v1520
        %v1547 = vpack.c.bf16 %v1523, %v1522
        %v1548 = vpack.c.bf16 %v1525, %v1524
        %v1549 = vpack.c.bf16 %v1527, %v1526
        %v1550 = vpack.c.bf16 %v1529, %v1528
        %v1551 = vpack.c.bf16 %v1531, %v1530
        %v1552 = vpack.c.bf16 %v1533, %v1532
        %v1553 = vpack.c.bf16 %v1535, %v1534
        %v1554 = vpack.c.bf16 %v1537, %v1536
        %v1555 = vpack.c.bf16 %v1539, %v1538
        %s1556 = scalar_lea.vmem [#allocation9], 128
        %v1557 = vld [vmem:[%s1556] sm:$0xf]
        %v1558 = vld [vmem:[%s1556 + $0x4] sm:$0xf]
        %v1559 = vld [vmem:[%s1556 + $0x8] sm:$0xf]
        %v1560 = vld [vmem:[%s1556 + $0xc] sm:$0xf]
        %v1561 = vld [vmem:[%s1556 + $0x10] sm:$0xf]
        %v1562 = vld [vmem:[%s1556 + $0x14] sm:$0xf]
        %v1563 = vld [vmem:[%s1556 + $0x18] sm:$0xf]
        %v1564 = vld [vmem:[%s1556 + $0x1c] sm:$0xf]
        %v1565 = vld [vmem:[%s1556 + $0x20] sm:$0xf]
        %v1566 = vld [vmem:[%s1556 + $0x24] sm:$0xf]
        %v1567 = vld [vmem:[%s1556 + $0x28] sm:$0xf]
        %v1568 = vld [vmem:[%s1556 + $0x2c] sm:$0xf]
        %v1569 = vld [vmem:[%s1556 + $0x30] sm:$0xf]
        %v1570 = vld [vmem:[%s1556 + $0x34] sm:$0xf]
        %v1571 = vld [vmem:[%s1556 + $0x38] sm:$0xf]
        %v1572 = vld [vmem:[%s1556 + $0x3c] sm:$0xf]
        %v1589 = vunpack.c.l.b16 %v1557
        %v1590 = vunpack.c.l.b16 %v1558
        %v1591 = vunpack.c.l.b16 %v1559
        %v1592 = vunpack.c.l.b16 %v1560
        %v1593 = vunpack.c.l.b16 %v1561
        %v1594 = vunpack.c.l.b16 %v1562
        %v1595 = vunpack.c.l.b16 %v1563
        %v1596 = vunpack.c.l.b16 %v1564
        %v1597 = vunpack.c.l.b16 %v1565
        %v1598 = vunpack.c.l.b16 %v1566
        %v1599 = vunpack.c.l.b16 %v1567
        %v1600 = vunpack.c.l.b16 %v1568
        %v1601 = vunpack.c.l.b16 %v1569
        %v1602 = vunpack.c.l.b16 %v1570
        %v1603 = vunpack.c.l.b16 %v1571
        %v1604 = vunpack.c.l.b16 %v1572
        %v1605 = vpack.c.b16 %v1590, %v1589
        %v1606 = vpack.c.b16 %v1592, %v1591
        %v1607 = vpack.c.b16 %v1594, %v1593
        %v1608 = vpack.c.b16 %v1596, %v1595
        %v1609 = vpack.c.b16 %v1598, %v1597
        %v1610 = vpack.c.b16 %v1600, %v1599
        %v1611 = vpack.c.b16 %v1602, %v1601
        %v1612 = vpack.c.b16 %v1604, %v1603
        %1621 = vmatprep.subr.bf16.mxu0 0
        %1622 = vmatpush1.bf16.msra.mxu0 %v1605
        %1623 = vmatprep.subr.bf16.mxu0 0
        %1624 = vmatpush1.bf16.msra.mxu0 %v1606
        %1625 = vmatprep.subr.bf16.mxu0 0
        %1626 = vmatpush1.bf16.msra.mxu0 %v1607
        %1627 = vmatprep.subr.bf16.mxu0 0
        %1628 = vmatpush1.bf16.msra.mxu0 %v1608
        %1629 = vmatprep.subr.bf16.mxu0 0
        %1630 = vmatpush1.bf16.msra.mxu0 %v1609
        %1631 = vmatprep.subr.bf16.mxu0 0
        %1632 = vmatpush1.bf16.msra.mxu0 %v1610
        %1633 = vmatprep.subr.bf16.mxu0 0
        %1634 = vmatpush1.bf16.msra.mxu0 %v1611
        %1635 = vmatprep.subr.bf16.mxu0 0
        %1636 = vmatpush1.bf16.msra.mxu0 %v1612
        %1637 = vmatprep.subr.bf16.mxu0 0
        %1638 = vmatpush1.bf16.msra.mxu0 0
        %1639 = vmatprep.subr.bf16.mxu0 0
        %1640 = vmatpush1.bf16.msra.mxu0 0
        %1641 = vmatprep.subr.bf16.mxu0 0
        %1642 = vmatpush1.bf16.msra.mxu0 0
        %1643 = vmatprep.subr.bf16.mxu0 0
        %1644 = vmatpush1.bf16.msra.mxu0 0
        %1645 = vmatprep.subr.bf16.mxu0 0
        %1646 = vmatpush1.bf16.msra.mxu0 0
        %1647 = vmatprep.subr.bf16.mxu0 0
        %1648 = vmatpush1.bf16.msra.mxu0 0
        %1649 = vmatprep.subr.bf16.mxu0 0
        %1650 = vmatpush1.bf16.msra.mxu0 0
        %1651 = vmatprep.subr.bf16.mxu0 0
        %1652 = vmatpush1.bf16.msra.mxu0 0
        %1653 = vmatprep.mubr.bf16.mxu0 0
        %1654 = vmatmul.mubr.bf16.gmra.mrb[0].mxu0 %v1540
        %v1655 = vpop.f32.mrb[0].mxu0
        %v1656 = vadd.f32 0.0, %v1655
        %v1657 = vpop.f32.mrb[0].mxu0
        %v1658 = vpop.f32.mrb[0].mxu0
        %v1659 = vadd.f32 0.0, %v1658
        %v1660 = vpop.f32.mrb[0].mxu0
        %1661 = vmatprep.mubr.bf16.mxu0 0
        %1662 = vmatmul.mubr.bf16.gmra.mrb[0].mxu0 %v1541
        %v1663 = vpop.f32.mrb[0].mxu0
        %v1664 = vadd.f32 0.0, %v1663
        %v1665 = vpop.f32.mrb[0].mxu0
        %v1666 = vpop.f32.mrb[0].mxu0
        %v1667 = vadd.f32 0.0, %v1666
        %v1668 = vpop.f32.mrb[0].mxu0
        %1669 = vmatprep.mubr.bf16.mxu0 0
        %1670 = vmatmul.mubr.bf16.gmra.mrb[0].mxu0 %v1542
        %v1671 = vpop.f32.mrb[0].mxu0
        %v1672 = vadd.f32 0.0, %v1671
        %v1673 = vpop.f32.mrb[0].mxu0
        %v1674 = vpop.f32.mrb[0].mxu0
        %v1675 = vadd.f32 0.0, %v1674
        %v1676 = vpop.f32.mrb[0].mxu0
        %1677 = vmatprep.mubr.bf16.mxu0 0
        %1678 = vmatmul.mubr.bf16.gmra.mrb[0].mxu0 %v1543
        %v1679 = vpop.f32.mrb[0].mxu0
        %v1680 = vadd.f32 0.0, %v1679
        %v1681 = vpop.f32.mrb[0].mxu0
        %v1682 = vpop.f32.mrb[0].mxu0
        %v1683 = vadd.f32 0.0, %v1682
        %v1684 = vpop.f32.mrb[0].mxu0
        %1685 = vmatprep.mubr.bf16.mxu0 0
        %1686 = vmatmul.mubr.bf16.gmra.mrb[0].mxu0 %v1544
        %v1687 = vpop.f32.mrb[0].mxu0
        %v1688 = vadd.f32 0.0, %v1687
        %v1689 = vpop.f32.mrb[0].mxu0
        %v1690 = vpop.f32.mrb[0].mxu0
        %v1691 = vadd.f32 0.0, %v1690
        %v1692 = vpop.f32.mrb[0].mxu0
        %1693 = vmatprep.mubr.bf16.mxu0 0
        %1694 = vmatmul.mubr.bf16.gmra.mrb[0].mxu0 %v1545
        %v1695 = vpop.f32.mrb[0].mxu0
        %v1696 = vadd.f32 0.0, %v1695
        %v1697 = vpop.f32.mrb[0].mxu0
        %v1698 = vpop.f32.mrb[0].mxu0
        %v1699 = vadd.f32 0.0, %v1698
        %v1700 = vpop.f32.mrb[0].mxu0
        %1701 = vmatprep.mubr.bf16.mxu0 0
        %1702 = vmatmul.mubr.bf16.gmra.mrb[0].mxu0 %v1546
        %v1703 = vpop.f32.mrb[0].mxu0
        %v1704 = vadd.f32 0.0, %v1703
        %v1705 = vpop.f32.mrb[0].mxu0
        %v1706 = vpop.f32.mrb[0].mxu0
        %v1707 = vadd.f32 0.0, %v1706
        %v1708 = vpop.f32.mrb[0].mxu0
        %1709 = vmatprep.mubr.bf16.mxu0 0
        %1710 = vmatmul.mubr.bf16.gmra.mrb[0].mxu0 %v1547
        %v1711 = vpop.f32.mrb[0].mxu0
        %v1712 = vadd.f32 0.0, %v1711
        %v1713 = vpop.f32.mrb[0].mxu0
        %v1714 = vpop.f32.mrb[0].mxu0
        %v1715 = vadd.f32 0.0, %v1714
        %v1716 = vpop.f32.mrb[0].mxu0
        %1717 = vmatprep.mubr.bf16.mxu0 0
        %1718 = vmatmul.mubr.bf16.gmra.mrb[0].mxu0 %v1548
        %v1719 = vpop.f32.mrb[0].mxu0
        %v1720 = vadd.f32 0.0, %v1719
        %v1721 = vpop.f32.mrb[0].mxu0
        %v1722 = vpop.f32.mrb[0].mxu0
        %v1723 = vadd.f32 0.0, %v1722
        %v1724 = vpop.f32.mrb[0].mxu0
        %1725 = vmatprep.mubr.bf16.mxu0 0
        %1726 = vmatmul.mubr.bf16.gmra.mrb[0].mxu0 %v1549
        %v1727 = vpop.f32.mrb[0].mxu0
        %v1728 = vadd.f32 0.0, %v1727
        %v1729 = vpop.f32.mrb[0].mxu0
        %v1730 = vpop.f32.mrb[0].mxu0
        %v1731 = vadd.f32 0.0, %v1730
        %v1732 = vpop.f32.mrb[0].mxu0
        %1733 = vmatprep.mubr.bf16.mxu0 0
        %1734 = vmatmul.mubr.bf16.gmra.mrb[0].mxu0 %v1550
        %v1735 = vpop.f32.mrb[0].mxu0
        %v1736 = vadd.f32 0.0, %v1735
        %v1737 = vpop.f32.mrb[0].mxu0
        %v1738 = vpop.f32.mrb[0].mxu0
        %v1739 = vadd.f32 0.0, %v1738
        %v1740 = vpop.f32.mrb[0].mxu0
        %1741 = vmatprep.mubr.bf16.mxu0 0
        %1742 = vmatmul.mubr.bf16.gmra.mrb[0].mxu0 %v1551
        %v1743 = vpop.f32.mrb[0].mxu0
        %v1744 = vadd.f32 0.0, %v1743
        %v1745 = vpop.f32.mrb[0].mxu0
        %v1746 = vpop.f32.mrb[0].mxu0
        %v1747 = vadd.f32 0.0, %v1746
        %v1748 = vpop.f32.mrb[0].mxu0
        %1749 = vmatprep.mubr.bf16.mxu0 0
        %1750 = vmatmul.mubr.bf16.gmra.mrb[0].mxu0 %v1552
        %v1751 = vpop.f32.mrb[0].mxu0
        %v1752 = vadd.f32 0.0, %v1751
        %v1753 = vpop.f32.mrb[0].mxu0
        %v1754 = vpop.f32.mrb[0].mxu0
        %v1755 = vadd.f32 0.0, %v1754
        %v1756 = vpop.f32.mrb[0].mxu0
        %1757 = vmatprep.mubr.bf16.mxu0 0
        %1758 = vmatmul.mubr.bf16.gmra.mrb[0].mxu0 %v1553
        %v1759 = vpop.f32.mrb[0].mxu0
        %v1760 = vadd.f32 0.0, %v1759
        %v1761 = vpop.f32.mrb[0].mxu0
        %v1762 = vpop.f32.mrb[0].mxu0
        %v1763 = vadd.f32 0.0, %v1762
        %v1764 = vpop.f32.mrb[0].mxu0
        %1765 = vmatprep.mubr.bf16.mxu0 0
        %1766 = vmatmul.mubr.bf16.gmra.mrb[0].mxu0 %v1554
        %v1767 = vpop.f32.mrb[0].mxu0
        %v1768 = vadd.f32 0.0, %v1767
        %v1769 = vpop.f32.mrb[0].mxu0
        %v1770 = vpop.f32.mrb[0].mxu0
        %v1771 = vadd.f32 0.0, %v1770
        %v1772 = vpop.f32.mrb[0].mxu0
        %1773 = vmatprep.mubr.bf16.mxu0 0
        %1774 = vmatmul.mubr.bf16.gmra.mrb[0].mxu0 %v1555
        %v1775 = vpop.f32.mrb[0].mxu0
        %v1776 = vadd.f32 0.0, %v1775
        %v1777 = vpop.f32.mrb[0].mxu0
        %v1778 = vpop.f32.mrb[0].mxu0
        %v1779 = vadd.f32 0.0, %v1778
        %v1780 = vpop.f32.mrb[0].mxu0
        %1781 = vdwg.mxu0
        %v1782 = vadd.f32 %v1382, %v1656
        %v1783 = vadd.f32 %v1385, %v1659
        %v1784 = vadd.f32 %v1390, %v1664
        %v1785 = vadd.f32 %v1393, %v1667
        %v1786 = vadd.f32 %v1398, %v1672
        %v1787 = vadd.f32 %v1401, %v1675
        %v1788 = vadd.f32 %v1406, %v1680
        %v1789 = vadd.f32 %v1409, %v1683
        %v1790 = vadd.f32 %v1414, %v1688
        %v1791 = vadd.f32 %v1417, %v1691
        %v1792 = vadd.f32 %v1422, %v1696
        %v1793 = vadd.f32 %v1425, %v1699
        %v1794 = vadd.f32 %v1430, %v1704
        %v1795 = vadd.f32 %v1433, %v1707
        %v1796 = vadd.f32 %v1438, %v1712
        %v1797 = vadd.f32 %v1441, %v1715
        %v1798 = vadd.f32 %v1446, %v1720
        %v1799 = vadd.f32 %v1449, %v1723
        %v1800 = vadd.f32 %v1454, %v1728
        %v1801 = vadd.f32 %v1457, %v1731
        %v1802 = vadd.f32 %v1462, %v1736
        %v1803 = vadd.f32 %v1465, %v1739
        %v1804 = vadd.f32 %v1470, %v1744
        %v1805 = vadd.f32 %v1473, %v1747
        %v1806 = vadd.f32 %v1478, %v1752
        %v1807 = vadd.f32 %v1481, %v1755
        %v1808 = vadd.f32 %v1486, %v1760
        %v1809 = vadd.f32 %v1489, %v1763
        %v1810 = vadd.f32 %v1494, %v1768
        %v1811 = vadd.f32 %v1497, %v1771
        %v1812 = vadd.f32 %v1502, %v1776
        %v1813 = vadd.f32 %v1505, %v1779
        %v1814 = vld [vmem:[%s912] sm:$0xff]
        %v1815 = vld [vmem:[%s912 + $0x8] sm:$0xff]
        %v1816 = vld [vmem:[%s912 + $0x18] sm:$0xff]
        %v1817 = vld [vmem:[%s912 + $0x20] sm:$0xff]
        %v1818 = vld [vmem:[%s912 + $0x30] sm:$0xff]
        %v1819 = vld [vmem:[%s912 + $0x38] sm:$0xff]
        %v1820 = vld [vmem:[%s912 + $0x48] sm:$0xff]
        %v1821 = vld [vmem:[%s912 + $0x50] sm:$0xff]
        %v1822 = vld [vmem:[%s912 + $0x60] sm:$0xff]
        %v1823 = vld [vmem:[%s912 + $0x68] sm:$0xff]
        %v1824 = vld [vmem:[%s912 + $0x78] sm:$0xff]
        %v1825 = vld [vmem:[%s912 + $0x80] sm:$0xff]
        %v1826 = vld [vmem:[%s912 + $0x90] sm:$0xff]
        %v1827 = vld [vmem:[%s912 + $0x98] sm:$0xff]
        %v1828 = vld [vmem:[%s912 + $0xa8] sm:$0xff]
        %v1829 = vld [vmem:[%s912 + $0xb0] sm:$0xff]
        %v1830 = vld [vmem:[%s912 + $0xc0] sm:$0xff]
        %v1831 = vld [vmem:[%s912 + $0xc8] sm:$0xff]
        %v1832 = vld [vmem:[%s912 + $0xd8] sm:$0xff]
        %v1833 = vld [vmem:[%s912 + $0xe0] sm:$0xff]
        %v1834 = vld [vmem:[%s912 + $0xf0] sm:$0xff]
        %v1835 = vld [vmem:[%s912 + $0xf8] sm:$0xff]
        %v1836 = vld [vmem:[%s912 + $0x108] sm:$0xff]
        %v1837 = vld [vmem:[%s912 + $0x110] sm:$0xff]
        %v1838 = vld [vmem:[%s912 + $0x120] sm:$0xff]
        %v1839 = vld [vmem:[%s912 + $0x128] sm:$0xff]
        %v1840 = vld [vmem:[%s912 + $0x138] sm:$0xff]
        %v1841 = vld [vmem:[%s912 + $0x140] sm:$0xff]
        %v1842 = vld [vmem:[%s912 + $0x150] sm:$0xff]
        %v1843 = vld [vmem:[%s912 + $0x158] sm:$0xff]
        %v1844 = vld [vmem:[%s912 + $0x168] sm:$0xff]
        %v1845 = vld [vmem:[%s912 + $0x170] sm:$0xff]
        %v1846 = vpack.c.bf16 %v1815, %v1814
        %v1847 = vpack.c.bf16 %v1817, %v1816
        %v1848 = vpack.c.bf16 %v1819, %v1818
        %v1849 = vpack.c.bf16 %v1821, %v1820
        %v1850 = vpack.c.bf16 %v1823, %v1822
        %v1851 = vpack.c.bf16 %v1825, %v1824
        %v1852 = vpack.c.bf16 %v1827, %v1826
        %v1853 = vpack.c.bf16 %v1829, %v1828
        %v1854 = vpack.c.bf16 %v1831, %v1830
        %v1855 = vpack.c.bf16 %v1833, %v1832
        %v1856 = vpack.c.bf16 %v1835, %v1834
        %v1857 = vpack.c.bf16 %v1837, %v1836
        %v1858 = vpack.c.bf16 %v1839, %v1838
        %v1859 = vpack.c.bf16 %v1841, %v1840
        %v1860 = vpack.c.bf16 %v1843, %v1842
        %v1861 = vpack.c.bf16 %v1845, %v1844
        %s1862 = scalar_lea.vmem [#allocation9], 192
        %v1863 = vld [vmem:[%s1862] sm:$0xf]
        %v1864 = vld [vmem:[%s1862 + $0x4] sm:$0xf]
        %v1865 = vld [vmem:[%s1862 + $0x8] sm:$0xf]
        %v1866 = vld [vmem:[%s1862 + $0xc] sm:$0xf]
        %v1867 = vld [vmem:[%s1862 + $0x10] sm:$0xf]
        %v1868 = vld [vmem:[%s1862 + $0x14] sm:$0xf]
        %v1869 = vld [vmem:[%s1862 + $0x18] sm:$0xf]
        %v1870 = vld [vmem:[%s1862 + $0x1c] sm:$0xf]
        %v1871 = vld [vmem:[%s1862 + $0x20] sm:$0xf]
        %v1872 = vld [vmem:[%s1862 + $0x24] sm:$0xf]
        %v1873 = vld [vmem:[%s1862 + $0x28] sm:$0xf]
        %v1874 = vld [vmem:[%s1862 + $0x2c] sm:$0xf]
        %v1875 = vld [vmem:[%s1862 + $0x30] sm:$0xf]
        %v1876 = vld [vmem:[%s1862 + $0x34] sm:$0xf]
        %v1877 = vld [vmem:[%s1862 + $0x38] sm:$0xf]
        %v1878 = vld [vmem:[%s1862 + $0x3c] sm:$0xf]
        %v1895 = vunpack.c.l.b16 %v1863
        %v1896 = vunpack.c.l.b16 %v1864
        %v1897 = vunpack.c.l.b16 %v1865
        %v1898 = vunpack.c.l.b16 %v1866
        %v1899 = vunpack.c.l.b16 %v1867
        %v1900 = vunpack.c.l.b16 %v1868
        %v1901 = vunpack.c.l.b16 %v1869
        %v1902 = vunpack.c.l.b16 %v1870
        %v1903 = vunpack.c.l.b16 %v1871
        %v1904 = vunpack.c.l.b16 %v1872
        %v1905 = vunpack.c.l.b16 %v1873
        %v1906 = vunpack.c.l.b16 %v1874
        %v1907 = vunpack.c.l.b16 %v1875
        %v1908 = vunpack.c.l.b16 %v1876
        %v1909 = vunpack.c.l.b16 %v1877
        %v1910 = vunpack.c.l.b16 %v1878
        %v1911 = vpack.c.b16 %v1896, %v1895
        %v1912 = vpack.c.b16 %v1898, %v1897
        %v1913 = vpack.c.b16 %v1900, %v1899
        %v1914 = vpack.c.b16 %v1902, %v1901
        %v1915 = vpack.c.b16 %v1904, %v1903
        %v1916 = vpack.c.b16 %v1906, %v1905
        %v1917 = vpack.c.b16 %v1908, %v1907
        %v1918 = vpack.c.b16 %v1910, %v1909
        %1927 = vmatprep.subr.bf16.mxu0 0
        %1928 = vmatpush1.bf16.msra.mxu0 %v1911
        %1929 = vmatprep.subr.bf16.mxu0 0
        %1930 = vmatpush1.bf16.msra.mxu0 %v1912
        %1931 = vmatprep.subr.bf16.mxu0 0
        %1932 = vmatpush1.bf16.msra.mxu0 %v1913
        %1933 = vmatprep.subr.bf16.mxu0 0
        %1934 = vmatpush1.bf16.msra.mxu0 %v1914
        %1935 = vmatprep.subr.bf16.mxu0 0
        %1936 = vmatpush1.bf16.msra.mxu0 %v1915
        %1937 = vmatprep.subr.bf16.mxu0 0
        %1938 = vmatpush1.bf16.msra.mxu0 %v1916
        %1939 = vmatprep.subr.bf16.mxu0 0
        %1940 = vmatpush1.bf16.msra.mxu0 %v1917
        %1941 = vmatprep.subr.bf16.mxu0 0
        %1942 = vmatpush1.bf16.msra.mxu0 %v1918
        %1943 = vmatprep.subr.bf16.mxu0 0
        %1944 = vmatpush1.bf16.msra.mxu0 0
        %1945 = vmatprep.subr.bf16.mxu0 0
        %1946 = vmatpush1.bf16.msra.mxu0 0
        %1947 = vmatprep.subr.bf16.mxu0 0
        %1948 = vmatpush1.bf16.msra.mxu0 0
        %1949 = vmatprep.subr.bf16.mxu0 0
        %1950 = vmatpush1.bf16.msra.mxu0 0
        %1951 = vmatprep.subr.bf16.mxu0 0
        %1952 = vmatpush1.bf16.msra.mxu0 0
        %1953 = vmatprep.subr.bf16.mxu0 0
        %1954 = vmatpush1.bf16.msra.mxu0 0
        %1955 = vmatprep.subr.bf16.mxu0 0
        %1956 = vmatpush1.bf16.msra.mxu0 0
        %1957 = vmatprep.subr.bf16.mxu0 0
        %1958 = vmatpush1.bf16.msra.mxu0 0
        %1959 = vmatprep.mubr.bf16.mxu0 0
        %1960 = vmatmul.mubr.bf16.gmra.mrb[0].mxu0 %v1846
        %v1961 = vpop.f32.mrb[0].mxu0
        %v1962 = vadd.f32 0.0, %v1961
        %v1963 = vpop.f32.mrb[0].mxu0
        %v1964 = vpop.f32.mrb[0].mxu0
        %v1965 = vadd.f32 0.0, %v1964
        %v1966 = vpop.f32.mrb[0].mxu0
        %1967 = vmatprep.mubr.bf16.mxu0 0
        %1968 = vmatmul.mubr.bf16.gmra.mrb[0].mxu0 %v1847
        %v1969 = vpop.f32.mrb[0].mxu0
        %v1970 = vadd.f32 0.0, %v1969
        %v1971 = vpop.f32.mrb[0].mxu0
        %v1972 = vpop.f32.mrb[0].mxu0
        %v1973 = vadd.f32 0.0, %v1972
        %v1974 = vpop.f32.mrb[0].mxu0
        %1975 = vmatprep.mubr.bf16.mxu0 0
        %1976 = vmatmul.mubr.bf16.gmra.mrb[0].mxu0 %v1848
        %v1977 = vpop.f32.mrb[0].mxu0
        %v1978 = vadd.f32 0.0, %v1977
        %v1979 = vpop.f32.mrb[0].mxu0
        %v1980 = vpop.f32.mrb[0].mxu0
        %v1981 = vadd.f32 0.0, %v1980
        %v1982 = vpop.f32.mrb[0].mxu0
        %1983 = vmatprep.mubr.bf16.mxu0 0
        %1984 = vmatmul.mubr.bf16.gmra.mrb[0].mxu0 %v1849
        %v1985 = vpop.f32.mrb[0].mxu0
        %v1986 = vadd.f32 0.0, %v1985
        %v1987 = vpop.f32.mrb[0].mxu0
        %v1988 = vpop.f32.mrb[0].mxu0
        %v1989 = vadd.f32 0.0, %v1988
        %v1990 = vpop.f32.mrb[0].mxu0
        %1991 = vmatprep.mubr.bf16.mxu0 0
        %1992 = vmatmul.mubr.bf16.gmra.mrb[0].mxu0 %v1850
        %v1993 = vpop.f32.mrb[0].mxu0
        %v1994 = vadd.f32 0.0, %v1993
        %v1995 = vpop.f32.mrb[0].mxu0
        %v1996 = vpop.f32.mrb[0].mxu0
        %v1997 = vadd.f32 0.0, %v1996
        %v1998 = vpop.f32.mrb[0].mxu0
        %1999 = vmatprep.mubr.bf16.mxu0 0
        %2000 = vmatmul.mubr.bf16.gmra.mrb[0].mxu0 %v1851
        %v2001 = vpop.f32.mrb[0].mxu0
        %v2002 = vadd.f32 0.0, %v2001
        %v2003 = vpop.f32.mrb[0].mxu0
        %v2004 = vpop.f32.mrb[0].mxu0
        %v2005 = vadd.f32 0.0, %v2004
        %v2006 = vpop.f32.mrb[0].mxu0
        %2007 = vmatprep.mubr.bf16.mxu0 0
        %2008 = vmatmul.mubr.bf16.gmra.mrb[0].mxu0 %v1852
        %v2009 = vpop.f32.mrb[0].mxu0
        %v2010 = vadd.f32 0.0, %v2009
        %v2011 = vpop.f32.mrb[0].mxu0
        %v2012 = vpop.f32.mrb[0].mxu0
        %v2013 = vadd.f32 0.0, %v2012
        %v2014 = vpop.f32.mrb[0].mxu0
        %2015 = vmatprep.mubr.bf16.mxu0 0
        %2016 = vmatmul.mubr.bf16.gmra.mrb[0].mxu0 %v1853
        %v2017 = vpop.f32.mrb[0].mxu0
        %v2018 = vadd.f32 0.0, %v2017
        %v2019 = vpop.f32.mrb[0].mxu0
        %v2020 = vpop.f32.mrb[0].mxu0
        %v2021 = vadd.f32 0.0, %v2020
        %v2022 = vpop.f32.mrb[0].mxu0
        %2023 = vmatprep.mubr.bf16.mxu0 0
        %2024 = vmatmul.mubr.bf16.gmra.mrb[0].mxu0 %v1854
        %v2025 = vpop.f32.mrb[0].mxu0
        %v2026 = vadd.f32 0.0, %v2025
        %v2027 = vpop.f32.mrb[0].mxu0
        %v2028 = vpop.f32.mrb[0].mxu0
        %v2029 = vadd.f32 0.0, %v2028
        %v2030 = vpop.f32.mrb[0].mxu0
        %2031 = vmatprep.mubr.bf16.mxu0 0
        %2032 = vmatmul.mubr.bf16.gmra.mrb[0].mxu0 %v1855
        %v2033 = vpop.f32.mrb[0].mxu0
        %v2034 = vadd.f32 0.0, %v2033
        %v2035 = vpop.f32.mrb[0].mxu0
        %v2036 = vpop.f32.mrb[0].mxu0
        %v2037 = vadd.f32 0.0, %v2036
        %v2038 = vpop.f32.mrb[0].mxu0
        %2039 = vmatprep.mubr.bf16.mxu0 0
        %2040 = vmatmul.mubr.bf16.gmra.mrb[0].mxu0 %v1856
        %v2041 = vpop.f32.mrb[0].mxu0
        %v2042 = vadd.f32 0.0, %v2041
        %v2043 = vpop.f32.mrb[0].mxu0
        %v2044 = vpop.f32.mrb[0].mxu0
        %v2045 = vadd.f32 0.0, %v2044
        %v2046 = vpop.f32.mrb[0].mxu0
        %2047 = vmatprep.mubr.bf16.mxu0 0
        %2048 = vmatmul.mubr.bf16.gmra.mrb[0].mxu0 %v1857
        %v2049 = vpop.f32.mrb[0].mxu0
        %v2050 = vadd.f32 0.0, %v2049
        %v2051 = vpop.f32.mrb[0].mxu0
        %v2052 = vpop.f32.mrb[0].mxu0
        %v2053 = vadd.f32 0.0, %v2052
        %v2054 = vpop.f32.mrb[0].mxu0
        %2055 = vmatprep.mubr.bf16.mxu0 0
        %2056 = vmatmul.mubr.bf16.gmra.mrb[0].mxu0 %v1858
        %v2057 = vpop.f32.mrb[0].mxu0
        %v2058 = vadd.f32 0.0, %v2057
        %v2059 = vpop.f32.mrb[0].mxu0
        %v2060 = vpop.f32.mrb[0].mxu0
        %v2061 = vadd.f32 0.0, %v2060
        %v2062 = vpop.f32.mrb[0].mxu0
        %2063 = vmatprep.mubr.bf16.mxu0 0
        %2064 = vmatmul.mubr.bf16.gmra.mrb[0].mxu0 %v1859
        %v2065 = vpop.f32.mrb[0].mxu0
        %v2066 = vadd.f32 0.0, %v2065
        %v2067 = vpop.f32.mrb[0].mxu0
        %v2068 = vpop.f32.mrb[0].mxu0
        %v2069 = vadd.f32 0.0, %v2068
        %v2070 = vpop.f32.mrb[0].mxu0
        %2071 = vmatprep.mubr.bf16.mxu0 0
        %2072 = vmatmul.mubr.bf16.gmra.mrb[0].mxu0 %v1860
        %v2073 = vpop.f32.mrb[0].mxu0
        %v2074 = vadd.f32 0.0, %v2073
        %v2075 = vpop.f32.mrb[0].mxu0
        %v2076 = vpop.f32.mrb[0].mxu0
        %v2077 = vadd.f32 0.0, %v2076
        %v2078 = vpop.f32.mrb[0].mxu0
        %2079 = vmatprep.mubr.bf16.mxu0 0
        %2080 = vmatmul.mubr.bf16.gmra.mrb[0].mxu0 %v1861
        %v2081 = vpop.f32.mrb[0].mxu0
        %v2082 = vadd.f32 0.0, %v2081
        %v2083 = vpop.f32.mrb[0].mxu0
        %v2084 = vpop.f32.mrb[0].mxu0
        %v2085 = vadd.f32 0.0, %v2084
        %v2086 = vpop.f32.mrb[0].mxu0
        %2087 = vdwg.mxu0
        %v2088 = vadd.f32 %v1782, %v1962
        %v2089 = vadd.f32 %v1783, %v1965
        %v2090 = vadd.f32 %v1784, %v1970
        %v2091 = vadd.f32 %v1785, %v1973
        %v2092 = vadd.f32 %v1786, %v1978
        %v2093 = vadd.f32 %v1787, %v1981
        %v2094 = vadd.f32 %v1788, %v1986
        %v2095 = vadd.f32 %v1789, %v1989
        %v2096 = vadd.f32 %v1790, %v1994
        %v2097 = vadd.f32 %v1791, %v1997
        %v2098 = vadd.f32 %v1792, %v2002
        %v2099 = vadd.f32 %v1793, %v2005
        %v2100 = vadd.f32 %v1794, %v2010
        %v2101 = vadd.f32 %v1795, %v2013
        %v2102 = vadd.f32 %v1796, %v2018
        %v2103 = vadd.f32 %v1797, %v2021
        %v2104 = vadd.f32 %v1798, %v2026
        %v2105 = vadd.f32 %v1799, %v2029
        %v2106 = vadd.f32 %v1800, %v2034
        %v2107 = vadd.f32 %v1801, %v2037
        %v2108 = vadd.f32 %v1802, %v2042
        %v2109 = vadd.f32 %v1803, %v2045
        %v2110 = vadd.f32 %v1804, %v2050
        %v2111 = vadd.f32 %v1805, %v2053
        %v2112 = vadd.f32 %v1806, %v2058
        %v2113 = vadd.f32 %v1807, %v2061
        %v2114 = vadd.f32 %v1808, %v2066
        %v2115 = vadd.f32 %v1809, %v2069
        %v2116 = vadd.f32 %v1810, %v2074
        %v2117 = vadd.f32 %v1811, %v2077
        %v2118 = vadd.f32 %v1812, %v2082
        %v2119 = vadd.f32 %v1813, %v2085
        %v2120 = vld [vmem:[%s912 + $0x1] sm:$0xff]
        %v2121 = vld [vmem:[%s912 + $0x9] sm:$0xff]
        %v2122 = vld [vmem:[%s912 + $0x19] sm:$0xff]
        %v2123 = vld [vmem:[%s912 + $0x21] sm:$0xff]
        %v2124 = vld [vmem:[%s912 + $0x31] sm:$0xff]
        %v2125 = vld [vmem:[%s912 + $0x39] sm:$0xff]
        %v2126 = vld [vmem:[%s912 + $0x49] sm:$0xff]
        %v2127 = vld [vmem:[%s912 + $0x51] sm:$0xff]
        %v2128 = vld [vmem:[%s912 + $0x61] sm:$0xff]
        %v2129 = vld [vmem:[%s912 + $0x69] sm:$0xff]
        %v2130 = vld [vmem:[%s912 + $0x79] sm:$0xff]
        %v2131 = vld [vmem:[%s912 + $0x81] sm:$0xff]
        %v2132 = vld [vmem:[%s912 + $0x91] sm:$0xff]
        %v2133 = vld [vmem:[%s912 + $0x99] sm:$0xff]
        %v2134 = vld [vmem:[%s912 + $0xa9] sm:$0xff]
        %v2135 = vld [vmem:[%s912 + $0xb1] sm:$0xff]
        %v2136 = vld [vmem:[%s912 + $0xc1] sm:$0xff]
        %v2137 = vld [vmem:[%s912 + $0xc9] sm:$0xff]
        %v2138 = vld [vmem:[%s912 + $0xd9] sm:$0xff]
        %v2139 = vld [vmem:[%s912 + $0xe1] sm:$0xff]
        %v2140 = vld [vmem:[%s912 + $0xf1] sm:$0xff]
        %v2141 = vld [vmem:[%s912 + $0xf9] sm:$0xff]
        %v2142 = vld [vmem:[%s912 + $0x109] sm:$0xff]
        %v2143 = vld [vmem:[%s912 + $0x111] sm:$0xff]
        %v2144 = vld [vmem:[%s912 + $0x121] sm:$0xff]
        %v2145 = vld [vmem:[%s912 + $0x129] sm:$0xff]
        %v2146 = vld [vmem:[%s912 + $0x139] sm:$0xff]
        %v2147 = vld [vmem:[%s912 + $0x141] sm:$0xff]
        %v2148 = vld [vmem:[%s912 + $0x151] sm:$0xff]
        %v2149 = vld [vmem:[%s912 + $0x159] sm:$0xff]
        %v2150 = vld [vmem:[%s912 + $0x169] sm:$0xff]
        %v2151 = vld [vmem:[%s912 + $0x171] sm:$0xff]
        %v2152 = vpack.c.bf16 %v2121, %v2120
        %v2153 = vpack.c.bf16 %v2123, %v2122
        %v2154 = vpack.c.bf16 %v2125, %v2124
        %v2155 = vpack.c.bf16 %v2127, %v2126
        %v2156 = vpack.c.bf16 %v2129, %v2128
        %v2157 = vpack.c.bf16 %v2131, %v2130
        %v2158 = vpack.c.bf16 %v2133, %v2132
        %v2159 = vpack.c.bf16 %v2135, %v2134
        %v2160 = vpack.c.bf16 %v2137, %v2136
        %v2161 = vpack.c.bf16 %v2139, %v2138
        %v2162 = vpack.c.bf16 %v2141, %v2140
        %v2163 = vpack.c.bf16 %v2143, %v2142
        %v2164 = vpack.c.bf16 %v2145, %v2144
        %v2165 = vpack.c.bf16 %v2147, %v2146
        %v2166 = vpack.c.bf16 %v2149, %v2148
        %v2167 = vpack.c.bf16 %v2151, %v2150
        %s2168 = scalar_lea.vmem [#allocation9], 256
        %v2169 = vld [vmem:[%s2168] sm:$0xf]
        %v2170 = vld [vmem:[%s2168 + $0x4] sm:$0xf]
        %v2171 = vld [vmem:[%s2168 + $0x8] sm:$0xf]
        %v2172 = vld [vmem:[%s2168 + $0xc] sm:$0xf]
        %v2173 = vld [vmem:[%s2168 + $0x10] sm:$0xf]
        %v2174 = vld [vmem:[%s2168 + $0x14] sm:$0xf]
        %v2175 = vld [vmem:[%s2168 + $0x18] sm:$0xf]
        %v2176 = vld [vmem:[%s2168 + $0x1c] sm:$0xf]
        %v2177 = vld [vmem:[%s2168 + $0x20] sm:$0xf]
        %v2178 = vld [vmem:[%s2168 + $0x24] sm:$0xf]
        %v2179 = vld [vmem:[%s2168 + $0x28] sm:$0xf]
        %v2180 = vld [vmem:[%s2168 + $0x2c] sm:$0xf]
        %v2181 = vld [vmem:[%s2168 + $0x30] sm:$0xf]
        %v2182 = vld [vmem:[%s2168 + $0x34] sm:$0xf]
        %v2183 = vld [vmem:[%s2168 + $0x38] sm:$0xf]
        %v2184 = vld [vmem:[%s2168 + $0x3c] sm:$0xf]
        %v2201 = vunpack.c.l.b16 %v2169
        %v2202 = vunpack.c.l.b16 %v2170
        %v2203 = vunpack.c.l.b16 %v2171
        %v2204 = vunpack.c.l.b16 %v2172
        %v2205 = vunpack.c.l.b16 %v2173
        %v2206 = vunpack.c.l.b16 %v2174
        %v2207 = vunpack.c.l.b16 %v2175
        %v2208 = vunpack.c.l.b16 %v2176
        %v2209 = vunpack.c.l.b16 %v2177
        %v2210 = vunpack.c.l.b16 %v2178
        %v2211 = vunpack.c.l.b16 %v2179
        %v2212 = vunpack.c.l.b16 %v2180
        %v2213 = vunpack.c.l.b16 %v2181
        %v2214 = vunpack.c.l.b16 %v2182
        %v2215 = vunpack.c.l.b16 %v2183
        %v2216 = vunpack.c.l.b16 %v2184
        %v2217 = vpack.c.b16 %v2202, %v2201
        %v2218 = vpack.c.b16 %v2204, %v2203
        %v2219 = vpack.c.b16 %v2206, %v2205
        %v2220 = vpack.c.b16 %v2208, %v2207
        %v2221 = vpack.c.b16 %v2210, %v2209
        %v2222 = vpack.c.b16 %v2212, %v2211
        %v2223 = vpack.c.b16 %v2214, %v2213
        %v2224 = vpack.c.b16 %v2216, %v2215
        %2233 = vmatprep.subr.bf16.mxu0 0
        %2234 = vmatpush1.bf16.msra.mxu0 %v2217
        %2235 = vmatprep.subr.bf16.mxu0 0
        %2236 = vmatpush1.bf16.msra.mxu0 %v2218
        %2237 = vmatprep.subr.bf16.mxu0 0
        %2238 = vmatpush1.bf16.msra.mxu0 %v2219
        %2239 = vmatprep.subr.bf16.mxu0 0
        %2240 = vmatpush1.bf16.msra.mxu0 %v2220
        %2241 = vmatprep.subr.bf16.mxu0 0
        %2242 = vmatpush1.bf16.msra.mxu0 %v2221
        %2243 = vmatprep.subr.bf16.mxu0 0
        %2244 = vmatpush1.bf16.msra.mxu0 %v2222
        %2245 = vmatprep.subr.bf16.mxu0 0
        %2246 = vmatpush1.bf16.msra.mxu0 %v2223
        %2247 = vmatprep.subr.bf16.mxu0 0
        %2248 = vmatpush1.bf16.msra.mxu0 %v2224
        %2249 = vmatprep.subr.bf16.mxu0 0
        %2250 = vmatpush1.bf16.msra.mxu0 0
        %2251 = vmatprep.subr.bf16.mxu0 0
        %2252 = vmatpush1.bf16.msra.mxu0 0
        %2253 = vmatprep.subr.bf16.mxu0 0
        %2254 = vmatpush1.bf16.msra.mxu0 0
        %2255 = vmatprep.subr.bf16.mxu0 0
        %2256 = vmatpush1.bf16.msra.mxu0 0
        %2257 = vmatprep.subr.bf16.mxu0 0
        %2258 = vmatpush1.bf16.msra.mxu0 0
        %2259 = vmatprep.subr.bf16.mxu0 0
        %2260 = vmatpush1.bf16.msra.mxu0 0
        %2261 = vmatprep.subr.bf16.mxu0 0
        %2262 = vmatpush1.bf16.msra.mxu0 0
        %2263 = vmatprep.subr.bf16.mxu0 0
        %2264 = vmatpush1.bf16.msra.mxu0 0
        %2265 = vmatprep.mubr.bf16.mxu0 0
        %2266 = vmatmul.mubr.bf16.gmra.mrb[0].mxu0 %v2152
        %v2267 = vpop.f32.mrb[0].mxu0
        %v2268 = vadd.f32 0.0, %v2267
        %v2269 = vpop.f32.mrb[0].mxu0
        %v2270 = vpop.f32.mrb[0].mxu0
        %v2271 = vadd.f32 0.0, %v2270
        %v2272 = vpop.f32.mrb[0].mxu0
        %2273 = vmatprep.mubr.bf16.mxu0 0
        %2274 = vmatmul.mubr.bf16.gmra.mrb[0].mxu0 %v2153
        %v2275 = vpop.f32.mrb[0].mxu0
        %v2276 = vadd.f32 0.0, %v2275
        %v2277 = vpop.f32.mrb[0].mxu0
        %v2278 = vpop.f32.mrb[0].mxu0
        %v2279 = vadd.f32 0.0, %v2278
        %v2280 = vpop.f32.mrb[0].mxu0
        %2281 = vmatprep.mubr.bf16.mxu0 0
        %2282 = vmatmul.mubr.bf16.gmra.mrb[0].mxu0 %v2154
        %v2283 = vpop.f32.mrb[0].mxu0
        %v2284 = vadd.f32 0.0, %v2283
        %v2285 = vpop.f32.mrb[0].mxu0
        %v2286 = vpop.f32.mrb[0].mxu0
        %v2287 = vadd.f32 0.0, %v2286
        %v2288 = vpop.f32.mrb[0].mxu0
        %2289 = vmatprep.mubr.bf16.mxu0 0
        %2290 = vmatmul.mubr.bf16.gmra.mrb[0].mxu0 %v2155
        %v2291 = vpop.f32.mrb[0].mxu0
        %v2292 = vadd.f32 0.0, %v2291
        %v2293 = vpop.f32.mrb[0].mxu0
        %v2294 = vpop.f32.mrb[0].mxu0
        %v2295 = vadd.f32 0.0, %v2294
        %v2296 = vpop.f32.mrb[0].mxu0
        %2297 = vmatprep.mubr.bf16.mxu0 0
        %2298 = vmatmul.mubr.bf16.gmra.mrb[0].mxu0 %v2156
        %v2299 = vpop.f32.mrb[0].mxu0
        %v2300 = vadd.f32 0.0, %v2299
        %v2301 = vpop.f32.mrb[0].mxu0
        %v2302 = vpop.f32.mrb[0].mxu0
        %v2303 = vadd.f32 0.0, %v2302
        %v2304 = vpop.f32.mrb[0].mxu0
        %2305 = vmatprep.mubr.bf16.mxu0 0
        %2306 = vmatmul.mubr.bf16.gmra.mrb[0].mxu0 %v2157
        %v2307 = vpop.f32.mrb[0].mxu0
        %v2308 = vadd.f32 0.0, %v2307
        %v2309 = vpop.f32.mrb[0].mxu0
        %v2310 = vpop.f32.mrb[0].mxu0
        %v2311 = vadd.f32 0.0, %v2310
        %v2312 = vpop.f32.mrb[0].mxu0
        %2313 = vmatprep.mubr.bf16.mxu0 0
        %2314 = vmatmul.mubr.bf16.gmra.mrb[0].mxu0 %v2158
        %v2315 = vpop.f32.mrb[0].mxu0
        %v2316 = vadd.f32 0.0, %v2315
        %v2317 = vpop.f32.mrb[0].mxu0
        %v2318 = vpop.f32.mrb[0].mxu0
        %v2319 = vadd.f32 0.0, %v2318
        %v2320 = vpop.f32.mrb[0].mxu0
        %2321 = vmatprep.mubr.bf16.mxu0 0
        %2322 = vmatmul.mubr.bf16.gmra.mrb[0].mxu0 %v2159
        %v2323 = vpop.f32.mrb[0].mxu0
        %v2324 = vadd.f32 0.0, %v2323
        %v2325 = vpop.f32.mrb[0].mxu0
        %v2326 = vpop.f32.mrb[0].mxu0
        %v2327 = vadd.f32 0.0, %v2326
        %v2328 = vpop.f32.mrb[0].mxu0
        %2329 = vmatprep.mubr.bf16.mxu0 0
        %2330 = vmatmul.mubr.bf16.gmra.mrb[0].mxu0 %v2160
        %v2331 = vpop.f32.mrb[0].mxu0
        %v2332 = vadd.f32 0.0, %v2331
        %v2333 = vpop.f32.mrb[0].mxu0
        %v2334 = vpop.f32.mrb[0].mxu0
        %v2335 = vadd.f32 0.0, %v2334
        %v2336 = vpop.f32.mrb[0].mxu0
        %2337 = vmatprep.mubr.bf16.mxu0 0
        %2338 = vmatmul.mubr.bf16.gmra.mrb[0].mxu0 %v2161
        %v2339 = vpop.f32.mrb[0].mxu0
        %v2340 = vadd.f32 0.0, %v2339
        %v2341 = vpop.f32.mrb[0].mxu0
        %v2342 = vpop.f32.mrb[0].mxu0
        %v2343 = vadd.f32 0.0, %v2342
        %v2344 = vpop.f32.mrb[0].mxu0
        %2345 = vmatprep.mubr.bf16.mxu0 0
        %2346 = vmatmul.mubr.bf16.gmra.mrb[0].mxu0 %v2162
        %v2347 = vpop.f32.mrb[0].mxu0
        %v2348 = vadd.f32 0.0, %v2347
        %v2349 = vpop.f32.mrb[0].mxu0
        %v2350 = vpop.f32.mrb[0].mxu0
        %v2351 = vadd.f32 0.0, %v2350
        %v2352 = vpop.f32.mrb[0].mxu0
        %2353 = vmatprep.mubr.bf16.mxu0 0
        %2354 = vmatmul.mubr.bf16.gmra.mrb[0].mxu0 %v2163
        %v2355 = vpop.f32.mrb[0].mxu0
        %v2356 = vadd.f32 0.0, %v2355
        %v2357 = vpop.f32.mrb[0].mxu0
        %v2358 = vpop.f32.mrb[0].mxu0
        %v2359 = vadd.f32 0.0, %v2358
        %v2360 = vpop.f32.mrb[0].mxu0
        %2361 = vmatprep.mubr.bf16.mxu0 0
        %2362 = vmatmul.mubr.bf16.gmra.mrb[0].mxu0 %v2164
        %v2363 = vpop.f32.mrb[0].mxu0
        %v2364 = vadd.f32 0.0, %v2363
        %v2365 = vpop.f32.mrb[0].mxu0
        %v2366 = vpop.f32.mrb[0].mxu0
        %v2367 = vadd.f32 0.0, %v2366
        %v2368 = vpop.f32.mrb[0].mxu0
        %2369 = vmatprep.mubr.bf16.mxu0 0
        %2370 = vmatmul.mubr.bf16.gmra.mrb[0].mxu0 %v2165
        %v2371 = vpop.f32.mrb[0].mxu0
        %v2372 = vadd.f32 0.0, %v2371
        %v2373 = vpop.f32.mrb[0].mxu0
        %v2374 = vpop.f32.mrb[0].mxu0
        %v2375 = vadd.f32 0.0, %v2374
        %v2376 = vpop.f32.mrb[0].mxu0
        %2377 = vmatprep.mubr.bf16.mxu0 0
        %2378 = vmatmul.mubr.bf16.gmra.mrb[0].mxu0 %v2166
        %v2379 = vpop.f32.mrb[0].mxu0
        %v2380 = vadd.f32 0.0, %v2379
        %v2381 = vpop.f32.mrb[0].mxu0
        %v2382 = vpop.f32.mrb[0].mxu0
        %v2383 = vadd.f32 0.0, %v2382
        %v2384 = vpop.f32.mrb[0].mxu0
        %2385 = vmatprep.mubr.bf16.mxu0 0
        %2386 = vmatmul.mubr.bf16.gmra.mrb[0].mxu0 %v2167
        %v2387 = vpop.f32.mrb[0].mxu0
        %v2388 = vadd.f32 0.0, %v2387
        %v2389 = vpop.f32.mrb[0].mxu0
        %v2390 = vpop.f32.mrb[0].mxu0
        %v2391 = vadd.f32 0.0, %v2390
        %v2392 = vpop.f32.mrb[0].mxu0
        %2393 = vdwg.mxu0
        %v2394 = vadd.f32 %v2088, %v2268
        %v2395 = vadd.f32 %v2089, %v2271
        %v2396 = vadd.f32 %v2090, %v2276
        %v2397 = vadd.f32 %v2091, %v2279
        %v2398 = vadd.f32 %v2092, %v2284
        %v2399 = vadd.f32 %v2093, %v2287
        %v2400 = vadd.f32 %v2094, %v2292
        %v2401 = vadd.f32 %v2095, %v2295
        %v2402 = vadd.f32 %v2096, %v2300
        %v2403 = vadd.f32 %v2097, %v2303
        %v2404 = vadd.f32 %v2098, %v2308
        %v2405 = vadd.f32 %v2099, %v2311
        %v2406 = vadd.f32 %v2100, %v2316
        %v2407 = vadd.f32 %v2101, %v2319
        %v2408 = vadd.f32 %v2102, %v2324
        %v2409 = vadd.f32 %v2103, %v2327
        %v2410 = vadd.f32 %v2104, %v2332
        %v2411 = vadd.f32 %v2105, %v2335
        %v2412 = vadd.f32 %v2106, %v2340
        %v2413 = vadd.f32 %v2107, %v2343
        %v2414 = vadd.f32 %v2108, %v2348
        %v2415 = vadd.f32 %v2109, %v2351
        %v2416 = vadd.f32 %v2110, %v2356
        %v2417 = vadd.f32 %v2111, %v2359
        %v2418 = vadd.f32 %v2112, %v2364
        %v2419 = vadd.f32 %v2113, %v2367
        %v2420 = vadd.f32 %v2114, %v2372
        %v2421 = vadd.f32 %v2115, %v2375
        %v2422 = vadd.f32 %v2116, %v2380
        %v2423 = vadd.f32 %v2117, %v2383
        %v2424 = vadd.f32 %v2118, %v2388
        %v2425 = vadd.f32 %v2119, %v2391
        %v2426 = vld [vmem:[%s912 + $0x2] sm:$0xff]
        %v2427 = vld [vmem:[%s912 + $0xa] sm:$0xff]
        %v2428 = vld [vmem:[%s912 + $0x1a] sm:$0xff]
        %v2429 = vld [vmem:[%s912 + $0x22] sm:$0xff]
        %v2430 = vld [vmem:[%s912 + $0x32] sm:$0xff]
        %v2431 = vld [vmem:[%s912 + $0x3a] sm:$0xff]
        %v2432 = vld [vmem:[%s912 + $0x4a] sm:$0xff]
        %v2433 = vld [vmem:[%s912 + $0x52] sm:$0xff]
        %v2434 = vld [vmem:[%s912 + $0x62] sm:$0xff]
        %v2435 = vld [vmem:[%s912 + $0x6a] sm:$0xff]
        %v2436 = vld [vmem:[%s912 + $0x7a] sm:$0xff]
        %v2437 = vld [vmem:[%s912 + $0x82] sm:$0xff]
        %v2438 = vld [vmem:[%s912 + $0x92] sm:$0xff]
        %v2439 = vld [vmem:[%s912 + $0x9a] sm:$0xff]
        %v2440 = vld [vmem:[%s912 + $0xaa] sm:$0xff]
        %v2441 = vld [vmem:[%s912 + $0xb2] sm:$0xff]
        %v2442 = vld [vmem:[%s912 + $0xc2] sm:$0xff]
        %v2443 = vld [vmem:[%s912 + $0xca] sm:$0xff]
        %v2444 = vld [vmem:[%s912 + $0xda] sm:$0xff]
        %v2445 = vld [vmem:[%s912 + $0xe2] sm:$0xff]
        %v2446 = vld [vmem:[%s912 + $0xf2] sm:$0xff]
        %v2447 = vld [vmem:[%s912 + $0xfa] sm:$0xff]
        %v2448 = vld [vmem:[%s912 + $0x10a] sm:$0xff]
        %v2449 = vld [vmem:[%s912 + $0x112] sm:$0xff]
        %v2450 = vld [vmem:[%s912 + $0x122] sm:$0xff]
        %v2451 = vld [vmem:[%s912 + $0x12a] sm:$0xff]
        %v2452 = vld [vmem:[%s912 + $0x13a] sm:$0xff]
        %v2453 = vld [vmem:[%s912 + $0x142] sm:$0xff]
        %v2454 = vld [vmem:[%s912 + $0x152] sm:$0xff]
        %v2455 = vld [vmem:[%s912 + $0x15a] sm:$0xff]
        %v2456 = vld [vmem:[%s912 + $0x16a] sm:$0xff]
        %v2457 = vld [vmem:[%s912 + $0x172] sm:$0xff]
        %v2458 = vpack.c.bf16 %v2427, %v2426
        %v2459 = vpack.c.bf16 %v2429, %v2428
        %v2460 = vpack.c.bf16 %v2431, %v2430
        %v2461 = vpack.c.bf16 %v2433, %v2432
        %v2462 = vpack.c.bf16 %v2435, %v2434
        %v2463 = vpack.c.bf16 %v2437, %v2436
        %v2464 = vpack.c.bf16 %v2439, %v2438
        %v2465 = vpack.c.bf16 %v2441, %v2440
        %v2466 = vpack.c.bf16 %v2443, %v2442
        %v2467 = vpack.c.bf16 %v2445, %v2444
        %v2468 = vpack.c.bf16 %v2447, %v2446
        %v2469 = vpack.c.bf16 %v2449, %v2448
        %v2470 = vpack.c.bf16 %v2451, %v2450
        %v2471 = vpack.c.bf16 %v2453, %v2452
        %v2472 = vpack.c.bf16 %v2455, %v2454
        %v2473 = vpack.c.bf16 %v2457, %v2456
        %s2474 = scalar_lea.vmem [#allocation9], 320
        %v2475 = vld [vmem:[%s2474] sm:$0xf]
        %v2476 = vld [vmem:[%s2474 + $0x4] sm:$0xf]
        %v2477 = vld [vmem:[%s2474 + $0x8] sm:$0xf]
        %v2478 = vld [vmem:[%s2474 + $0xc] sm:$0xf]
        %v2479 = vld [vmem:[%s2474 + $0x10] sm:$0xf]
        %v2480 = vld [vmem:[%s2474 + $0x14] sm:$0xf]
        %v2481 = vld [vmem:[%s2474 + $0x18] sm:$0xf]
        %v2482 = vld [vmem:[%s2474 + $0x1c] sm:$0xf]
        %v2483 = vld [vmem:[%s2474 + $0x20] sm:$0xf]
        %v2484 = vld [vmem:[%s2474 + $0x24] sm:$0xf]
        %v2485 = vld [vmem:[%s2474 + $0x28] sm:$0xf]
        %v2486 = vld [vmem:[%s2474 + $0x2c] sm:$0xf]
        %v2487 = vld [vmem:[%s2474 + $0x30] sm:$0xf]
        %v2488 = vld [vmem:[%s2474 + $0x34] sm:$0xf]
        %v2489 = vld [vmem:[%s2474 + $0x38] sm:$0xf]
        %v2490 = vld [vmem:[%s2474 + $0x3c] sm:$0xf]
        %v2507 = vunpack.c.l.b16 %v2475
        %v2508 = vunpack.c.l.b16 %v2476
        %v2509 = vunpack.c.l.b16 %v2477
        %v2510 = vunpack.c.l.b16 %v2478
        %v2511 = vunpack.c.l.b16 %v2479
        %v2512 = vunpack.c.l.b16 %v2480
        %v2513 = vunpack.c.l.b16 %v2481
        %v2514 = vunpack.c.l.b16 %v2482
        %v2515 = vunpack.c.l.b16 %v2483
        %v2516 = vunpack.c.l.b16 %v2484
        %v2517 = vunpack.c.l.b16 %v2485
        %v2518 = vunpack.c.l.b16 %v2486
        %v2519 = vunpack.c.l.b16 %v2487
        %v2520 = vunpack.c.l.b16 %v2488
        %v2521 = vunpack.c.l.b16 %v2489
        %v2522 = vunpack.c.l.b16 %v2490
        %v2523 = vpack.c.b16 %v2508, %v2507
        %v2524 = vpack.c.b16 %v2510, %v2509
        %v2525 = vpack.c.b16 %v2512, %v2511
        %v2526 = vpack.c.b16 %v2514, %v2513
        %v2527 = vpack.c.b16 %v2516, %v2515
        %v2528 = vpack.c.b16 %v2518, %v2517
        %v2529 = vpack.c.b16 %v2520, %v2519
        %v2530 = vpack.c.b16 %v2522, %v2521
        %2539 = vmatprep.subr.bf16.mxu0 0
        %2540 = vmatpush1.bf16.msra.mxu0 %v2523
        %2541 = vmatprep.subr.bf16.mxu0 0
        %2542 = vmatpush1.bf16.msra.mxu0 %v2524
        %2543 = vmatprep.subr.bf16.mxu0 0
        %2544 = vmatpush1.bf16.msra.mxu0 %v2525
        %2545 = vmatprep.subr.bf16.mxu0 0
        %2546 = vmatpush1.bf16.msra.mxu0 %v2526
        %2547 = vmatprep.subr.bf16.mxu0 0
        %2548 = vmatpush1.bf16.msra.mxu0 %v2527
        %2549 = vmatprep.subr.bf16.mxu0 0
        %2550 = vmatpush1.bf16.msra.mxu0 %v2528
        %2551 = vmatprep.subr.bf16.mxu0 0
        %2552 = vmatpush1.bf16.msra.mxu0 %v2529
        %2553 = vmatprep.subr.bf16.mxu0 0
        %2554 = vmatpush1.bf16.msra.mxu0 %v2530
        %2555 = vmatprep.subr.bf16.mxu0 0
        %2556 = vmatpush1.bf16.msra.mxu0 0
        %2557 = vmatprep.subr.bf16.mxu0 0
        %2558 = vmatpush1.bf16.msra.mxu0 0
        %2559 = vmatprep.subr.bf16.mxu0 0
        %2560 = vmatpush1.bf16.msra.mxu0 0
        %2561 = vmatprep.subr.bf16.mxu0 0
        %2562 = vmatpush1.bf16.msra.mxu0 0
        %2563 = vmatprep.subr.bf16.mxu0 0
        %2564 = vmatpush1.bf16.msra.mxu0 0
        %2565 = vmatprep.subr.bf16.mxu0 0
        %2566 = vmatpush1.bf16.msra.mxu0 0
        %2567 = vmatprep.subr.bf16.mxu0 0
        %2568 = vmatpush1.bf16.msra.mxu0 0
        %2569 = vmatprep.subr.bf16.mxu0 0
        %2570 = vmatpush1.bf16.msra.mxu0 0
        %2571 = vmatprep.mubr.bf16.mxu0 0
        %2572 = vmatmul.mubr.bf16.gmra.mrb[0].mxu0 %v2458
        %v2573 = vpop.f32.mrb[0].mxu0
        %v2574 = vadd.f32 0.0, %v2573
        %v2575 = vpop.f32.mrb[0].mxu0
        %v2576 = vpop.f32.mrb[0].mxu0
        %v2577 = vadd.f32 0.0, %v2576
        %v2578 = vpop.f32.mrb[0].mxu0
        %2579 = vmatprep.mubr.bf16.mxu0 0
        %2580 = vmatmul.mubr.bf16.gmra.mrb[0].mxu0 %v2459
        %v2581 = vpop.f32.mrb[0].mxu0
        %v2582 = vadd.f32 0.0, %v2581
        %v2583 = vpop.f32.mrb[0].mxu0
        %v2584 = vpop.f32.mrb[0].mxu0
        %v2585 = vadd.f32 0.0, %v2584
        %v2586 = vpop.f32.mrb[0].mxu0
        %2587 = vmatprep.mubr.bf16.mxu0 0
        %2588 = vmatmul.mubr.bf16.gmra.mrb[0].mxu0 %v2460
        %v2589 = vpop.f32.mrb[0].mxu0
        %v2590 = vadd.f32 0.0, %v2589
        %v2591 = vpop.f32.mrb[0].mxu0
        %v2592 = vpop.f32.mrb[0].mxu0
        %v2593 = vadd.f32 0.0, %v2592
        %v2594 = vpop.f32.mrb[0].mxu0
        %2595 = vmatprep.mubr.bf16.mxu0 0
        %2596 = vmatmul.mubr.bf16.gmra.mrb[0].mxu0 %v2461
        %v2597 = vpop.f32.mrb[0].mxu0
        %v2598 = vadd.f32 0.0, %v2597
        %v2599 = vpop.f32.mrb[0].mxu0
        %v2600 = vpop.f32.mrb[0].mxu0
        %v2601 = vadd.f32 0.0, %v2600
        %v2602 = vpop.f32.mrb[0].mxu0
        %2603 = vmatprep.mubr.bf16.mxu0 0
        %2604 = vmatmul.mubr.bf16.gmra.mrb[0].mxu0 %v2462
        %v2605 = vpop.f32.mrb[0].mxu0
        %v2606 = vadd.f32 0.0, %v2605
        %v2607 = vpop.f32.mrb[0].mxu0
        %v2608 = vpop.f32.mrb[0].mxu0
        %v2609 = vadd.f32 0.0, %v2608
        %v2610 = vpop.f32.mrb[0].mxu0
        %2611 = vmatprep.mubr.bf16.mxu0 0
        %2612 = vmatmul.mubr.bf16.gmra.mrb[0].mxu0 %v2463
        %v2613 = vpop.f32.mrb[0].mxu0
        %v2614 = vadd.f32 0.0, %v2613
        %v2615 = vpop.f32.mrb[0].mxu0
        %v2616 = vpop.f32.mrb[0].mxu0
        %v2617 = vadd.f32 0.0, %v2616
        %v2618 = vpop.f32.mrb[0].mxu0
        %2619 = vmatprep.mubr.bf16.mxu0 0
        %2620 = vmatmul.mubr.bf16.gmra.mrb[0].mxu0 %v2464
        %v2621 = vpop.f32.mrb[0].mxu0
        %v2622 = vadd.f32 0.0, %v2621
        %v2623 = vpop.f32.mrb[0].mxu0
        %v2624 = vpop.f32.mrb[0].mxu0
        %v2625 = vadd.f32 0.0, %v2624
        %v2626 = vpop.f32.mrb[0].mxu0
        %2627 = vmatprep.mubr.bf16.mxu0 0
        %2628 = vmatmul.mubr.bf16.gmra.mrb[0].mxu0 %v2465
        %v2629 = vpop.f32.mrb[0].mxu0
        %v2630 = vadd.f32 0.0, %v2629
        %v2631 = vpop.f32.mrb[0].mxu0
        %v2632 = vpop.f32.mrb[0].mxu0
        %v2633 = vadd.f32 0.0, %v2632
        %v2634 = vpop.f32.mrb[0].mxu0
        %2635 = vmatprep.mubr.bf16.mxu0 0
        %2636 = vmatmul.mubr.bf16.gmra.mrb[0].mxu0 %v2466
        %v2637 = vpop.f32.mrb[0].mxu0
        %v2638 = vadd.f32 0.0, %v2637
        %v2639 = vpop.f32.mrb[0].mxu0
        %v2640 = vpop.f32.mrb[0].mxu0
        %v2641 = vadd.f32 0.0, %v2640
        %v2642 = vpop.f32.mrb[0].mxu0
        %2643 = vmatprep.mubr.bf16.mxu0 0
        %2644 = vmatmul.mubr.bf16.gmra.mrb[0].mxu0 %v2467
        %v2645 = vpop.f32.mrb[0].mxu0
        %v2646 = vadd.f32 0.0, %v2645
        %v2647 = vpop.f32.mrb[0].mxu0
        %v2648 = vpop.f32.mrb[0].mxu0
        %v2649 = vadd.f32 0.0, %v2648
        %v2650 = vpop.f32.mrb[0].mxu0
        %2651 = vmatprep.mubr.bf16.mxu0 0
        %2652 = vmatmul.mubr.bf16.gmra.mrb[0].mxu0 %v2468
        %v2653 = vpop.f32.mrb[0].mxu0
        %v2654 = vadd.f32 0.0, %v2653
        %v2655 = vpop.f32.mrb[0].mxu0
        %v2656 = vpop.f32.mrb[0].mxu0
        %v2657 = vadd.f32 0.0, %v2656
        %v2658 = vpop.f32.mrb[0].mxu0
        %2659 = vmatprep.mubr.bf16.mxu0 0
        %2660 = vmatmul.mubr.bf16.gmra.mrb[0].mxu0 %v2469
        %v2661 = vpop.f32.mrb[0].mxu0
        %v2662 = vadd.f32 0.0, %v2661
        %v2663 = vpop.f32.mrb[0].mxu0
        %v2664 = vpop.f32.mrb[0].mxu0
        %v2665 = vadd.f32 0.0, %v2664
        %v2666 = vpop.f32.mrb[0].mxu0
        %2667 = vmatprep.mubr.bf16.mxu0 0
        %2668 = vmatmul.mubr.bf16.gmra.mrb[0].mxu0 %v2470
        %v2669 = vpop.f32.mrb[0].mxu0
        %v2670 = vadd.f32 0.0, %v2669
        %v2671 = vpop.f32.mrb[0].mxu0
        %v2672 = vpop.f32.mrb[0].mxu0
        %v2673 = vadd.f32 0.0, %v2672
        %v2674 = vpop.f32.mrb[0].mxu0
        %2675 = vmatprep.mubr.bf16.mxu0 0
        %2676 = vmatmul.mubr.bf16.gmra.mrb[0].mxu0 %v2471
        %v2677 = vpop.f32.mrb[0].mxu0
        %v2678 = vadd.f32 0.0, %v2677
        %v2679 = vpop.f32.mrb[0].mxu0
        %v2680 = vpop.f32.mrb[0].mxu0
        %v2681 = vadd.f32 0.0, %v2680
        %v2682 = vpop.f32.mrb[0].mxu0
        %2683 = vmatprep.mubr.bf16.mxu0 0
        %2684 = vmatmul.mubr.bf16.gmra.mrb[0].mxu0 %v2472
        %v2685 = vpop.f32.mrb[0].mxu0
        %v2686 = vadd.f32 0.0, %v2685
        %v2687 = vpop.f32.mrb[0].mxu0
        %v2688 = vpop.f32.mrb[0].mxu0
        %v2689 = vadd.f32 0.0, %v2688
        %v2690 = vpop.f32.mrb[0].mxu0
        %2691 = vmatprep.mubr.bf16.mxu0 0
        %2692 = vmatmul.mubr.bf16.gmra.mrb[0].mxu0 %v2473
        %v2693 = vpop.f32.mrb[0].mxu0
        %v2694 = vadd.f32 0.0, %v2693
        %v2695 = vpop.f32.mrb[0].mxu0
        %v2696 = vpop.f32.mrb[0].mxu0
        %v2697 = vadd.f32 0.0, %v2696
        %v2698 = vpop.f32.mrb[0].mxu0
        %2699 = vdwg.mxu0
        %v2700 = vadd.f32 %v2394, %v2574
        %v2701 = vadd.f32 %v2395, %v2577
        %v2702 = vadd.f32 %v2396, %v2582
        %v2703 = vadd.f32 %v2397, %v2585
        %v2704 = vadd.f32 %v2398, %v2590
        %v2705 = vadd.f32 %v2399, %v2593
        %v2706 = vadd.f32 %v2400, %v2598
        %v2707 = vadd.f32 %v2401, %v2601
        %v2708 = vadd.f32 %v2402, %v2606
        %v2709 = vadd.f32 %v2403, %v2609
        %v2710 = vadd.f32 %v2404, %v2614
        %v2711 = vadd.f32 %v2405, %v2617
        %v2712 = vadd.f32 %v2406, %v2622
        %v2713 = vadd.f32 %v2407, %v2625
        %v2714 = vadd.f32 %v2408, %v2630
        %v2715 = vadd.f32 %v2409, %v2633
        %v2716 = vadd.f32 %v2410, %v2638
        %v2717 = vadd.f32 %v2411, %v2641
        %v2718 = vadd.f32 %v2412, %v2646
        %v2719 = vadd.f32 %v2413, %v2649
        %v2720 = vadd.f32 %v2414, %v2654
        %v2721 = vadd.f32 %v2415, %v2657
        %v2722 = vadd.f32 %v2416, %v2662
        %v2723 = vadd.f32 %v2417, %v2665
        %v2724 = vadd.f32 %v2418, %v2670
        %v2725 = vadd.f32 %v2419, %v2673
        %v2726 = vadd.f32 %v2420, %v2678
        %v2727 = vadd.f32 %v2421, %v2681
        %v2728 = vadd.f32 %v2422, %v2686
        %v2729 = vadd.f32 %v2423, %v2689
        %v2730 = vadd.f32 %v2424, %v2694
        %v2731 = vadd.f32 %v2425, %v2697
        %s2732 = scalar_lea.vmem [#allocation2], 48
        %v2733 = vld [vmem:[%s2732] sm:$0xff]
        %v2734 = vld [vmem:[%s2732 + $0x8] sm:$0xff]
        %v2735 = vld [vmem:[%s2732 + $0x18] sm:$0xff]
        %v2736 = vld [vmem:[%s2732 + $0x20] sm:$0xff]
        %v2737 = vld [vmem:[%s2732 + $0x30] sm:$0xff]
        %v2738 = vld [vmem:[%s2732 + $0x38] sm:$0xff]
        %v2739 = vld [vmem:[%s2732 + $0x48] sm:$0xff]
        %v2740 = vld [vmem:[%s2732 + $0x50] sm:$0xff]
        %v2741 = vld [vmem:[%s2732 + $0x60] sm:$0xff]
        %v2742 = vld [vmem:[%s2732 + $0x68] sm:$0xff]
        %v2743 = vld [vmem:[%s2732 + $0x78] sm:$0xff]
        %v2744 = vld [vmem:[%s2732 + $0x80] sm:$0xff]
        %v2745 = vld [vmem:[%s2732 + $0x90] sm:$0xff]
        %v2746 = vld [vmem:[%s2732 + $0x98] sm:$0xff]
        %v2747 = vld [vmem:[%s2732 + $0xa8] sm:$0xff]
        %v2748 = vld [vmem:[%s2732 + $0xb0] sm:$0xff]
        %v2749 = vld [vmem:[%s2732 + $0xc0] sm:$0xff]
        %v2750 = vld [vmem:[%s2732 + $0xc8] sm:$0xff]
        %v2751 = vld [vmem:[%s2732 + $0xd8] sm:$0xff]
        %v2752 = vld [vmem:[%s2732 + $0xe0] sm:$0xff]
        %v2753 = vld [vmem:[%s2732 + $0xf0] sm:$0xff]
        %v2754 = vld [vmem:[%s2732 + $0xf8] sm:$0xff]
        %v2755 = vld [vmem:[%s2732 + $0x108] sm:$0xff]
        %v2756 = vld [vmem:[%s2732 + $0x110] sm:$0xff]
        %v2757 = vld [vmem:[%s2732 + $0x120] sm:$0xff]
        %v2758 = vld [vmem:[%s2732 + $0x128] sm:$0xff]
        %v2759 = vld [vmem:[%s2732 + $0x138] sm:$0xff]
        %v2760 = vld [vmem:[%s2732 + $0x140] sm:$0xff]
        %v2761 = vld [vmem:[%s2732 + $0x150] sm:$0xff]
        %v2762 = vld [vmem:[%s2732 + $0x158] sm:$0xff]
        %v2763 = vld [vmem:[%s2732 + $0x168] sm:$0xff]
        %v2764 = vld [vmem:[%s2732 + $0x170] sm:$0xff]
        %v2765 = vpack.c.bf16 %v2734, %v2733
        %v2766 = vpack.c.bf16 %v2736, %v2735
        %v2767 = vpack.c.bf16 %v2738, %v2737
        %v2768 = vpack.c.bf16 %v2740, %v2739
        %v2769 = vpack.c.bf16 %v2742, %v2741
        %v2770 = vpack.c.bf16 %v2744, %v2743
        %v2771 = vpack.c.bf16 %v2746, %v2745
        %v2772 = vpack.c.bf16 %v2748, %v2747
        %v2773 = vpack.c.bf16 %v2750, %v2749
        %v2774 = vpack.c.bf16 %v2752, %v2751
        %v2775 = vpack.c.bf16 %v2754, %v2753
        %v2776 = vpack.c.bf16 %v2756, %v2755
        %v2777 = vpack.c.bf16 %v2758, %v2757
        %v2778 = vpack.c.bf16 %v2760, %v2759
        %v2779 = vpack.c.bf16 %v2762, %v2761
        %v2780 = vpack.c.bf16 %v2764, %v2763
        %s2781 = scalar_lea.vmem [#allocation9], 384
        %v2782 = vld [vmem:[%s2781] sm:$0xf]
        %v2783 = vld [vmem:[%s2781 + $0x4] sm:$0xf]
        %v2784 = vld [vmem:[%s2781 + $0x8] sm:$0xf]
        %v2785 = vld [vmem:[%s2781 + $0xc] sm:$0xf]
        %v2786 = vld [vmem:[%s2781 + $0x10] sm:$0xf]
        %v2787 = vld [vmem:[%s2781 + $0x14] sm:$0xf]
        %v2788 = vld [vmem:[%s2781 + $0x18] sm:$0xf]
        %v2789 = vld [vmem:[%s2781 + $0x1c] sm:$0xf]
        %v2790 = vld [vmem:[%s2781 + $0x20] sm:$0xf]
        %v2791 = vld [vmem:[%s2781 + $0x24] sm:$0xf]
        %v2792 = vld [vmem:[%s2781 + $0x28] sm:$0xf]
        %v2793 = vld [vmem:[%s2781 + $0x2c] sm:$0xf]
        %v2794 = vld [vmem:[%s2781 + $0x30] sm:$0xf]
        %v2795 = vld [vmem:[%s2781 + $0x34] sm:$0xf]
        %v2796 = vld [vmem:[%s2781 + $0x38] sm:$0xf]
        %v2797 = vld [vmem:[%s2781 + $0x3c] sm:$0xf]
        %v2814 = vunpack.c.l.b16 %v2782
        %v2815 = vunpack.c.l.b16 %v2783
        %v2816 = vunpack.c.l.b16 %v2784
        %v2817 = vunpack.c.l.b16 %v2785
        %v2818 = vunpack.c.l.b16 %v2786
        %v2819 = vunpack.c.l.b16 %v2787
        %v2820 = vunpack.c.l.b16 %v2788
        %v2821 = vunpack.c.l.b16 %v2789
        %v2822 = vunpack.c.l.b16 %v2790
        %v2823 = vunpack.c.l.b16 %v2791
        %v2824 = vunpack.c.l.b16 %v2792
        %v2825 = vunpack.c.l.b16 %v2793
        %v2826 = vunpack.c.l.b16 %v2794
        %v2827 = vunpack.c.l.b16 %v2795
        %v2828 = vunpack.c.l.b16 %v2796
        %v2829 = vunpack.c.l.b16 %v2797
        %v2830 = vpack.c.b16 %v2815, %v2814
        %v2831 = vpack.c.b16 %v2817, %v2816
        %v2832 = vpack.c.b16 %v2819, %v2818
        %v2833 = vpack.c.b16 %v2821, %v2820
        %v2834 = vpack.c.b16 %v2823, %v2822
        %v2835 = vpack.c.b16 %v2825, %v2824
        %v2836 = vpack.c.b16 %v2827, %v2826
        %v2837 = vpack.c.b16 %v2829, %v2828
        %2846 = vmatprep.subr.bf16.mxu0 0
        %2847 = vmatpush1.bf16.msra.mxu0 %v2830
        %2848 = vmatprep.subr.bf16.mxu0 0
        %2849 = vmatpush1.bf16.msra.mxu0 %v2831
        %2850 = vmatprep.subr.bf16.mxu0 0
        %2851 = vmatpush1.bf16.msra.mxu0 %v2832
        %2852 = vmatprep.subr.bf16.mxu0 0
        %2853 = vmatpush1.bf16.msra.mxu0 %v2833
        %2854 = vmatprep.subr.bf16.mxu0 0
        %2855 = vmatpush1.bf16.msra.mxu0 %v2834
        %2856 = vmatprep.subr.bf16.mxu0 0
        %2857 = vmatpush1.bf16.msra.mxu0 %v2835
        %2858 = vmatprep.subr.bf16.mxu0 0
        %2859 = vmatpush1.bf16.msra.mxu0 %v2836
        %2860 = vmatprep.subr.bf16.mxu0 0
        %2861 = vmatpush1.bf16.msra.mxu0 %v2837
        %2862 = vmatprep.subr.bf16.mxu0 0
        %2863 = vmatpush1.bf16.msra.mxu0 0
        %2864 = vmatprep.subr.bf16.mxu0 0
        %2865 = vmatpush1.bf16.msra.mxu0 0
        %2866 = vmatprep.subr.bf16.mxu0 0
        %2867 = vmatpush1.bf16.msra.mxu0 0
        %2868 = vmatprep.subr.bf16.mxu0 0
        %2869 = vmatpush1.bf16.msra.mxu0 0
        %2870 = vmatprep.subr.bf16.mxu0 0
        %2871 = vmatpush1.bf16.msra.mxu0 0
        %2872 = vmatprep.subr.bf16.mxu0 0
        %2873 = vmatpush1.bf16.msra.mxu0 0
        %2874 = vmatprep.subr.bf16.mxu0 0
        %2875 = vmatpush1.bf16.msra.mxu0 0
        %2876 = vmatprep.subr.bf16.mxu0 0
        %2877 = vmatpush1.bf16.msra.mxu0 0
        %2878 = vmatprep.mubr.bf16.mxu0 0
        %2879 = vmatmul.mubr.bf16.gmra.mrb[0].mxu0 %v2765
        %v2880 = vpop.f32.mrb[0].mxu0
        %v2881 = vadd.f32 0.0, %v2880
        %v2882 = vpop.f32.mrb[0].mxu0
        %v2883 = vpop.f32.mrb[0].mxu0
        %v2884 = vadd.f32 0.0, %v2883
        %v2885 = vpop.f32.mrb[0].mxu0
        %2886 = vmatprep.mubr.bf16.mxu0 0
        %2887 = vmatmul.mubr.bf16.gmra.mrb[0].mxu0 %v2766
        %v2888 = vpop.f32.mrb[0].mxu0
        %v2889 = vadd.f32 0.0, %v2888
        %v2890 = vpop.f32.mrb[0].mxu0
        %v2891 = vpop.f32.mrb[0].mxu0
        %v2892 = vadd.f32 0.0, %v2891
        %v2893 = vpop.f32.mrb[0].mxu0
        %2894 = vmatprep.mubr.bf16.mxu0 0
        %2895 = vmatmul.mubr.bf16.gmra.mrb[0].mxu0 %v2767
        %v2896 = vpop.f32.mrb[0].mxu0
        %v2897 = vadd.f32 0.0, %v2896
        %v2898 = vpop.f32.mrb[0].mxu0
        %v2899 = vpop.f32.mrb[0].mxu0
        %v2900 = vadd.f32 0.0, %v2899
        %v2901 = vpop.f32.mrb[0].mxu0
        %2902 = vmatprep.mubr.bf16.mxu0 0
        %2903 = vmatmul.mubr.bf16.gmra.mrb[0].mxu0 %v2768
        %v2904 = vpop.f32.mrb[0].mxu0
        %v2905 = vadd.f32 0.0, %v2904
        %v2906 = vpop.f32.mrb[0].mxu0
        %v2907 = vpop.f32.mrb[0].mxu0
        %v2908 = vadd.f32 0.0, %v2907
        %v2909 = vpop.f32.mrb[0].mxu0
        %2910 = vmatprep.mubr.bf16.mxu0 0
        %2911 = vmatmul.mubr.bf16.gmra.mrb[0].mxu0 %v2769
        %v2912 = vpop.f32.mrb[0].mxu0
        %v2913 = vadd.f32 0.0, %v2912
        %v2914 = vpop.f32.mrb[0].mxu0
        %v2915 = vpop.f32.mrb[0].mxu0
        %v2916 = vadd.f32 0.0, %v2915
        %v2917 = vpop.f32.mrb[0].mxu0
        %2918 = vmatprep.mubr.bf16.mxu0 0
        %2919 = vmatmul.mubr.bf16.gmra.mrb[0].mxu0 %v2770
        %v2920 = vpop.f32.mrb[0].mxu0
        %v2921 = vadd.f32 0.0, %v2920
        %v2922 = vpop.f32.mrb[0].mxu0
        %v2923 = vpop.f32.mrb[0].mxu0
        %v2924 = vadd.f32 0.0, %v2923
        %v2925 = vpop.f32.mrb[0].mxu0
        %2926 = vmatprep.mubr.bf16.mxu0 0
        %2927 = vmatmul.mubr.bf16.gmra.mrb[0].mxu0 %v2771
        %v2928 = vpop.f32.mrb[0].mxu0
        %v2929 = vadd.f32 0.0, %v2928
        %v2930 = vpop.f32.mrb[0].mxu0
        %v2931 = vpop.f32.mrb[0].mxu0
        %v2932 = vadd.f32 0.0, %v2931
        %v2933 = vpop.f32.mrb[0].mxu0
        %2934 = vmatprep.mubr.bf16.mxu0 0
        %2935 = vmatmul.mubr.bf16.gmra.mrb[0].mxu0 %v2772
        %v2936 = vpop.f32.mrb[0].mxu0
        %v2937 = vadd.f32 0.0, %v2936
        %v2938 = vpop.f32.mrb[0].mxu0
        %v2939 = vpop.f32.mrb[0].mxu0
        %v2940 = vadd.f32 0.0, %v2939
        %v2941 = vpop.f32.mrb[0].mxu0
        %2942 = vmatprep.mubr.bf16.mxu0 0
        %2943 = vmatmul.mubr.bf16.gmra.mrb[0].mxu0 %v2773
        %v2944 = vpop.f32.mrb[0].mxu0
        %v2945 = vadd.f32 0.0, %v2944
        %v2946 = vpop.f32.mrb[0].mxu0
        %v2947 = vpop.f32.mrb[0].mxu0
        %v2948 = vadd.f32 0.0, %v2947
        %v2949 = vpop.f32.mrb[0].mxu0
        %2950 = vmatprep.mubr.bf16.mxu0 0
        %2951 = vmatmul.mubr.bf16.gmra.mrb[0].mxu0 %v2774
        %v2952 = vpop.f32.mrb[0].mxu0
        %v2953 = vadd.f32 0.0, %v2952
        %v2954 = vpop.f32.mrb[0].mxu0
        %v2955 = vpop.f32.mrb[0].mxu0
        %v2956 = vadd.f32 0.0, %v2955
        %v2957 = vpop.f32.mrb[0].mxu0
        %2958 = vmatprep.mubr.bf16.mxu0 0
        %2959 = vmatmul.mubr.bf16.gmra.mrb[0].mxu0 %v2775
        %v2960 = vpop.f32.mrb[0].mxu0
        %v2961 = vadd.f32 0.0, %v2960
        %v2962 = vpop.f32.mrb[0].mxu0
        %v2963 = vpop.f32.mrb[0].mxu0
        %v2964 = vadd.f32 0.0, %v2963
        %v2965 = vpop.f32.mrb[0].mxu0
        %2966 = vmatprep.mubr.bf16.mxu0 0
        %2967 = vmatmul.mubr.bf16.gmra.mrb[0].mxu0 %v2776
        %v2968 = vpop.f32.mrb[0].mxu0
        %v2969 = vadd.f32 0.0, %v2968
        %v2970 = vpop.f32.mrb[0].mxu0
        %v2971 = vpop.f32.mrb[0].mxu0
        %v2972 = vadd.f32 0.0, %v2971
        %v2973 = vpop.f32.mrb[0].mxu0
        %2974 = vmatprep.mubr.bf16.mxu0 0
        %2975 = vmatmul.mubr.bf16.gmra.mrb[0].mxu0 %v2777
        %v2976 = vpop.f32.mrb[0].mxu0
        %v2977 = vadd.f32 0.0, %v2976
        %v2978 = vpop.f32.mrb[0].mxu0
        %v2979 = vpop.f32.mrb[0].mxu0
        %v2980 = vadd.f32 0.0, %v2979
        %v2981 = vpop.f32.mrb[0].mxu0
        %2982 = vmatprep.mubr.bf16.mxu0 0
        %2983 = vmatmul.mubr.bf16.gmra.mrb[0].mxu0 %v2778
        %v2984 = vpop.f32.mrb[0].mxu0
        %v2985 = vadd.f32 0.0, %v2984
        %v2986 = vpop.f32.mrb[0].mxu0
        %v2987 = vpop.f32.mrb[0].mxu0
        %v2988 = vadd.f32 0.0, %v2987
        %v2989 = vpop.f32.mrb[0].mxu0
        %2990 = vmatprep.mubr.bf16.mxu0 0
        %2991 = vmatmul.mubr.bf16.gmra.mrb[0].mxu0 %v2779
        %v2992 = vpop.f32.mrb[0].mxu0
        %v2993 = vadd.f32 0.0, %v2992
        %v2994 = vpop.f32.mrb[0].mxu0
        %v2995 = vpop.f32.mrb[0].mxu0
        %v2996 = vadd.f32 0.0, %v2995
        %v2997 = vpop.f32.mrb[0].mxu0
        %2998 = vmatprep.mubr.bf16.mxu0 0
        %2999 = vmatmul.mubr.bf16.gmra.mrb[0].mxu0 %v2780
        %v3000 = vpop.f32.mrb[0].mxu0
        %v3001 = vadd.f32 0.0, %v3000
        %v3002 = vpop.f32.mrb[0].mxu0
        %v3003 = vpop.f32.mrb[0].mxu0
        %v3004 = vadd.f32 0.0, %v3003
        %v3005 = vpop.f32.mrb[0].mxu0
        %3006 = vdwg.mxu0
        %v3007 = vadd.f32 %v2700, %v2881
        %v3008 = vadd.f32 %v2701, %v2884
        %v3009 = vadd.f32 %v2702, %v2889
        %v3010 = vadd.f32 %v2703, %v2892
        %v3011 = vadd.f32 %v2704, %v2897
        %v3012 = vadd.f32 %v2705, %v2900
        %v3013 = vadd.f32 %v2706, %v2905
        %v3014 = vadd.f32 %v2707, %v2908
        %v3015 = vadd.f32 %v2708, %v2913
        %v3016 = vadd.f32 %v2709, %v2916
        %v3017 = vadd.f32 %v2710, %v2921
        %v3018 = vadd.f32 %v2711, %v2924
        %v3019 = vadd.f32 %v2712, %v2929
        %v3020 = vadd.f32 %v2713, %v2932
        %v3021 = vadd.f32 %v2714, %v2937
        %v3022 = vadd.f32 %v2715, %v2940
        %v3023 = vadd.f32 %v2716, %v2945
        %v3024 = vadd.f32 %v2717, %v2948
        %v3025 = vadd.f32 %v2718, %v2953
        %v3026 = vadd.f32 %v2719, %v2956
        %v3027 = vadd.f32 %v2720, %v2961
        %v3028 = vadd.f32 %v2721, %v2964
        %v3029 = vadd.f32 %v2722, %v2969
        %v3030 = vadd.f32 %v2723, %v2972
        %v3031 = vadd.f32 %v2724, %v2977
        %v3032 = vadd.f32 %v2725, %v2980
        %v3033 = vadd.f32 %v2726, %v2985
        %v3034 = vadd.f32 %v2727, %v2988
        %v3035 = vadd.f32 %v2728, %v2993
        %v3036 = vadd.f32 %v2729, %v2996
        %v3037 = vadd.f32 %v2730, %v3001
        %v3038 = vadd.f32 %v2731, %v3004
        %v3039 = vld [vmem:[%s2732 + $0x1] sm:$0xff]
        %v3040 = vld [vmem:[%s2732 + $0x9] sm:$0xff]
        %v3041 = vld [vmem:[%s2732 + $0x19] sm:$0xff]
        %v3042 = vld [vmem:[%s2732 + $0x21] sm:$0xff]
        %v3043 = vld [vmem:[%s2732 + $0x31] sm:$0xff]
        %v3044 = vld [vmem:[%s2732 + $0x39] sm:$0xff]
        %v3045 = vld [vmem:[%s2732 + $0x49] sm:$0xff]
        %v3046 = vld [vmem:[%s2732 + $0x51] sm:$0xff]
        %v3047 = vld [vmem:[%s2732 + $0x61] sm:$0xff]
        %v3048 = vld [vmem:[%s2732 + $0x69] sm:$0xff]
        %v3049 = vld [vmem:[%s2732 + $0x79] sm:$0xff]
        %v3050 = vld [vmem:[%s2732 + $0x81] sm:$0xff]
        %v3051 = vld [vmem:[%s2732 + $0x91] sm:$0xff]
        %v3052 = vld [vmem:[%s2732 + $0x99] sm:$0xff]
        %v3053 = vld [vmem:[%s2732 + $0xa9] sm:$0xff]
        %v3054 = vld [vmem:[%s2732 + $0xb1] sm:$0xff]
        %v3055 = vld [vmem:[%s2732 + $0xc1] sm:$0xff]
        %v3056 = vld [vmem:[%s2732 + $0xc9] sm:$0xff]
        %v3057 = vld [vmem:[%s2732 + $0xd9] sm:$0xff]
        %v3058 = vld [vmem:[%s2732 + $0xe1] sm:$0xff]
        %v3059 = vld [vmem:[%s2732 + $0xf1] sm:$0xff]
        %v3060 = vld [vmem:[%s2732 + $0xf9] sm:$0xff]
        %v3061 = vld [vmem:[%s2732 + $0x109] sm:$0xff]
        %v3062 = vld [vmem:[%s2732 + $0x111] sm:$0xff]
        %v3063 = vld [vmem:[%s2732 + $0x121] sm:$0xff]
        %v3064 = vld [vmem:[%s2732 + $0x129] sm:$0xff]
        %v3065 = vld [vmem:[%s2732 + $0x139] sm:$0xff]
        %v3066 = vld [vmem:[%s2732 + $0x141] sm:$0xff]
        %v3067 = vld [vmem:[%s2732 + $0x151] sm:$0xff]
        %v3068 = vld [vmem:[%s2732 + $0x159] sm:$0xff]
        %v3069 = vld [vmem:[%s2732 + $0x169] sm:$0xff]
        %v3070 = vld [vmem:[%s2732 + $0x171] sm:$0xff]
        %v3071 = vpack.c.bf16 %v3040, %v3039
        %v3072 = vpack.c.bf16 %v3042, %v3041
        %v3073 = vpack.c.bf16 %v3044, %v3043
        %v3074 = vpack.c.bf16 %v3046, %v3045
        %v3075 = vpack.c.bf16 %v3048, %v3047
        %v3076 = vpack.c.bf16 %v3050, %v3049
        %v3077 = vpack.c.bf16 %v3052, %v3051
        %v3078 = vpack.c.bf16 %v3054, %v3053
        %v3079 = vpack.c.bf16 %v3056, %v3055
        %v3080 = vpack.c.bf16 %v3058, %v3057
        %v3081 = vpack.c.bf16 %v3060, %v3059
        %v3082 = vpack.c.bf16 %v3062, %v3061
        %v3083 = vpack.c.bf16 %v3064, %v3063
        %v3084 = vpack.c.bf16 %v3066, %v3065
        %v3085 = vpack.c.bf16 %v3068, %v3067
        %v3086 = vpack.c.bf16 %v3070, %v3069
        %s3087 = scalar_lea.vmem [#allocation9], 448
        %v3088 = vld [vmem:[%s3087] sm:$0xf]
        %v3089 = vld [vmem:[%s3087 + $0x4] sm:$0xf]
        %v3090 = vld [vmem:[%s3087 + $0x8] sm:$0xf]
        %v3091 = vld [vmem:[%s3087 + $0xc] sm:$0xf]
        %v3092 = vld [vmem:[%s3087 + $0x10] sm:$0xf]
        %v3093 = vld [vmem:[%s3087 + $0x14] sm:$0xf]
        %v3094 = vld [vmem:[%s3087 + $0x18] sm:$0xf]
        %v3095 = vld [vmem:[%s3087 + $0x1c] sm:$0xf]
        %v3096 = vld [vmem:[%s3087 + $0x20] sm:$0xf]
        %v3097 = vld [vmem:[%s3087 + $0x24] sm:$0xf]
        %v3098 = vld [vmem:[%s3087 + $0x28] sm:$0xf]
        %v3099 = vld [vmem:[%s3087 + $0x2c] sm:$0xf]
        %v3100 = vld [vmem:[%s3087 + $0x30] sm:$0xf]
        %v3101 = vld [vmem:[%s3087 + $0x34] sm:$0xf]
        %v3102 = vld [vmem:[%s3087 + $0x38] sm:$0xf]
        %v3103 = vld [vmem:[%s3087 + $0x3c] sm:$0xf]
        %v3120 = vunpack.c.l.b16 %v3088
        %v3121 = vunpack.c.l.b16 %v3089
        %v3122 = vunpack.c.l.b16 %v3090
        %v3123 = vunpack.c.l.b16 %v3091
        %v3124 = vunpack.c.l.b16 %v3092
        %v3125 = vunpack.c.l.b16 %v3093
        %v3126 = vunpack.c.l.b16 %v3094
        %v3127 = vunpack.c.l.b16 %v3095
        %v3128 = vunpack.c.l.b16 %v3096
        %v3129 = vunpack.c.l.b16 %v3097
        %v3130 = vunpack.c.l.b16 %v3098
        %v3131 = vunpack.c.l.b16 %v3099
        %v3132 = vunpack.c.l.b16 %v3100
        %v3133 = vunpack.c.l.b16 %v3101
        %v3134 = vunpack.c.l.b16 %v3102
        %v3135 = vunpack.c.l.b16 %v3103
        %v3136 = vpack.c.b16 %v3121, %v3120
        %v3137 = vpack.c.b16 %v3123, %v3122
        %v3138 = vpack.c.b16 %v3125, %v3124
        %v3139 = vpack.c.b16 %v3127, %v3126
        %v3140 = vpack.c.b16 %v3129, %v3128
        %v3141 = vpack.c.b16 %v3131, %v3130
        %v3142 = vpack.c.b16 %v3133, %v3132
        %v3143 = vpack.c.b16 %v3135, %v3134
        %3152 = vmatprep.subr.bf16.mxu0 0
        %3153 = vmatpush1.bf16.msra.mxu0 %v3136
        %3154 = vmatprep.subr.bf16.mxu0 0
        %3155 = vmatpush1.bf16.msra.mxu0 %v3137
        %3156 = vmatprep.subr.bf16.mxu0 0
        %3157 = vmatpush1.bf16.msra.mxu0 %v3138
        %3158 = vmatprep.subr.bf16.mxu0 0
        %3159 = vmatpush1.bf16.msra.mxu0 %v3139
        %3160 = vmatprep.subr.bf16.mxu0 0
        %3161 = vmatpush1.bf16.msra.mxu0 %v3140
        %3162 = vmatprep.subr.bf16.mxu0 0
        %3163 = vmatpush1.bf16.msra.mxu0 %v3141
        %3164 = vmatprep.subr.bf16.mxu0 0
        %3165 = vmatpush1.bf16.msra.mxu0 %v3142
        %3166 = vmatprep.subr.bf16.mxu0 0
        %3167 = vmatpush1.bf16.msra.mxu0 %v3143
        %3168 = vmatprep.subr.bf16.mxu0 0
        %3169 = vmatpush1.bf16.msra.mxu0 0
        %3170 = vmatprep.subr.bf16.mxu0 0
        %3171 = vmatpush1.bf16.msra.mxu0 0
        %3172 = vmatprep.subr.bf16.mxu0 0
        %3173 = vmatpush1.bf16.msra.mxu0 0
        %3174 = vmatprep.subr.bf16.mxu0 0
        %3175 = vmatpush1.bf16.msra.mxu0 0
        %3176 = vmatprep.subr.bf16.mxu0 0
        %3177 = vmatpush1.bf16.msra.mxu0 0
        %3178 = vmatprep.subr.bf16.mxu0 0
        %3179 = vmatpush1.bf16.msra.mxu0 0
        %3180 = vmatprep.subr.bf16.mxu0 0
        %3181 = vmatpush1.bf16.msra.mxu0 0
        %3182 = vmatprep.subr.bf16.mxu0 0
        %3183 = vmatpush1.bf16.msra.mxu0 0
        %3184 = vmatprep.mubr.bf16.mxu0 0
        %3185 = vmatmul.mubr.bf16.gmra.mrb[0].mxu0 %v3071
        %v3186 = vpop.f32.mrb[0].mxu0
        %v3187 = vadd.f32 0.0, %v3186
        %v3188 = vpop.f32.mrb[0].mxu0
        %v3189 = vpop.f32.mrb[0].mxu0
        %v3190 = vadd.f32 0.0, %v3189
        %v3191 = vpop.f32.mrb[0].mxu0
        %3192 = vmatprep.mubr.bf16.mxu0 0
        %3193 = vmatmul.mubr.bf16.gmra.mrb[0].mxu0 %v3072
        %v3194 = vpop.f32.mrb[0].mxu0
        %v3195 = vadd.f32 0.0, %v3194
        %v3196 = vpop.f32.mrb[0].mxu0
        %v3197 = vpop.f32.mrb[0].mxu0
        %v3198 = vadd.f32 0.0, %v3197
        %v3199 = vpop.f32.mrb[0].mxu0
        %3200 = vmatprep.mubr.bf16.mxu0 0
        %3201 = vmatmul.mubr.bf16.gmra.mrb[0].mxu0 %v3073
        %v3202 = vpop.f32.mrb[0].mxu0
        %v3203 = vadd.f32 0.0, %v3202
        %v3204 = vpop.f32.mrb[0].mxu0
        %v3205 = vpop.f32.mrb[0].mxu0
        %v3206 = vadd.f32 0.0, %v3205
        %v3207 = vpop.f32.mrb[0].mxu0
        %3208 = vmatprep.mubr.bf16.mxu0 0
        %3209 = vmatmul.mubr.bf16.gmra.mrb[0].mxu0 %v3074
        %v3210 = vpop.f32.mrb[0].mxu0
        %v3211 = vadd.f32 0.0, %v3210
        %v3212 = vpop.f32.mrb[0].mxu0
        %v3213 = vpop.f32.mrb[0].mxu0
        %v3214 = vadd.f32 0.0, %v3213
        %v3215 = vpop.f32.mrb[0].mxu0
        %3216 = vmatprep.mubr.bf16.mxu0 0
        %3217 = vmatmul.mubr.bf16.gmra.mrb[0].mxu0 %v3075
        %v3218 = vpop.f32.mrb[0].mxu0
        %v3219 = vadd.f32 0.0, %v3218
        %v3220 = vpop.f32.mrb[0].mxu0
        %v3221 = vpop.f32.mrb[0].mxu0
        %v3222 = vadd.f32 0.0, %v3221
        %v3223 = vpop.f32.mrb[0].mxu0
        %3224 = vmatprep.mubr.bf16.mxu0 0
        %3225 = vmatmul.mubr.bf16.gmra.mrb[0].mxu0 %v3076
        %v3226 = vpop.f32.mrb[0].mxu0
        %v3227 = vadd.f32 0.0, %v3226
        %v3228 = vpop.f32.mrb[0].mxu0
        %v3229 = vpop.f32.mrb[0].mxu0
        %v3230 = vadd.f32 0.0, %v3229
        %v3231 = vpop.f32.mrb[0].mxu0
        %3232 = vmatprep.mubr.bf16.mxu0 0
        %3233 = vmatmul.mubr.bf16.gmra.mrb[0].mxu0 %v3077
        %v3234 = vpop.f32.mrb[0].mxu0
        %v3235 = vadd.f32 0.0, %v3234
        %v3236 = vpop.f32.mrb[0].mxu0
        %v3237 = vpop.f32.mrb[0].mxu0
        %v3238 = vadd.f32 0.0, %v3237
        %v3239 = vpop.f32.mrb[0].mxu0
        %3240 = vmatprep.mubr.bf16.mxu0 0
        %3241 = vmatmul.mubr.bf16.gmra.mrb[0].mxu0 %v3078
        %v3242 = vpop.f32.mrb[0].mxu0
        %v3243 = vadd.f32 0.0, %v3242
        %v3244 = vpop.f32.mrb[0].mxu0
        %v3245 = vpop.f32.mrb[0].mxu0
        %v3246 = vadd.f32 0.0, %v3245
        %v3247 = vpop.f32.mrb[0].mxu0
        %3248 = vmatprep.mubr.bf16.mxu0 0
        %3249 = vmatmul.mubr.bf16.gmra.mrb[0].mxu0 %v3079
        %v3250 = vpop.f32.mrb[0].mxu0
        %v3251 = vadd.f32 0.0, %v3250
        %v3252 = vpop.f32.mrb[0].mxu0
        %v3253 = vpop.f32.mrb[0].mxu0
        %v3254 = vadd.f32 0.0, %v3253
        %v3255 = vpop.f32.mrb[0].mxu0
        %3256 = vmatprep.mubr.bf16.mxu0 0
        %3257 = vmatmul.mubr.bf16.gmra.mrb[0].mxu0 %v3080
        %v3258 = vpop.f32.mrb[0].mxu0
        %v3259 = vadd.f32 0.0, %v3258
        %v3260 = vpop.f32.mrb[0].mxu0
        %v3261 = vpop.f32.mrb[0].mxu0
        %v3262 = vadd.f32 0.0, %v3261
        %v3263 = vpop.f32.mrb[0].mxu0
        %3264 = vmatprep.mubr.bf16.mxu0 0
        %3265 = vmatmul.mubr.bf16.gmra.mrb[0].mxu0 %v3081
        %v3266 = vpop.f32.mrb[0].mxu0
        %v3267 = vadd.f32 0.0, %v3266
        %v3268 = vpop.f32.mrb[0].mxu0
        %v3269 = vpop.f32.mrb[0].mxu0
        %v3270 = vadd.f32 0.0, %v3269
        %v3271 = vpop.f32.mrb[0].mxu0
        %3272 = vmatprep.mubr.bf16.mxu0 0
        %3273 = vmatmul.mubr.bf16.gmra.mrb[0].mxu0 %v3082
        %v3274 = vpop.f32.mrb[0].mxu0
        %v3275 = vadd.f32 0.0, %v3274
        %v3276 = vpop.f32.mrb[0].mxu0
        %v3277 = vpop.f32.mrb[0].mxu0
        %v3278 = vadd.f32 0.0, %v3277
        %v3279 = vpop.f32.mrb[0].mxu0
        %3280 = vmatprep.mubr.bf16.mxu0 0
        %3281 = vmatmul.mubr.bf16.gmra.mrb[0].mxu0 %v3083
        %v3282 = vpop.f32.mrb[0].mxu0
        %v3283 = vadd.f32 0.0, %v3282
        %v3284 = vpop.f32.mrb[0].mxu0
        %v3285 = vpop.f32.mrb[0].mxu0
        %v3286 = vadd.f32 0.0, %v3285
        %v3287 = vpop.f32.mrb[0].mxu0
        %3288 = vmatprep.mubr.bf16.mxu0 0
        %3289 = vmatmul.mubr.bf16.gmra.mrb[0].mxu0 %v3084
        %v3290 = vpop.f32.mrb[0].mxu0
        %v3291 = vadd.f32 0.0, %v3290
        %v3292 = vpop.f32.mrb[0].mxu0
        %v3293 = vpop.f32.mrb[0].mxu0
        %v3294 = vadd.f32 0.0, %v3293
        %v3295 = vpop.f32.mrb[0].mxu0
        %3296 = vmatprep.mubr.bf16.mxu0 0
        %3297 = vmatmul.mubr.bf16.gmra.mrb[0].mxu0 %v3085
        %v3298 = vpop.f32.mrb[0].mxu0
        %v3299 = vadd.f32 0.0, %v3298
        %v3300 = vpop.f32.mrb[0].mxu0
        %v3301 = vpop.f32.mrb[0].mxu0
        %v3302 = vadd.f32 0.0, %v3301
        %v3303 = vpop.f32.mrb[0].mxu0
        %3304 = vmatprep.mubr.bf16.mxu0 0
        %3305 = vmatmul.mubr.bf16.gmra.mrb[0].mxu0 %v3086
        %v3306 = vpop.f32.mrb[0].mxu0
        %v3307 = vadd.f32 0.0, %v3306
        %v3308 = vpop.f32.mrb[0].mxu0
        %v3309 = vpop.f32.mrb[0].mxu0
        %v3310 = vadd.f32 0.0, %v3309
        %v3311 = vpop.f32.mrb[0].mxu0
        %3312 = vdwg.mxu0
        %v3313 = vadd.f32 %v3007, %v3187
        %v3314 = vadd.f32 %v3008, %v3190
        %v3315 = vadd.f32 %v3009, %v3195
        %v3316 = vadd.f32 %v3010, %v3198
        %v3317 = vadd.f32 %v3011, %v3203
        %v3318 = vadd.f32 %v3012, %v3206
        %v3319 = vadd.f32 %v3013, %v3211
        %v3320 = vadd.f32 %v3014, %v3214
        %v3321 = vadd.f32 %v3015, %v3219
        %v3322 = vadd.f32 %v3016, %v3222
        %v3323 = vadd.f32 %v3017, %v3227
        %v3324 = vadd.f32 %v3018, %v3230
        %v3325 = vadd.f32 %v3019, %v3235
        %v3326 = vadd.f32 %v3020, %v3238
        %v3327 = vadd.f32 %v3021, %v3243
        %v3328 = vadd.f32 %v3022, %v3246
        %v3329 = vadd.f32 %v3023, %v3251
        %v3330 = vadd.f32 %v3024, %v3254
        %v3331 = vadd.f32 %v3025, %v3259
        %v3332 = vadd.f32 %v3026, %v3262
        %v3333 = vadd.f32 %v3027, %v3267
        %v3334 = vadd.f32 %v3028, %v3270
        %v3335 = vadd.f32 %v3029, %v3275
        %v3336 = vadd.f32 %v3030, %v3278
        %v3337 = vadd.f32 %v3031, %v3283
        %v3338 = vadd.f32 %v3032, %v3286
        %v3339 = vadd.f32 %v3033, %v3291
        %v3340 = vadd.f32 %v3034, %v3294
        %v3341 = vadd.f32 %v3035, %v3299
        %v3342 = vadd.f32 %v3036, %v3302
        %v3343 = vadd.f32 %v3037, %v3307
        %v3344 = vadd.f32 %v3038, %v3310
        %v3345 = vld [vmem:[%s2732 + $0x2] sm:$0xff]
        %v3346 = vld [vmem:[%s2732 + $0xa] sm:$0xff]
        %v3347 = vld [vmem:[%s2732 + $0x1a] sm:$0xff]
        %v3348 = vld [vmem:[%s2732 + $0x22] sm:$0xff]
        %v3349 = vld [vmem:[%s2732 + $0x32] sm:$0xff]
        %v3350 = vld [vmem:[%s2732 + $0x3a] sm:$0xff]
        %v3351 = vld [vmem:[%s2732 + $0x4a] sm:$0xff]
        %v3352 = vld [vmem:[%s2732 + $0x52] sm:$0xff]
        %v3353 = vld [vmem:[%s2732 + $0x62] sm:$0xff]
        %v3354 = vld [vmem:[%s2732 + $0x6a] sm:$0xff]
        %v3355 = vld [vmem:[%s2732 + $0x7a] sm:$0xff]
        %v3356 = vld [vmem:[%s2732 + $0x82] sm:$0xff]
        %v3357 = vld [vmem:[%s2732 + $0x92] sm:$0xff]
        %v3358 = vld [vmem:[%s2732 + $0x9a] sm:$0xff]
        %v3359 = vld [vmem:[%s2732 + $0xaa] sm:$0xff]
        %v3360 = vld [vmem:[%s2732 + $0xb2] sm:$0xff]
        %v3361 = vld [vmem:[%s2732 + $0xc2] sm:$0xff]
        %v3362 = vld [vmem:[%s2732 + $0xca] sm:$0xff]
        %v3363 = vld [vmem:[%s2732 + $0xda] sm:$0xff]
        %v3364 = vld [vmem:[%s2732 + $0xe2] sm:$0xff]
        %v3365 = vld [vmem:[%s2732 + $0xf2] sm:$0xff]
        %v3366 = vld [vmem:[%s2732 + $0xfa] sm:$0xff]
        %v3367 = vld [vmem:[%s2732 + $0x10a] sm:$0xff]
        %v3368 = vld [vmem:[%s2732 + $0x112] sm:$0xff]
        %v3369 = vld [vmem:[%s2732 + $0x122] sm:$0xff]
        %v3370 = vld [vmem:[%s2732 + $0x12a] sm:$0xff]
        %v3371 = vld [vmem:[%s2732 + $0x13a] sm:$0xff]
        %v3372 = vld [vmem:[%s2732 + $0x142] sm:$0xff]
        %v3373 = vld [vmem:[%s2732 + $0x152] sm:$0xff]
        %v3374 = vld [vmem:[%s2732 + $0x15a] sm:$0xff]
        %v3375 = vld [vmem:[%s2732 + $0x16a] sm:$0xff]
        %v3376 = vld [vmem:[%s2732 + $0x172] sm:$0xff]
        %v3377 = vpack.c.bf16 %v3346, %v3345
        %v3378 = vpack.c.bf16 %v3348, %v3347
        %v3379 = vpack.c.bf16 %v3350, %v3349
        %v3380 = vpack.c.bf16 %v3352, %v3351
        %v3381 = vpack.c.bf16 %v3354, %v3353
        %v3382 = vpack.c.bf16 %v3356, %v3355
        %v3383 = vpack.c.bf16 %v3358, %v3357
        %v3384 = vpack.c.bf16 %v3360, %v3359
        %v3385 = vpack.c.bf16 %v3362, %v3361
        %v3386 = vpack.c.bf16 %v3364, %v3363
        %v3387 = vpack.c.bf16 %v3366, %v3365
        %v3388 = vpack.c.bf16 %v3368, %v3367
        %v3389 = vpack.c.bf16 %v3370, %v3369
        %v3390 = vpack.c.bf16 %v3372, %v3371
        %v3391 = vpack.c.bf16 %v3374, %v3373
        %v3392 = vpack.c.bf16 %v3376, %v3375
        %s3393 = scalar_lea.vmem [#allocation9], 512
        %v3394 = vld [vmem:[%s3393] sm:$0xf]
        %v3395 = vld [vmem:[%s3393 + $0x4] sm:$0xf]
        %v3396 = vld [vmem:[%s3393 + $0x8] sm:$0xf]
        %v3397 = vld [vmem:[%s3393 + $0xc] sm:$0xf]
        %v3398 = vld [vmem:[%s3393 + $0x10] sm:$0xf]
        %v3399 = vld [vmem:[%s3393 + $0x14] sm:$0xf]
        %v3400 = vld [vmem:[%s3393 + $0x18] sm:$0xf]
        %v3401 = vld [vmem:[%s3393 + $0x1c] sm:$0xf]
        %v3402 = vld [vmem:[%s3393 + $0x20] sm:$0xf]
        %v3403 = vld [vmem:[%s3393 + $0x24] sm:$0xf]
        %v3404 = vld [vmem:[%s3393 + $0x28] sm:$0xf]
        %v3405 = vld [vmem:[%s3393 + $0x2c] sm:$0xf]
        %v3406 = vld [vmem:[%s3393 + $0x30] sm:$0xf]
        %v3407 = vld [vmem:[%s3393 + $0x34] sm:$0xf]
        %v3408 = vld [vmem:[%s3393 + $0x38] sm:$0xf]
        %v3409 = vld [vmem:[%s3393 + $0x3c] sm:$0xf]
        %v3426 = vunpack.c.l.b16 %v3394
        %v3427 = vunpack.c.l.b16 %v3395
        %v3428 = vunpack.c.l.b16 %v3396
        %v3429 = vunpack.c.l.b16 %v3397
        %v3430 = vunpack.c.l.b16 %v3398
        %v3431 = vunpack.c.l.b16 %v3399
        %v3432 = vunpack.c.l.b16 %v3400
        %v3433 = vunpack.c.l.b16 %v3401
        %v3434 = vunpack.c.l.b16 %v3402
        %v3435 = vunpack.c.l.b16 %v3403
        %v3436 = vunpack.c.l.b16 %v3404
        %v3437 = vunpack.c.l.b16 %v3405
        %v3438 = vunpack.c.l.b16 %v3406
        %v3439 = vunpack.c.l.b16 %v3407
        %v3440 = vunpack.c.l.b16 %v3408
        %v3441 = vunpack.c.l.b16 %v3409
        %v3442 = vpack.c.b16 %v3427, %v3426
        %v3443 = vpack.c.b16 %v3429, %v3428
        %v3444 = vpack.c.b16 %v3431, %v3430
        %v3445 = vpack.c.b16 %v3433, %v3432
        %v3446 = vpack.c.b16 %v3435, %v3434
        %v3447 = vpack.c.b16 %v3437, %v3436
        %v3448 = vpack.c.b16 %v3439, %v3438
        %v3449 = vpack.c.b16 %v3441, %v3440
        %3458 = vmatprep.subr.bf16.mxu0 0
        %3459 = vmatpush1.bf16.msra.mxu0 %v3442
        %3460 = vmatprep.subr.bf16.mxu0 0
        %3461 = vmatpush1.bf16.msra.mxu0 %v3443
        %3462 = vmatprep.subr.bf16.mxu0 0
        %3463 = vmatpush1.bf16.msra.mxu0 %v3444
        %3464 = vmatprep.subr.bf16.mxu0 0
        %3465 = vmatpush1.bf16.msra.mxu0 %v3445
        %3466 = vmatprep.subr.bf16.mxu0 0
        %3467 = vmatpush1.bf16.msra.mxu0 %v3446
        %3468 = vmatprep.subr.bf16.mxu0 0
        %3469 = vmatpush1.bf16.msra.mxu0 %v3447
        %3470 = vmatprep.subr.bf16.mxu0 0
        %3471 = vmatpush1.bf16.msra.mxu0 %v3448
        %3472 = vmatprep.subr.bf16.mxu0 0
        %3473 = vmatpush1.bf16.msra.mxu0 %v3449
        %3474 = vmatprep.subr.bf16.mxu0 0
        %3475 = vmatpush1.bf16.msra.mxu0 0
        %3476 = vmatprep.subr.bf16.mxu0 0
        %3477 = vmatpush1.bf16.msra.mxu0 0
        %3478 = vmatprep.subr.bf16.mxu0 0
        %3479 = vmatpush1.bf16.msra.mxu0 0
        %3480 = vmatprep.subr.bf16.mxu0 0
        %3481 = vmatpush1.bf16.msra.mxu0 0
        %3482 = vmatprep.subr.bf16.mxu0 0
        %3483 = vmatpush1.bf16.msra.mxu0 0
        %3484 = vmatprep.subr.bf16.mxu0 0
        %3485 = vmatpush1.bf16.msra.mxu0 0
        %3486 = vmatprep.subr.bf16.mxu0 0
        %3487 = vmatpush1.bf16.msra.mxu0 0
        %3488 = vmatprep.subr.bf16.mxu0 0
        %3489 = vmatpush1.bf16.msra.mxu0 0
        %3490 = vmatprep.mubr.bf16.mxu0 0
        %3491 = vmatmul.mubr.bf16.gmra.mrb[0].mxu0 %v3377
        %v3492 = vpop.f32.mrb[0].mxu0
        %v3493 = vadd.f32 0.0, %v3492
        %v3494 = vpop.f32.mrb[0].mxu0
        %v3495 = vpop.f32.mrb[0].mxu0
        %v3496 = vadd.f32 0.0, %v3495
        %v3497 = vpop.f32.mrb[0].mxu0
        %3498 = vmatprep.mubr.bf16.mxu0 0
        %3499 = vmatmul.mubr.bf16.gmra.mrb[0].mxu0 %v3378
        %v3500 = vpop.f32.mrb[0].mxu0
        %v3501 = vadd.f32 0.0, %v3500
        %v3502 = vpop.f32.mrb[0].mxu0
        %v3503 = vpop.f32.mrb[0].mxu0
        %v3504 = vadd.f32 0.0, %v3503
        %v3505 = vpop.f32.mrb[0].mxu0
        %3506 = vmatprep.mubr.bf16.mxu0 0
        %3507 = vmatmul.mubr.bf16.gmra.mrb[0].mxu0 %v3379
        %v3508 = vpop.f32.mrb[0].mxu0
        %v3509 = vadd.f32 0.0, %v3508
        %v3510 = vpop.f32.mrb[0].mxu0
        %v3511 = vpop.f32.mrb[0].mxu0
        %v3512 = vadd.f32 0.0, %v3511
        %v3513 = vpop.f32.mrb[0].mxu0
        %3514 = vmatprep.mubr.bf16.mxu0 0
        %3515 = vmatmul.mubr.bf16.gmra.mrb[0].mxu0 %v3380
        %v3516 = vpop.f32.mrb[0].mxu0
        %v3517 = vadd.f32 0.0, %v3516
        %v3518 = vpop.f32.mrb[0].mxu0
        %v3519 = vpop.f32.mrb[0].mxu0
        %v3520 = vadd.f32 0.0, %v3519
        %v3521 = vpop.f32.mrb[0].mxu0
        %3522 = vmatprep.mubr.bf16.mxu0 0
        %3523 = vmatmul.mubr.bf16.gmra.mrb[0].mxu0 %v3381
        %v3524 = vpop.f32.mrb[0].mxu0
        %v3525 = vadd.f32 0.0, %v3524
        %v3526 = vpop.f32.mrb[0].mxu0
        %v3527 = vpop.f32.mrb[0].mxu0
        %v3528 = vadd.f32 0.0, %v3527
        %v3529 = vpop.f32.mrb[0].mxu0
        %3530 = vmatprep.mubr.bf16.mxu0 0
        %3531 = vmatmul.mubr.bf16.gmra.mrb[0].mxu0 %v3382
        %v3532 = vpop.f32.mrb[0].mxu0
        %v3533 = vadd.f32 0.0, %v3532
        %v3534 = vpop.f32.mrb[0].mxu0
        %v3535 = vpop.f32.mrb[0].mxu0
        %v3536 = vadd.f32 0.0, %v3535
        %v3537 = vpop.f32.mrb[0].mxu0
        %3538 = vmatprep.mubr.bf16.mxu0 0
        %3539 = vmatmul.mubr.bf16.gmra.mrb[0].mxu0 %v3383
        %v3540 = vpop.f32.mrb[0].mxu0
        %v3541 = vadd.f32 0.0, %v3540
        %v3542 = vpop.f32.mrb[0].mxu0
        %v3543 = vpop.f32.mrb[0].mxu0
        %v3544 = vadd.f32 0.0, %v3543
        %v3545 = vpop.f32.mrb[0].mxu0
        %3546 = vmatprep.mubr.bf16.mxu0 0
        %3547 = vmatmul.mubr.bf16.gmra.mrb[0].mxu0 %v3384
        %v3548 = vpop.f32.mrb[0].mxu0
        %v3549 = vadd.f32 0.0, %v3548
        %v3550 = vpop.f32.mrb[0].mxu0
        %v3551 = vpop.f32.mrb[0].mxu0
        %v3552 = vadd.f32 0.0, %v3551
        %v3553 = vpop.f32.mrb[0].mxu0
        %3554 = vmatprep.mubr.bf16.mxu0 0
        %3555 = vmatmul.mubr.bf16.gmra.mrb[0].mxu0 %v3385
        %v3556 = vpop.f32.mrb[0].mxu0
        %v3557 = vadd.f32 0.0, %v3556
        %v3558 = vpop.f32.mrb[0].mxu0
        %v3559 = vpop.f32.mrb[0].mxu0
        %v3560 = vadd.f32 0.0, %v3559
        %v3561 = vpop.f32.mrb[0].mxu0
        %3562 = vmatprep.mubr.bf16.mxu0 0
        %3563 = vmatmul.mubr.bf16.gmra.mrb[0].mxu0 %v3386
        %v3564 = vpop.f32.mrb[0].mxu0
        %v3565 = vadd.f32 0.0, %v3564
        %v3566 = vpop.f32.mrb[0].mxu0
        %v3567 = vpop.f32.mrb[0].mxu0
        %v3568 = vadd.f32 0.0, %v3567
        %v3569 = vpop.f32.mrb[0].mxu0
        %3570 = vmatprep.mubr.bf16.mxu0 0
        %3571 = vmatmul.mubr.bf16.gmra.mrb[0].mxu0 %v3387
        %v3572 = vpop.f32.mrb[0].mxu0
        %v3573 = vadd.f32 0.0, %v3572
        %v3574 = vpop.f32.mrb[0].mxu0
        %v3575 = vpop.f32.mrb[0].mxu0
        %v3576 = vadd.f32 0.0, %v3575
        %v3577 = vpop.f32.mrb[0].mxu0
        %3578 = vmatprep.mubr.bf16.mxu0 0
        %3579 = vmatmul.mubr.bf16.gmra.mrb[0].mxu0 %v3388
        %v3580 = vpop.f32.mrb[0].mxu0
        %v3581 = vadd.f32 0.0, %v3580
        %v3582 = vpop.f32.mrb[0].mxu0
        %v3583 = vpop.f32.mrb[0].mxu0
        %v3584 = vadd.f32 0.0, %v3583
        %v3585 = vpop.f32.mrb[0].mxu0
        %3586 = vmatprep.mubr.bf16.mxu0 0
        %3587 = vmatmul.mubr.bf16.gmra.mrb[0].mxu0 %v3389
        %v3588 = vpop.f32.mrb[0].mxu0
        %v3589 = vadd.f32 0.0, %v3588
        %v3590 = vpop.f32.mrb[0].mxu0
        %v3591 = vpop.f32.mrb[0].mxu0
        %v3592 = vadd.f32 0.0, %v3591
        %v3593 = vpop.f32.mrb[0].mxu0
        %3594 = vmatprep.mubr.bf16.mxu0 0
        %3595 = vmatmul.mubr.bf16.gmra.mrb[0].mxu0 %v3390
        %v3596 = vpop.f32.mrb[0].mxu0
        %v3597 = vadd.f32 0.0, %v3596
        %v3598 = vpop.f32.mrb[0].mxu0
        %v3599 = vpop.f32.mrb[0].mxu0
        %v3600 = vadd.f32 0.0, %v3599
        %v3601 = vpop.f32.mrb[0].mxu0
        %3602 = vmatprep.mubr.bf16.mxu0 0
        %3603 = vmatmul.mubr.bf16.gmra.mrb[0].mxu0 %v3391
        %v3604 = vpop.f32.mrb[0].mxu0
        %v3605 = vadd.f32 0.0, %v3604
        %v3606 = vpop.f32.mrb[0].mxu0
        %v3607 = vpop.f32.mrb[0].mxu0
        %v3608 = vadd.f32 0.0, %v3607
        %v3609 = vpop.f32.mrb[0].mxu0
        %3610 = vmatprep.mubr.bf16.mxu0 0
        %3611 = vmatmul.mubr.bf16.gmra.mrb[0].mxu0 %v3392
        %v3612 = vpop.f32.mrb[0].mxu0
        %v3613 = vadd.f32 0.0, %v3612
        %v3614 = vpop.f32.mrb[0].mxu0
        %v3615 = vpop.f32.mrb[0].mxu0
        %v3616 = vadd.f32 0.0, %v3615
        %v3617 = vpop.f32.mrb[0].mxu0
        %3618 = vdwg.mxu0
        %v3619 = vadd.f32 %v3313, %v3493
        %v3620 = vadd.f32 %v3314, %v3496
        %v3621 = vadd.f32 %v3315, %v3501
        %v3622 = vadd.f32 %v3316, %v3504
        %v3623 = vadd.f32 %v3317, %v3509
        %v3624 = vadd.f32 %v3318, %v3512
        %v3625 = vadd.f32 %v3319, %v3517
        %v3626 = vadd.f32 %v3320, %v3520
        %v3627 = vadd.f32 %v3321, %v3525
        %v3628 = vadd.f32 %v3322, %v3528
        %v3629 = vadd.f32 %v3323, %v3533
        %v3630 = vadd.f32 %v3324, %v3536
        %v3631 = vadd.f32 %v3325, %v3541
        %v3632 = vadd.f32 %v3326, %v3544
        %v3633 = vadd.f32 %v3327, %v3549
        %v3634 = vadd.f32 %v3328, %v3552
        %v3635 = vadd.f32 %v3329, %v3557
        %v3636 = vadd.f32 %v3330, %v3560
        %v3637 = vadd.f32 %v3331, %v3565
        %v3638 = vadd.f32 %v3332, %v3568
        %v3639 = vadd.f32 %v3333, %v3573
        %v3640 = vadd.f32 %v3334, %v3576
        %v3641 = vadd.f32 %v3335, %v3581
        %v3642 = vadd.f32 %v3336, %v3584
        %v3643 = vadd.f32 %v3337, %v3589
        %v3644 = vadd.f32 %v3338, %v3592
        %v3645 = vadd.f32 %v3339, %v3597
        %v3646 = vadd.f32 %v3340, %v3600
        %v3647 = vadd.f32 %v3341, %v3605
        %v3648 = vadd.f32 %v3342, %v3608
        %v3649 = vadd.f32 %v3343, %v3613
        %v3650 = vadd.f32 %v3344, %v3616
        %v3651 = vld [vmem:[#allocation11] sm:$0x1]
        %v3653 = vlaneseq
        %v3654 = vshrl.u32 %v3653, 7
        %v3655 = vsub.s32 0, %v3654
        %v3656 = vrot.slane %v3651, %v3655
        %v3658 = vadd.f32 %v3619, %v3656
        %v3659 = vadd.f32 %v3620, %v3656
        %v3660 = vadd.f32 %v3621, %v3656
        %v3661 = vadd.f32 %v3622, %v3656
        %v3662 = vadd.f32 %v3623, %v3656
        %v3663 = vadd.f32 %v3624, %v3656
        %v3664 = vadd.f32 %v3625, %v3656
        %v3665 = vadd.f32 %v3626, %v3656
        %v3666 = vadd.f32 %v3627, %v3656
        %v3667 = vadd.f32 %v3628, %v3656
        %v3668 = vadd.f32 %v3629, %v3656
        %v3669 = vadd.f32 %v3630, %v3656
        %v3670 = vadd.f32 %v3631, %v3656
        %v3671 = vadd.f32 %v3632, %v3656
        %v3672 = vadd.f32 %v3633, %v3656
        %v3673 = vadd.f32 %v3634, %v3656
        %v3674 = vadd.f32 %v3635, %v3656
        %v3675 = vadd.f32 %v3636, %v3656
        %v3676 = vadd.f32 %v3637, %v3656
        %v3677 = vadd.f32 %v3638, %v3656
        %v3678 = vadd.f32 %v3639, %v3656
        %v3679 = vadd.f32 %v3640, %v3656
        %v3680 = vadd.f32 %v3641, %v3656
        %v3681 = vadd.f32 %v3642, %v3656
        %v3682 = vadd.f32 %v3643, %v3656
        %v3683 = vadd.f32 %v3644, %v3656
        %v3684 = vadd.f32 %v3645, %v3656
        %v3685 = vadd.f32 %v3646, %v3656
        %v3686 = vadd.f32 %v3647, %v3656
        %v3687 = vadd.f32 %v3648, %v3656
        %v3688 = vadd.f32 %v3649, %v3656
        %v3689 = vadd.f32 %v3650, %v3656
        %v3690 = vmax.f32 %v3658, 0.0
        %v3691 = vmax.f32 %v3659, 0.0
        %v3692 = vmax.f32 %v3660, 0.0
        %v3693 = vmax.f32 %v3661, 0.0
        %v3694 = vmax.f32 %v3662, 0.0
        %v3695 = vmax.f32 %v3663, 0.0
        %v3696 = vmax.f32 %v3664, 0.0
        %v3697 = vmax.f32 %v3665, 0.0
        %v3698 = vmax.f32 %v3666, 0.0
        %v3699 = vmax.f32 %v3667, 0.0
        %v3700 = vmax.f32 %v3668, 0.0
        %v3701 = vmax.f32 %v3669, 0.0
        %v3702 = vmax.f32 %v3670, 0.0
        %v3703 = vmax.f32 %v3671, 0.0
        %v3704 = vmax.f32 %v3672, 0.0
        %v3705 = vmax.f32 %v3673, 0.0
        %v3706 = vmax.f32 %v3674, 0.0
        %v3707 = vmax.f32 %v3675, 0.0
        %v3708 = vmax.f32 %v3676, 0.0
        %v3709 = vmax.f32 %v3677, 0.0
        %v3710 = vmax.f32 %v3678, 0.0
        %v3711 = vmax.f32 %v3679, 0.0
        %v3712 = vmax.f32 %v3680, 0.0
        %v3713 = vmax.f32 %v3681, 0.0
        %v3714 = vmax.f32 %v3682, 0.0
        %v3715 = vmax.f32 %v3683, 0.0
        %v3716 = vmax.f32 %v3684, 0.0
        %v3717 = vmax.f32 %v3685, 0.0
        %v3718 = vmax.f32 %v3686, 0.0
        %v3719 = vmax.f32 %v3687, 0.0
        %v3720 = vmax.f32 %v3688, 0.0
        %v3721 = vmax.f32 %v3689, 0.0
        %v3722 = vpack.c.bf16 %v3691, %v3690
        %v3723 = vpack.c.bf16 %v3693, %v3692
        %v3724 = vpack.c.bf16 %v3695, %v3694
        %v3725 = vpack.c.bf16 %v3697, %v3696
        %v3726 = vpack.c.bf16 %v3699, %v3698
        %v3727 = vpack.c.bf16 %v3701, %v3700
        %v3728 = vpack.c.bf16 %v3703, %v3702
        %v3729 = vpack.c.bf16 %v3705, %v3704
        %v3730 = vpack.c.bf16 %v3707, %v3706
        %v3731 = vpack.c.bf16 %v3709, %v3708
        %v3732 = vpack.c.bf16 %v3711, %v3710
        %v3733 = vpack.c.bf16 %v3713, %v3712
        %v3734 = vpack.c.bf16 %v3715, %v3714
        %v3735 = vpack.c.bf16 %v3717, %v3716
        %v3736 = vpack.c.bf16 %v3719, %v3718
        %v3737 = vpack.c.bf16 %v3721, %v3720
        %v3738 = vld [vmem:[#allocation12] sm:$0xf]
        %v3739 = vld [vmem:[#allocation12 + $0x4] sm:$0xf]
        %v3740 = vld [vmem:[#allocation12 + $0x8] sm:$0xf]
        %v3741 = vld [vmem:[#allocation12 + $0xc] sm:$0xf]
        %v3742 = vld [vmem:[#allocation12 + $0x10] sm:$0xf]
        %v3743 = vld [vmem:[#allocation12 + $0x14] sm:$0xf]
        %v3744 = vld [vmem:[#allocation12 + $0x18] sm:$0xf]
        %v3745 = vld [vmem:[#allocation12 + $0x1c] sm:$0xf]
        %v3746 = vld [vmem:[#allocation12 + $0x20] sm:$0xf]
        %v3747 = vld [vmem:[#allocation12 + $0x24] sm:$0xf]
        %v3748 = vld [vmem:[#allocation12 + $0x28] sm:$0xf]
        %v3749 = vld [vmem:[#allocation12 + $0x2c] sm:$0xf]
        %v3750 = vld [vmem:[#allocation12 + $0x30] sm:$0xf]
        %v3751 = vld [vmem:[#allocation12 + $0x34] sm:$0xf]
        %v3752 = vld [vmem:[#allocation12 + $0x38] sm:$0xf]
        %v3753 = vld [vmem:[#allocation12 + $0x3c] sm:$0xf]
        %v3754 = vld [vmem:[#allocation14] sm:$0x1]
        %v3756 = vlaneseq
        %v3757 = vshrl.u32 %v3756, 7
        %v3758 = vsub.s32 0, %v3757
        %v3759 = vrot.slane %v3754, %v3758
        %v3777 = vunpack.c.l.b16 %v3738
        %v3778 = vunpack.c.l.b16 %v3739
        %v3779 = vunpack.c.l.b16 %v3740
        %v3780 = vunpack.c.l.b16 %v3741
        %v3781 = vunpack.c.l.b16 %v3742
        %v3782 = vunpack.c.l.b16 %v3743
        %v3783 = vunpack.c.l.b16 %v3744
        %v3784 = vunpack.c.l.b16 %v3745
        %v3785 = vunpack.c.l.b16 %v3746
        %v3786 = vunpack.c.l.b16 %v3747
        %v3787 = vunpack.c.l.b16 %v3748
        %v3788 = vunpack.c.l.b16 %v3749
        %v3789 = vunpack.c.l.b16 %v3750
        %v3790 = vunpack.c.l.b16 %v3751
        %v3791 = vunpack.c.l.b16 %v3752
        %v3792 = vunpack.c.l.b16 %v3753
        %v3793 = vpack.c.b16 %v3778, %v3777
        %v3794 = vpack.c.b16 %v3780, %v3779
        %v3795 = vpack.c.b16 %v3782, %v3781
        %v3796 = vpack.c.b16 %v3784, %v3783
        %v3797 = vpack.c.b16 %v3786, %v3785
        %v3798 = vpack.c.b16 %v3788, %v3787
        %v3799 = vpack.c.b16 %v3790, %v3789
        %v3800 = vpack.c.b16 %v3792, %v3791
        %3809 = vmatprep.subr.bf16.mxu0 0
        %3810 = vmatpush1.bf16.msra.mxu0 %v3793
        %3811 = vmatprep.subr.bf16.mxu0 0
        %3812 = vmatpush1.bf16.msra.mxu0 %v3794
        %3813 = vmatprep.subr.bf16.mxu0 0
        %3814 = vmatpush1.bf16.msra.mxu0 %v3795
        %3815 = vmatprep.subr.bf16.mxu0 0
        %3816 = vmatpush1.bf16.msra.mxu0 %v3796
        %3817 = vmatprep.subr.bf16.mxu0 0
        %3818 = vmatpush1.bf16.msra.mxu0 %v3797
        %3819 = vmatprep.subr.bf16.mxu0 0
        %3820 = vmatpush1.bf16.msra.mxu0 %v3798
        %3821 = vmatprep.subr.bf16.mxu0 0
        %3822 = vmatpush1.bf16.msra.mxu0 %v3799
        %3823 = vmatprep.subr.bf16.mxu0 0
        %3824 = vmatpush1.bf16.msra.mxu0 %v3800
        %3825 = vmatprep.subr.bf16.mxu0 0
        %3826 = vmatpush1.bf16.msra.mxu0 0
        %3827 = vmatprep.subr.bf16.mxu0 0
        %3828 = vmatpush1.bf16.msra.mxu0 0
        %3829 = vmatprep.subr.bf16.mxu0 0
        %3830 = vmatpush1.bf16.msra.mxu0 0
        %3831 = vmatprep.subr.bf16.mxu0 0
        %3832 = vmatpush1.bf16.msra.mxu0 0
        %3833 = vmatprep.subr.bf16.mxu0 0
        %3834 = vmatpush1.bf16.msra.mxu0 0
        %3835 = vmatprep.subr.bf16.mxu0 0
        %3836 = vmatpush1.bf16.msra.mxu0 0
        %3837 = vmatprep.subr.bf16.mxu0 0
        %3838 = vmatpush1.bf16.msra.mxu0 0
        %3839 = vmatprep.subr.bf16.mxu0 0
        %3840 = vmatpush1.bf16.msra.mxu0 0
        %3841 = vmatprep.mubr.bf16.mxu0 0
        %3842 = vmatmul.mubr.bf16.gmra.mrb[0].mxu0 %v3722
        %v3843 = vpop.f32.mrb[0].mxu0
        %v3844 = vadd.f32 %v3759, %v3843
        %v3845 = vpop.f32.mrb[0].mxu0
        %v3846 = vpop.f32.mrb[0].mxu0
        %v3847 = vadd.f32 %v3759, %v3846
        %v3848 = vpop.f32.mrb[0].mxu0
        %3849 = vmatprep.mubr.bf16.mxu0 0
        %3850 = vmatmul.mubr.bf16.gmra.mrb[0].mxu0 %v3723
        %v3851 = vpop.f32.mrb[0].mxu0
        %v3852 = vadd.f32 %v3759, %v3851
        %v3853 = vpop.f32.mrb[0].mxu0
        %v3854 = vpop.f32.mrb[0].mxu0
        %v3855 = vadd.f32 %v3759, %v3854
        %v3856 = vpop.f32.mrb[0].mxu0
        %3857 = vmatprep.mubr.bf16.mxu0 0
        %3858 = vmatmul.mubr.bf16.gmra.mrb[0].mxu0 %v3724
        %v3859 = vpop.f32.mrb[0].mxu0
        %v3860 = vadd.f32 %v3759, %v3859
        %v3861 = vpop.f32.mrb[0].mxu0
        %v3862 = vpop.f32.mrb[0].mxu0
        %v3863 = vadd.f32 %v3759, %v3862
        %v3864 = vpop.f32.mrb[0].mxu0
        %3865 = vmatprep.mubr.bf16.mxu0 0
        %3866 = vmatmul.mubr.bf16.gmra.mrb[0].mxu0 %v3725
        %v3867 = vpop.f32.mrb[0].mxu0
        %v3868 = vadd.f32 %v3759, %v3867
        %v3869 = vpop.f32.mrb[0].mxu0
        %v3870 = vpop.f32.mrb[0].mxu0
        %v3871 = vadd.f32 %v3759, %v3870
        %v3872 = vpop.f32.mrb[0].mxu0
        %3873 = vmatprep.mubr.bf16.mxu0 0
        %3874 = vmatmul.mubr.bf16.gmra.mrb[0].mxu0 %v3726
        %v3875 = vpop.f32.mrb[0].mxu0
        %v3876 = vadd.f32 %v3759, %v3875
        %v3877 = vpop.f32.mrb[0].mxu0
        %v3878 = vpop.f32.mrb[0].mxu0
        %v3879 = vadd.f32 %v3759, %v3878
        %v3880 = vpop.f32.mrb[0].mxu0
        %3881 = vmatprep.mubr.bf16.mxu0 0
        %3882 = vmatmul.mubr.bf16.gmra.mrb[0].mxu0 %v3727
        %v3883 = vpop.f32.mrb[0].mxu0
        %v3884 = vadd.f32 %v3759, %v3883
        %v3885 = vpop.f32.mrb[0].mxu0
        %v3886 = vpop.f32.mrb[0].mxu0
        %v3887 = vadd.f32 %v3759, %v3886
        %v3888 = vpop.f32.mrb[0].mxu0
        %3889 = vmatprep.mubr.bf16.mxu0 0
        %3890 = vmatmul.mubr.bf16.gmra.mrb[0].mxu0 %v3728
        %v3891 = vpop.f32.mrb[0].mxu0
        %v3892 = vadd.f32 %v3759, %v3891
        %v3893 = vpop.f32.mrb[0].mxu0
        %v3894 = vpop.f32.mrb[0].mxu0
        %v3895 = vadd.f32 %v3759, %v3894
        %v3896 = vpop.f32.mrb[0].mxu0
        %3897 = vmatprep.mubr.bf16.mxu0 0
        %3898 = vmatmul.mubr.bf16.gmra.mrb[0].mxu0 %v3729
        %v3899 = vpop.f32.mrb[0].mxu0
        %v3900 = vadd.f32 %v3759, %v3899
        %v3901 = vpop.f32.mrb[0].mxu0
        %v3902 = vpop.f32.mrb[0].mxu0
        %v3903 = vadd.f32 %v3759, %v3902
        %v3904 = vpop.f32.mrb[0].mxu0
        %3905 = vmatprep.mubr.bf16.mxu0 0
        %3906 = vmatmul.mubr.bf16.gmra.mrb[0].mxu0 %v3730
        %v3907 = vpop.f32.mrb[0].mxu0
        %v3908 = vadd.f32 %v3759, %v3907
        %v3909 = vpop.f32.mrb[0].mxu0
        %v3910 = vpop.f32.mrb[0].mxu0
        %v3911 = vadd.f32 %v3759, %v3910
        %v3912 = vpop.f32.mrb[0].mxu0
        %3913 = vmatprep.mubr.bf16.mxu0 0
        %3914 = vmatmul.mubr.bf16.gmra.mrb[0].mxu0 %v3731
        %v3915 = vpop.f32.mrb[0].mxu0
        %v3916 = vadd.f32 %v3759, %v3915
        %v3917 = vpop.f32.mrb[0].mxu0
        %v3918 = vpop.f32.mrb[0].mxu0
        %v3919 = vadd.f32 %v3759, %v3918
        %v3920 = vpop.f32.mrb[0].mxu0
        %3921 = vmatprep.mubr.bf16.mxu0 0
        %3922 = vmatmul.mubr.bf16.gmra.mrb[0].mxu0 %v3732
        %v3923 = vpop.f32.mrb[0].mxu0
        %v3924 = vadd.f32 %v3759, %v3923
        %v3925 = vpop.f32.mrb[0].mxu0
        %v3926 = vpop.f32.mrb[0].mxu0
        %v3927 = vadd.f32 %v3759, %v3926
        %v3928 = vpop.f32.mrb[0].mxu0
        %3929 = vmatprep.mubr.bf16.mxu0 0
        %3930 = vmatmul.mubr.bf16.gmra.mrb[0].mxu0 %v3733
        %v3931 = vpop.f32.mrb[0].mxu0
        %v3932 = vadd.f32 %v3759, %v3931
        %v3933 = vpop.f32.mrb[0].mxu0
        %v3934 = vpop.f32.mrb[0].mxu0
        %v3935 = vadd.f32 %v3759, %v3934
        %v3936 = vpop.f32.mrb[0].mxu0
        %3937 = vmatprep.mubr.bf16.mxu0 0
        %3938 = vmatmul.mubr.bf16.gmra.mrb[0].mxu0 %v3734
        %v3939 = vpop.f32.mrb[0].mxu0
        %v3940 = vadd.f32 %v3759, %v3939
        %v3941 = vpop.f32.mrb[0].mxu0
        %v3942 = vpop.f32.mrb[0].mxu0
        %v3943 = vadd.f32 %v3759, %v3942
        %v3944 = vpop.f32.mrb[0].mxu0
        %3945 = vmatprep.mubr.bf16.mxu0 0
        %3946 = vmatmul.mubr.bf16.gmra.mrb[0].mxu0 %v3735
        %v3947 = vpop.f32.mrb[0].mxu0
        %v3948 = vadd.f32 %v3759, %v3947
        %v3949 = vpop.f32.mrb[0].mxu0
        %v3950 = vpop.f32.mrb[0].mxu0
        %v3951 = vadd.f32 %v3759, %v3950
        %v3952 = vpop.f32.mrb[0].mxu0
        %3953 = vmatprep.mubr.bf16.mxu0 0
        %3954 = vmatmul.mubr.bf16.gmra.mrb[0].mxu0 %v3736
        %v3955 = vpop.f32.mrb[0].mxu0
        %v3956 = vadd.f32 %v3759, %v3955
        %v3957 = vpop.f32.mrb[0].mxu0
        %v3958 = vpop.f32.mrb[0].mxu0
        %v3959 = vadd.f32 %v3759, %v3958
        %v3960 = vpop.f32.mrb[0].mxu0
        %3961 = vmatprep.mubr.bf16.mxu0 0
        %3962 = vmatmul.mubr.bf16.gmra.mrb[0].mxu0 %v3737
        %v3963 = vpop.f32.mrb[0].mxu0
        %v3964 = vadd.f32 %v3759, %v3963
        %v3965 = vpop.f32.mrb[0].mxu0
        %v3966 = vpop.f32.mrb[0].mxu0
        %v3967 = vadd.f32 %v3759, %v3966
        %v3968 = vpop.f32.mrb[0].mxu0
        %3969 = vdwg.mxu0
        %v3970 = vld [vmem:[%s421 + $0x1] sm:$0xff]
        %v3971 = vld [vmem:[%s421 + $0x9] sm:$0xff]
        %v3972 = vld [vmem:[%s421 + $0x19] sm:$0xff]
        %v3973 = vld [vmem:[%s421 + $0x21] sm:$0xff]
        %v3974 = vld [vmem:[%s421 + $0x31] sm:$0xff]
        %v3975 = vld [vmem:[%s421 + $0x39] sm:$0xff]
        %v3976 = vld [vmem:[%s421 + $0x49] sm:$0xff]
        %v3977 = vld [vmem:[%s421 + $0x51] sm:$0xff]
        %v3978 = vld [vmem:[%s421 + $0x61] sm:$0xff]
        %v3979 = vld [vmem:[%s421 + $0x69] sm:$0xff]
        %v3980 = vld [vmem:[%s421 + $0x79] sm:$0xff]
        %v3981 = vld [vmem:[%s421 + $0x81] sm:$0xff]
        %v3982 = vld [vmem:[%s421 + $0x91] sm:$0xff]
        %v3983 = vld [vmem:[%s421 + $0x99] sm:$0xff]
        %v3984 = vld [vmem:[%s421 + $0xa9] sm:$0xff]
        %v3985 = vld [vmem:[%s421 + $0xb1] sm:$0xff]
        %v3986 = vld [vmem:[%s421 + $0xc1] sm:$0xff]
        %v3987 = vld [vmem:[%s421 + $0xc9] sm:$0xff]
        %v3988 = vld [vmem:[%s421 + $0xd9] sm:$0xff]
        %v3989 = vld [vmem:[%s421 + $0xe1] sm:$0xff]
        %v3990 = vld [vmem:[%s421 + $0xf1] sm:$0xff]
        %v3991 = vld [vmem:[%s421 + $0xf9] sm:$0xff]
        %v3992 = vld [vmem:[%s421 + $0x109] sm:$0xff]
        %v3993 = vld [vmem:[%s421 + $0x111] sm:$0xff]
        %v3994 = vld [vmem:[%s421 + $0x121] sm:$0xff]
        %v3995 = vld [vmem:[%s421 + $0x129] sm:$0xff]
        %v3996 = vld [vmem:[%s421 + $0x139] sm:$0xff]
        %v3997 = vld [vmem:[%s421 + $0x141] sm:$0xff]
        %v3998 = vld [vmem:[%s421 + $0x151] sm:$0xff]
        %v3999 = vld [vmem:[%s421 + $0x159] sm:$0xff]
        %v4000 = vld [vmem:[%s421 + $0x169] sm:$0xff]
        %v4001 = vld [vmem:[%s421 + $0x171] sm:$0xff]
        %v4002 = vpack.c.bf16 %v3971, %v3970
        %v4003 = vpack.c.bf16 %v3973, %v3972
        %v4004 = vpack.c.bf16 %v3975, %v3974
        %v4005 = vpack.c.bf16 %v3977, %v3976
        %v4006 = vpack.c.bf16 %v3979, %v3978
        %v4007 = vpack.c.bf16 %v3981, %v3980
        %v4008 = vpack.c.bf16 %v3983, %v3982
        %v4009 = vpack.c.bf16 %v3985, %v3984
        %v4010 = vpack.c.bf16 %v3987, %v3986
        %v4011 = vpack.c.bf16 %v3989, %v3988
        %v4012 = vpack.c.bf16 %v3991, %v3990
        %v4013 = vpack.c.bf16 %v3993, %v3992
        %v4014 = vpack.c.bf16 %v3995, %v3994
        %v4015 = vpack.c.bf16 %v3997, %v3996
        %v4016 = vpack.c.bf16 %v3999, %v3998
        %v4017 = vpack.c.bf16 %v4001, %v4000
        %v4018 = vld [vmem:[#allocation15] sm:$0xf]
        %v4019 = vld [vmem:[#allocation15 + $0x4] sm:$0xf]
        %v4020 = vld [vmem:[#allocation15 + $0x8] sm:$0xf]
        %v4021 = vld [vmem:[#allocation15 + $0xc] sm:$0xf]
        %v4022 = vld [vmem:[#allocation15 + $0x10] sm:$0xf]
        %v4023 = vld [vmem:[#allocation15 + $0x14] sm:$0xf]
        %v4024 = vld [vmem:[#allocation15 + $0x18] sm:$0xf]
        %v4025 = vld [vmem:[#allocation15 + $0x1c] sm:$0xf]
        %v4026 = vld [vmem:[#allocation15 + $0x20] sm:$0xf]
        %v4027 = vld [vmem:[#allocation15 + $0x24] sm:$0xf]
        %v4028 = vld [vmem:[#allocation15 + $0x28] sm:$0xf]
        %v4029 = vld [vmem:[#allocation15 + $0x2c] sm:$0xf]
        %v4030 = vld [vmem:[#allocation15 + $0x30] sm:$0xf]
        %v4031 = vld [vmem:[#allocation15 + $0x34] sm:$0xf]
        %v4032 = vld [vmem:[#allocation15 + $0x38] sm:$0xf]
        %v4033 = vld [vmem:[#allocation15 + $0x3c] sm:$0xf]
        %v4050 = vunpack.c.l.b16 %v4018
        %v4051 = vunpack.c.l.b16 %v4019
        %v4052 = vunpack.c.l.b16 %v4020
        %v4053 = vunpack.c.l.b16 %v4021
        %v4054 = vunpack.c.l.b16 %v4022
        %v4055 = vunpack.c.l.b16 %v4023
        %v4056 = vunpack.c.l.b16 %v4024
        %v4057 = vunpack.c.l.b16 %v4025
        %v4058 = vunpack.c.l.b16 %v4026
        %v4059 = vunpack.c.l.b16 %v4027
        %v4060 = vunpack.c.l.b16 %v4028
        %v4061 = vunpack.c.l.b16 %v4029
        %v4062 = vunpack.c.l.b16 %v4030
        %v4063 = vunpack.c.l.b16 %v4031
        %v4064 = vunpack.c.l.b16 %v4032
        %v4065 = vunpack.c.l.b16 %v4033
        %v4066 = vpack.c.b16 %v4051, %v4050
        %v4067 = vpack.c.b16 %v4053, %v4052
        %v4068 = vpack.c.b16 %v4055, %v4054
        %v4069 = vpack.c.b16 %v4057, %v4056
        %v4070 = vpack.c.b16 %v4059, %v4058
        %v4071 = vpack.c.b16 %v4061, %v4060
        %v4072 = vpack.c.b16 %v4063, %v4062
        %v4073 = vpack.c.b16 %v4065, %v4064
        %4082 = vmatprep.subr.bf16.mxu0 0
        %4083 = vmatpush1.bf16.msra.mxu0 %v4066
        %4084 = vmatprep.subr.bf16.mxu0 0
        %4085 = vmatpush1.bf16.msra.mxu0 %v4067
        %4086 = vmatprep.subr.bf16.mxu0 0
        %4087 = vmatpush1.bf16.msra.mxu0 %v4068
        %4088 = vmatprep.subr.bf16.mxu0 0
        %4089 = vmatpush1.bf16.msra.mxu0 %v4069
        %4090 = vmatprep.subr.bf16.mxu0 0
        %4091 = vmatpush1.bf16.msra.mxu0 %v4070
        %4092 = vmatprep.subr.bf16.mxu0 0
        %4093 = vmatpush1.bf16.msra.mxu0 %v4071
        %4094 = vmatprep.subr.bf16.mxu0 0
        %4095 = vmatpush1.bf16.msra.mxu0 %v4072
        %4096 = vmatprep.subr.bf16.mxu0 0
        %4097 = vmatpush1.bf16.msra.mxu0 %v4073
        %4098 = vmatprep.subr.bf16.mxu0 0
        %4099 = vmatpush1.bf16.msra.mxu0 0
        %4100 = vmatprep.subr.bf16.mxu0 0
        %4101 = vmatpush1.bf16.msra.mxu0 0
        %4102 = vmatprep.subr.bf16.mxu0 0
        %4103 = vmatpush1.bf16.msra.mxu0 0
        %4104 = vmatprep.subr.bf16.mxu0 0
        %4105 = vmatpush1.bf16.msra.mxu0 0
        %4106 = vmatprep.subr.bf16.mxu0 0
        %4107 = vmatpush1.bf16.msra.mxu0 0
        %4108 = vmatprep.subr.bf16.mxu0 0
        %4109 = vmatpush1.bf16.msra.mxu0 0
        %4110 = vmatprep.subr.bf16.mxu0 0
        %4111 = vmatpush1.bf16.msra.mxu0 0
        %4112 = vmatprep.subr.bf16.mxu0 0
        %4113 = vmatpush1.bf16.msra.mxu0 0
        %4114 = vmatprep.mubr.bf16.mxu0 0
        %4115 = vmatmul.mubr.bf16.gmra.mrb[0].mxu0 %v4002
        %v4116 = vpop.f32.mrb[0].mxu0
        %v4117 = vadd.f32 0.0, %v4116
        %v4118 = vpop.f32.mrb[0].mxu0
        %v4119 = vpop.f32.mrb[0].mxu0
        %v4120 = vadd.f32 0.0, %v4119
        %v4121 = vpop.f32.mrb[0].mxu0
        %4122 = vmatprep.mubr.bf16.mxu0 0
        %4123 = vmatmul.mubr.bf16.gmra.mrb[0].mxu0 %v4003
        %v4124 = vpop.f32.mrb[0].mxu0
        %v4125 = vadd.f32 0.0, %v4124
        %v4126 = vpop.f32.mrb[0].mxu0
        %v4127 = vpop.f32.mrb[0].mxu0
        %v4128 = vadd.f32 0.0, %v4127
        %v4129 = vpop.f32.mrb[0].mxu0
        %4130 = vmatprep.mubr.bf16.mxu0 0
        %4131 = vmatmul.mubr.bf16.gmra.mrb[0].mxu0 %v4004
        %v4132 = vpop.f32.mrb[0].mxu0
        %v4133 = vadd.f32 0.0, %v4132
        %v4134 = vpop.f32.mrb[0].mxu0
        %v4135 = vpop.f32.mrb[0].mxu0
        %v4136 = vadd.f32 0.0, %v4135
        %v4137 = vpop.f32.mrb[0].mxu0
        %4138 = vmatprep.mubr.bf16.mxu0 0
        %4139 = vmatmul.mubr.bf16.gmra.mrb[0].mxu0 %v4005
        %v4140 = vpop.f32.mrb[0].mxu0
        %v4141 = vadd.f32 0.0, %v4140
        %v4142 = vpop.f32.mrb[0].mxu0
        %v4143 = vpop.f32.mrb[0].mxu0
        %v4144 = vadd.f32 0.0, %v4143
        %v4145 = vpop.f32.mrb[0].mxu0
        %4146 = vmatprep.mubr.bf16.mxu0 0
        %4147 = vmatmul.mubr.bf16.gmra.mrb[0].mxu0 %v4006
        %v4148 = vpop.f32.mrb[0].mxu0
        %v4149 = vadd.f32 0.0, %v4148
        %v4150 = vpop.f32.mrb[0].mxu0
        %v4151 = vpop.f32.mrb[0].mxu0
        %v4152 = vadd.f32 0.0, %v4151
        %v4153 = vpop.f32.mrb[0].mxu0
        %4154 = vmatprep.mubr.bf16.mxu0 0
        %4155 = vmatmul.mubr.bf16.gmra.mrb[0].mxu0 %v4007
        %v4156 = vpop.f32.mrb[0].mxu0
        %v4157 = vadd.f32 0.0, %v4156
        %v4158 = vpop.f32.mrb[0].mxu0
        %v4159 = vpop.f32.mrb[0].mxu0
        %v4160 = vadd.f32 0.0, %v4159
        %v4161 = vpop.f32.mrb[0].mxu0
        %4162 = vmatprep.mubr.bf16.mxu0 0
        %4163 = vmatmul.mubr.bf16.gmra.mrb[0].mxu0 %v4008
        %v4164 = vpop.f32.mrb[0].mxu0
        %v4165 = vadd.f32 0.0, %v4164
        %v4166 = vpop.f32.mrb[0].mxu0
        %v4167 = vpop.f32.mrb[0].mxu0
        %v4168 = vadd.f32 0.0, %v4167
        %v4169 = vpop.f32.mrb[0].mxu0
        %4170 = vmatprep.mubr.bf16.mxu0 0
        %4171 = vmatmul.mubr.bf16.gmra.mrb[0].mxu0 %v4009
        %v4172 = vpop.f32.mrb[0].mxu0
        %v4173 = vadd.f32 0.0, %v4172
        %v4174 = vpop.f32.mrb[0].mxu0
        %v4175 = vpop.f32.mrb[0].mxu0
        %v4176 = vadd.f32 0.0, %v4175
        %v4177 = vpop.f32.mrb[0].mxu0
        %4178 = vmatprep.mubr.bf16.mxu0 0
        %4179 = vmatmul.mubr.bf16.gmra.mrb[0].mxu0 %v4010
        %v4180 = vpop.f32.mrb[0].mxu0
        %v4181 = vadd.f32 0.0, %v4180
        %v4182 = vpop.f32.mrb[0].mxu0
        %v4183 = vpop.f32.mrb[0].mxu0
        %v4184 = vadd.f32 0.0, %v4183
        %v4185 = vpop.f32.mrb[0].mxu0
        %4186 = vmatprep.mubr.bf16.mxu0 0
        %4187 = vmatmul.mubr.bf16.gmra.mrb[0].mxu0 %v4011
        %v4188 = vpop.f32.mrb[0].mxu0
        %v4189 = vadd.f32 0.0, %v4188
        %v4190 = vpop.f32.mrb[0].mxu0
        %v4191 = vpop.f32.mrb[0].mxu0
        %v4192 = vadd.f32 0.0, %v4191
        %v4193 = vpop.f32.mrb[0].mxu0
        %4194 = vmatprep.mubr.bf16.mxu0 0
        %4195 = vmatmul.mubr.bf16.gmra.mrb[0].mxu0 %v4012
        %v4196 = vpop.f32.mrb[0].mxu0
        %v4197 = vadd.f32 0.0, %v4196
        %v4198 = vpop.f32.mrb[0].mxu0
        %v4199 = vpop.f32.mrb[0].mxu0
        %v4200 = vadd.f32 0.0, %v4199
        %v4201 = vpop.f32.mrb[0].mxu0
        %4202 = vmatprep.mubr.bf16.mxu0 0
        %4203 = vmatmul.mubr.bf16.gmra.mrb[0].mxu0 %v4013
        %v4204 = vpop.f32.mrb[0].mxu0
        %v4205 = vadd.f32 0.0, %v4204
        %v4206 = vpop.f32.mrb[0].mxu0
        %v4207 = vpop.f32.mrb[0].mxu0
        %v4208 = vadd.f32 0.0, %v4207
        %v4209 = vpop.f32.mrb[0].mxu0
        %4210 = vmatprep.mubr.bf16.mxu0 0
        %4211 = vmatmul.mubr.bf16.gmra.mrb[0].mxu0 %v4014
        %v4212 = vpop.f32.mrb[0].mxu0
        %v4213 = vadd.f32 0.0, %v4212
        %v4214 = vpop.f32.mrb[0].mxu0
        %v4215 = vpop.f32.mrb[0].mxu0
        %v4216 = vadd.f32 0.0, %v4215
        %v4217 = vpop.f32.mrb[0].mxu0
        %4218 = vmatprep.mubr.bf16.mxu0 0
        %4219 = vmatmul.mubr.bf16.gmra.mrb[0].mxu0 %v4015
        %v4220 = vpop.f32.mrb[0].mxu0
        %v4221 = vadd.f32 0.0, %v4220
        %v4222 = vpop.f32.mrb[0].mxu0
        %v4223 = vpop.f32.mrb[0].mxu0
        %v4224 = vadd.f32 0.0, %v4223
        %v4225 = vpop.f32.mrb[0].mxu0
        %4226 = vmatprep.mubr.bf16.mxu0 0
        %4227 = vmatmul.mubr.bf16.gmra.mrb[0].mxu0 %v4016
        %v4228 = vpop.f32.mrb[0].mxu0
        %v4229 = vadd.f32 0.0, %v4228
        %v4230 = vpop.f32.mrb[0].mxu0
        %v4231 = vpop.f32.mrb[0].mxu0
        %v4232 = vadd.f32 0.0, %v4231
        %v4233 = vpop.f32.mrb[0].mxu0
        %4234 = vmatprep.mubr.bf16.mxu0 0
        %4235 = vmatmul.mubr.bf16.gmra.mrb[0].mxu0 %v4017
        %v4236 = vpop.f32.mrb[0].mxu0
        %v4237 = vadd.f32 0.0, %v4236
        %v4238 = vpop.f32.mrb[0].mxu0
        %v4239 = vpop.f32.mrb[0].mxu0
        %v4240 = vadd.f32 0.0, %v4239
        %v4241 = vpop.f32.mrb[0].mxu0
        %4242 = vdwg.mxu0
        %v4243 = vadd.f32 %v3844, %v4117
        %v4244 = vadd.f32 %v3847, %v4120
        %v4245 = vadd.f32 %v3852, %v4125
        %v4246 = vadd.f32 %v3855, %v4128
        %v4247 = vadd.f32 %v3860, %v4133
        %v4248 = vadd.f32 %v3863, %v4136
        %v4249 = vadd.f32 %v3868, %v4141
        %v4250 = vadd.f32 %v3871, %v4144
        %v4251 = vadd.f32 %v3876, %v4149
        %v4252 = vadd.f32 %v3879, %v4152
        %v4253 = vadd.f32 %v3884, %v4157
        %v4254 = vadd.f32 %v3887, %v4160
        %v4255 = vadd.f32 %v3892, %v4165
        %v4256 = vadd.f32 %v3895, %v4168
        %v4257 = vadd.f32 %v3900, %v4173
        %v4258 = vadd.f32 %v3903, %v4176
        %v4259 = vadd.f32 %v3908, %v4181
        %v4260 = vadd.f32 %v3911, %v4184
        %v4261 = vadd.f32 %v3916, %v4189
        %v4262 = vadd.f32 %v3919, %v4192
        %v4263 = vadd.f32 %v3924, %v4197
        %v4264 = vadd.f32 %v3927, %v4200
        %v4265 = vadd.f32 %v3932, %v4205
        %v4266 = vadd.f32 %v3935, %v4208
        %v4267 = vadd.f32 %v3940, %v4213
        %v4268 = vadd.f32 %v3943, %v4216
        %v4269 = vadd.f32 %v3948, %v4221
        %v4270 = vadd.f32 %v3951, %v4224
        %v4271 = vadd.f32 %v3956, %v4229
        %v4272 = vadd.f32 %v3959, %v4232
        %v4273 = vadd.f32 %v3964, %v4237
        %v4274 = vadd.f32 %v3967, %v4240
        %v4275 = vmax.f32 %v4243, 0.0
        %v4276 = vmax.f32 %v4244, 0.0
        %v4277 = vmax.f32 %v4245, 0.0
        %v4278 = vmax.f32 %v4246, 0.0
        %v4279 = vmax.f32 %v4247, 0.0
        %v4280 = vmax.f32 %v4248, 0.0
        %v4281 = vmax.f32 %v4249, 0.0
        %v4282 = vmax.f32 %v4250, 0.0
        %v4283 = vmax.f32 %v4251, 0.0
        %v4284 = vmax.f32 %v4252, 0.0
        %v4285 = vmax.f32 %v4253, 0.0
        %v4286 = vmax.f32 %v4254, 0.0
        %v4287 = vmax.f32 %v4255, 0.0
        %v4288 = vmax.f32 %v4256, 0.0
        %v4289 = vmax.f32 %v4257, 0.0
        %v4290 = vmax.f32 %v4258, 0.0
        %v4291 = vmax.f32 %v4259, 0.0
        %v4292 = vmax.f32 %v4260, 0.0
        %v4293 = vmax.f32 %v4261, 0.0
        %v4294 = vmax.f32 %v4262, 0.0
        %v4295 = vmax.f32 %v4263, 0.0
        %v4296 = vmax.f32 %v4264, 0.0
        %v4297 = vmax.f32 %v4265, 0.0
        %v4298 = vmax.f32 %v4266, 0.0
        %v4299 = vmax.f32 %v4267, 0.0
        %v4300 = vmax.f32 %v4268, 0.0
        %v4301 = vmax.f32 %v4269, 0.0
        %v4302 = vmax.f32 %v4270, 0.0
        %v4303 = vmax.f32 %v4271, 0.0
        %v4304 = vmax.f32 %v4272, 0.0
        %v4305 = vmax.f32 %v4273, 0.0
        %v4306 = vmax.f32 %v4274, 0.0
        %4307 = vst [vmem:[%s419] sm:$0xff] %v4275
        %4308 = vst [vmem:[%s419 + $0x8] sm:$0xff] %v4276
        %4309 = vst [vmem:[%s419 + $0x10] sm:$0xff] %v4277
        %4310 = vst [vmem:[%s419 + $0x18] sm:$0xff] %v4278
        %4311 = vst [vmem:[%s419 + $0x20] sm:$0xff] %v4279
        %4312 = vst [vmem:[%s419 + $0x28] sm:$0xff] %v4280
        %4313 = vst [vmem:[%s419 + $0x30] sm:$0xff] %v4281
        %4314 = vst [vmem:[%s419 + $0x38] sm:$0xff] %v4282
        %4315 = vst [vmem:[%s419 + $0x40] sm:$0xff] %v4283
        %4316 = vst [vmem:[%s419 + $0x48] sm:$0xff] %v4284
        %4317 = vst [vmem:[%s419 + $0x50] sm:$0xff] %v4285
        %4318 = vst [vmem:[%s419 + $0x58] sm:$0xff] %v4286
        %4319 = vst [vmem:[%s419 + $0x60] sm:$0xff] %v4287
        %4320 = vst [vmem:[%s419 + $0x68] sm:$0xff] %v4288
        %4321 = vst [vmem:[%s419 + $0x70] sm:$0xff] %v4289
        %4322 = vst [vmem:[%s419 + $0x78] sm:$0xff] %v4290
        %4323 = vst [vmem:[%s419 + $0x80] sm:$0xff] %v4291
        %4324 = vst [vmem:[%s419 + $0x88] sm:$0xff] %v4292
        %4325 = vst [vmem:[%s419 + $0x90] sm:$0xff] %v4293
        %4326 = vst [vmem:[%s419 + $0x98] sm:$0xff] %v4294
        %4327 = vst [vmem:[%s419 + $0xa0] sm:$0xff] %v4295
        %4328 = vst [vmem:[%s419 + $0xa8] sm:$0xff] %v4296
        %4329 = vst [vmem:[%s419 + $0xb0] sm:$0xff] %v4297
        %4330 = vst [vmem:[%s419 + $0xb8] sm:$0xff] %v4298
        %4331 = vst [vmem:[%s419 + $0xc0] sm:$0xff] %v4299
        %4332 = vst [vmem:[%s419 + $0xc8] sm:$0xff] %v4300
        %4333 = vst [vmem:[%s419 + $0xd0] sm:$0xff] %v4301
        %4334 = vst [vmem:[%s419 + $0xd8] sm:$0xff] %v4302
        %4335 = vst [vmem:[%s419 + $0xe0] sm:$0xff] %v4303
        %4336 = vst [vmem:[%s419 + $0xe8] sm:$0xff] %v4304
        %4337 = vst [vmem:[%s419 + $0xf0] sm:$0xff] %v4305
        %4338 = vst [vmem:[%s419 + $0xf8] sm:$0xff] %v4306
        %s4339 = sand.u32 %s210, 1
        %s4340 = scalar_lea.sflag [#allocation5], %s4339
        %s4341 = sand.u32 %s210, 1
        %s4342 = smul.addr %s4341, 256
        %s4343 = scalar_lea.vmem [#allocation17], %s4342
        // Predicated region
        $region85: #{tpu_custom_call.1} parent=51 // pred_check
          %p4344 = pneg %p220
        $region86: #{tpu_custom_call.1} parent=51 // pred_check_branch
          %4346 = sbr.rel (%p4344) target = $region88
        $region87: #{tpu_custom_call.1} parent=51 // pred_region
          %s4348 = ssub.s32 4096, 4096
          %4349 = vsyncadd %s4340, %s4348
          %s4350 = smul.addr %s29, 32
          %s4351 = smul.addr %s4350, 128
          %s4352 = scalar_lea.hbm %s8, %s4351
          %s4353 = sshll.u32 %s4343, 4
          %s4354 = int_to_ptr.vmem [resolvable:$true] %s4353
          %4359 = dma.vmem_to_hbm [thread:$0]  %s4354, 4096, %s4352, %s4340, 128, 128, 8
        $region88: #{tpu_custom_call.1} parent=51 // pred_fallthru
          _
      $region52: #{tpu_custom_call.1} parent=5 // pred_fallthru
        _
      %p4360 = scmp.le.s32.totalorder 2, %s24
      // Predicated region
      $region89: #{tpu_custom_call.1} parent=5 // pred_check
        %p4361 = pneg %p4360
      $region90: #{tpu_custom_call.1} parent=5 // pred_check_branch
        %4363 = sbr.rel (%p4361) target = $region92
      $region91: #{tpu_custom_call.1} parent=5 // pred_region
        %s4364 = ssub.s32 %s24, 2
        // Predicated region
        $region93: #{tpu_custom_call.1} parent=91 // pred_check
          %p4365 = pneg %p226
        $region94: #{tpu_custom_call.1} parent=91 // pred_check_branch
          %4367 = sbr.rel (%p4365) target = $region96
        $region95: #{tpu_custom_call.1} parent=91 // pred_region
          %s4368 = sand.u32 %s211, 1
          %s4369 = scalar_lea.sflag [#allocation5], %s4368
          %s4370 = sand.u32 %s211, 1
          %s4371 = smul.addr %s4370, 256
          %s4372 = scalar_lea.vmem [#allocation17], %s4371
          %4373 = dma.done %s4369, 4096
        $region96: #{tpu_custom_call.1} parent=91 // pred_fallthru
          _
      $region92: #{tpu_custom_call.1} parent=5 // pred_fallthru
        _
    $region6: #{tpu_custom_call.1} parent=1 // loop_footer
      %s28 = sadd.s32 1, %s24
    $region7: #{tpu_custom_call.1} parent=1 // loop_footer_branch
      %23 = sbr.rel target = $region3
    $region8: #{tpu_custom_call.1} parent=1 // loop_exit
      _
    %4374 = vsyncpa [#allocation4], 1
    %s4375 = scalar_lea.sflag [#allocation4], 1
    %4376 = vsyncpa %s4375, 1
    %4377 = vsyncpa [#allocation7], 1
    %4378 = vsyncpa [#allocation10], 1
    %4379 = vsyncpa [#allocation13], 1
    %4380 = vsyncpa [#allocation16], 1
    %4381 = vsyncpa [#allocation5], 1
    %s4382 = scalar_lea.sflag [#allocation5], 1
    %4383 = vsyncpa %s4382, 1

</llo_original>
